<compile_context>
chip_gen: v7x
topology: tpu7x:2x2x1
jax: 0.10.0
libtpu: 0.0.40
codegen_flags: <defaults>
</compile_context>

<pallas_src>
import functools

import numpy as np
import jax
import jax.numpy as jnp
from jax.experimental import pallas as pl
from jax.experimental.pallas import tpu as pltpu


# ----------------------------- Pallas kernels ------------------------------ #

def _gate_kernel(x_ref, o_ref, *, S, G, gated_dims):
    """o = [SiLU(x[:, :S]) | x[:, S+G:] * expand(sigmoid(x[:, S:S+G]))]."""
    tn = x_ref.shape[0]
    x = x_ref[...].astype(jnp.float32)               # compute in f32 everywhere

    # Single EUP pass over the combined scalars+gates slice (they share vregs).
    act_sg = jax.nn.sigmoid(x[:, :S + G])
    act_s = x[:, :S] * act_sg[:, :S]                 # SiLU on even scalars
    act_g = act_sg[:, S:S + G]                       # sigmoid gate scalars

    # Gate -> component broadcast: per-gate lane broadcast + static concat of
    # contiguous pieces (layout/XLU work, no serial VALU MAC chain, no one-hot
    # constants, no MXU).
    pieces = [jnp.broadcast_to(act_g[:, j:j + 1], (tn, d))
              for j, d in enumerate(gated_dims)]
    g_exp = jnp.concatenate(pieces, axis=-1)         # (tn, GD)

    v = x[:, S + G:]
    # Two direct slice stores; no concatenate temporary on the store path.
    o_ref[:, :S] = act_s.astype(o_ref.dtype)
    o_ref[:, S:] = (v * g_exp).astype(o_ref.dtype)


def _silu_kernel(x_ref, o_ref):
    """Degenerate path (irreps_g_gated.num_irreps == 0): plain SiLU."""
    x = x_ref[...].astype(jnp.float32)
    o_ref[...] = (x * jax.nn.sigmoid(x)).astype(o_ref.dtype)


# ------------------------------ Host wrapper ------------------------------- #

def _round_up(x, m):
    return ((x + m - 1) // m) * m


def _choose_tile(N, tile_n):
    """Row-tile size.

    * N <= tile_n: single grid step (block == full dim, so the (8,128) rule is
      satisfied regardless of N; no pointless megacore split for tiny inputs).
    * N  > tile_n: cap at ceil(N/2) rounded up to a sublane multiple so the
      grid stays length >= 2 (keeps both v7x TensorCores busy); edge masking
      handles a partial last block since rows are independent.
    """
    if N <= tile_n:
        return N
    return min(tile_n, _round_up(pl.cdiv(N, 2), 8))


def o3_swish_gate(x, scalars_dim, num_gates, gated_irreps, tile_n=8192):
    """Forward pass of O3SwishGate.

    x            : [N, S + G + GD] (channels-last)
    scalars_dim  : S
    num_gates    : G (== number of gated irrep instances)
    gated_irreps : list of (mul, 2l+1) describing irreps_g_gated
    returns      : [N, S + GD]   (gate channels are consumed)
    """
    N, D = x.shape
    assert tile_n % 8 == 0
    # Keep tiles <= 16K rows so one config is safe on v7x's 64 MiB VMEM too.
    tile_n = min(tile_n, 16384)

    tn = _choose_tile(N, tile_n)
    grid = (pl.cdiv(N, tn),)
    cparams = pltpu.CompilerParams(dimension_semantics=("parallel",))

    # Per-gate widths (2l+1), one entry per gated irrep instance (mul-major).
    gated_dims = tuple(d for mul, d in gated_irreps for _ in range(mul))
    GD = sum(gated_dims)

    if len(gated_dims) == 0:
        # O3SwishGate falls back to nn.SiLU() when there is nothing to gate.
        return pl.pallas_call(
            _silu_kernel,
            out_shape=jax.ShapeDtypeStruct((N, D), x.dtype),
            grid=grid,
            in_specs=[pl.BlockSpec((tn, D), lambda i: (i, 0))],
            out_specs=pl.BlockSpec((tn, D), lambda i: (i, 0)),
            compiler_params=cparams,
        )(x)

    S, G = scalars_dim, num_gates
    assert G == len(gated_dims), "Gate requires one gate scalar per gated irrep"
    assert D == S + G + GD, "input channel dim must be S + G + GD"
    D_out = S + GD

    kernel = functools.partial(_gate_kernel, S=S, G=G, gated_dims=gated_dims)
    return pl.pallas_call(
        kernel,
        out_shape=jax.ShapeDtypeStruct((N, D_out), x.dtype),
        grid=grid,
        in_specs=[pl.BlockSpec((tn, D), lambda i: (i, 0))],      # one fused block
        out_specs=pl.BlockSpec((tn, D_out), lambda i: (i, 0)),
        compiler_params=cparams,
    )(x)


# ------------------------------ Reference ---------------------------------- #

def _reference(x, S, G, gated_irreps):
    gated_dims = [d for mul, d in gated_irreps for _ in range(mul)]
    GD = sum(gated_dims)
    E = np.zeros((G, GD), np.float32)
    col = 0
    for j, d in enumerate(gated_dims):
        E[j, col:col + d] = 1.0
        col += d
    E = jnp.asarray(E)
    xf = x.astype(jnp.float32)
    scalars, gates, gated = xf[:, :S], xf[:, S:S + G], xf[:, S + G:]
    act_s = scalars * jax.nn.sigmoid(scalars)
    act_g = jax.nn.sigmoid(gates)
    out = jnp.concatenate([act_s, gated * (act_g @ E)], axis=-1)
    return out.astype(x.dtype)


# --------------------------------- Main ------------------------------------ #

if __name__ == "__main__":
    # Synthetic irreps (see header): S=8, G=4, gated = 2x1o + 2x2e -> GD=16.
    S = 8
    G = 4
    gated_irreps = [(2, 3), (2, 5)]                  # (mul, 2l+1)
    GD = sum(m * d for m, d in gated_irreps)
    D_in = S + G + GD                                # 28

    key = jax.random.PRNGKey(0)
    k0, k1, k2, k3 = jax.random.split(key, 4)

    # Main case: small N -> single grid step (tn = N).
    N = 1024
    x = jax.random.normal(k0, (N, D_in), dtype=jnp.float32)
    out = jax.block_until_ready(o3_swish_gate(x, S, G, gated_irreps))
    np.testing.assert_allclose(np.asarray(out),
                               np.asarray(_reference(x, S, G, gated_irreps)),
                               rtol=1e-5, atol=1e-5)

    # Tiled path (N > tile_n): grid of 2, both blocks full.
    out_t = jax.block_until_ready(o3_swish_gate(x, S, G, gated_irreps, tile_n=512))
    np.testing.assert_allclose(np.asarray(out_t),
                               np.asarray(_reference(x, S, G, gated_irreps)),
                               rtol=1e-5, atol=1e-5)

    # Non-divisible N: cdiv grid + Pallas edge masking (rows independent).
    x_edge = jax.random.normal(k1, (600, D_in), dtype=jnp.float32)
    out_edge = jax.block_until_ready(
        o3_swish_gate(x_edge, S, G, gated_irreps, tile_n=256))
    np.testing.assert_allclose(np.asarray(out_edge),
                               np.asarray(_reference(x_edge, S, G, gated_irreps)),
                               rtol=1e-5, atol=1e-5)

    # bf16 I/O (internal compute stays f32; cast only at the boundaries).
    x_bf = jax.random.normal(k2, (256, D_in), dtype=jnp.float32).astype(jnp.bfloat16)
    out_bf = jax.block_until_ready(o3_swish_gate(x_bf, S, G, gated_irreps))
    np.testing.assert_allclose(
        np.asarray(out_bf.astype(jnp.float32)),
        np.asarray(_reference(x_bf, S, G, gated_irreps).astype(jnp.float32)),
        rtol=2e-2, atol=2e-2)

    # Degenerate branch (irreps_g_gated.num_irreps == 0 -> plain SiLU).
    x2 = jax.random.normal(k3, (40, 32), dtype=jnp.float32)
    out2 = jax.block_until_ready(o3_swish_gate(x2, 32, 0, []))
    np.testing.assert_allclose(np.asarray(out2),
                               np.asarray(x2 * jax.nn.sigmoid(x2)),
                               rtol=1e-5, atol=1e-5)

    print("KERNEL_OK")
</pallas_src>

<mosaic_0001>
module attributes {stable_mosaic.version = 11 : i64} {
  func.func @_gate_kernel(%arg0: i32, %arg1: memref<1024x28xf32, #tpu.memory_space<vmem>>, %arg2: memref<1024x24xf32, #tpu.memory_space<vmem>>) attributes {dimension_semantics = [#tpu.dimension_semantics<parallel>], iteration_bounds = array<i64: 1>, scalar_prefetch = 0 : i64, scratch_operands = 0 : i64, tpu.core_type = #tpu.core_type<tc>, window_params = [{transform_indices = @transform_0, window_bounds = array<i64: 1024, 28>}, {transform_indices = @transform_1, window_bounds = array<i64: 1024, 24>}]} {
    %c0 = arith.constant 0 : index
    %c0_0 = arith.constant 0 : index
    %0 = vector.load %arg1[%c0, %c0_0] : memref<1024x28xf32, #tpu.memory_space<vmem>>, vector<1024x28xf32>
    %1 = vector.extract_strided_slice %0 {offsets = [0, 0], sizes = [1024, 12], strides = [1, 1]} : vector<1024x28xf32> to vector<1024x12xf32>
    %2 = arith.negf %1 : vector<1024x12xf32>
    %3 = math.exp %2 : vector<1024x12xf32>
    %cst = arith.constant 1.000000e+00 : f32
    %4 = vector.broadcast %cst : f32 to vector<1024x12xf32>
    %5 = arith.addf %4, %3 : vector<1024x12xf32>
    %6 = arith.divf %4, %5 : vector<1024x12xf32>
    %7 = vector.extract_strided_slice %0 {offsets = [0, 0], sizes = [1024, 8], strides = [1, 1]} : vector<1024x28xf32> to vector<1024x8xf32>
    %8 = vector.extract_strided_slice %6 {offsets = [0, 0], sizes = [1024, 8], strides = [1, 1]} : vector<1024x12xf32> to vector<1024x8xf32>
    %9 = arith.mulf %7, %8 : vector<1024x8xf32>
    %10 = vector.extract_strided_slice %6 {offsets = [0, 8], sizes = [1024, 4], strides = [1, 1]} : vector<1024x12xf32> to vector<1024x4xf32>
    %11 = vector.extract_strided_slice %10 {offsets = [0, 0], sizes = [1024, 1], strides = [1, 1]} : vector<1024x4xf32> to vector<1024x1xf32>
    %12 = vector.shape_cast %11 : vector<1024x1xf32> to vector<1024x1xf32>
    %13 = vector.broadcast %12 : vector<1024x1xf32> to vector<1024x3xf32>
    %14 = vector.extract_strided_slice %10 {offsets = [0, 1], sizes = [1024, 1], strides = [1, 1]} : vector<1024x4xf32> to vector<1024x1xf32>
    %15 = vector.shape_cast %14 : vector<1024x1xf32> to vector<1024x1xf32>
    %16 = vector.broadcast %15 : vector<1024x1xf32> to vector<1024x3xf32>
    %17 = vector.extract_strided_slice %10 {offsets = [0, 2], sizes = [1024, 1], strides = [1, 1]} : vector<1024x4xf32> to vector<1024x1xf32>
    %18 = vector.shape_cast %17 : vector<1024x1xf32> to vector<1024x1xf32>
    %19 = vector.broadcast %18 : vector<1024x1xf32> to vector<1024x5xf32>
    %20 = vector.extract_strided_slice %10 {offsets = [0, 3], sizes = [1024, 1], strides = [1, 1]} : vector<1024x4xf32> to vector<1024x1xf32>
    %21 = vector.shape_cast %20 : vector<1024x1xf32> to vector<1024x1xf32>
    %22 = vector.broadcast %21 : vector<1024x1xf32> to vector<1024x5xf32>
    %23 = tpu.concatenate %13, %16, %19, %22 in 1 : vector<1024x3xf32>, vector<1024x3xf32>, vector<1024x5xf32>, vector<1024x5xf32> -> vector<1024x16xf32>
    %24 = vector.extract_strided_slice %0 {offsets = [0, 12], sizes = [1024, 16], strides = [1, 1]} : vector<1024x28xf32> to vector<1024x16xf32>
    %c0_1 = arith.constant 0 : index
    %c0_2 = arith.constant 0 : index
    %25 = vector.load %arg2[%c0_1, %c0_2] : memref<1024x24xf32, #tpu.memory_space<vmem>>, vector<1024x8xf32>
    tpu.vector_store %arg2[%c0_1, %c0_2], %9 {strides = array<i32>} : memref<1024x24xf32, #tpu.memory_space<vmem>>, vector<1024x8xf32>,
    %26 = arith.mulf %24, %23 : vector<1024x16xf32>
    %c0_3 = arith.constant 0 : index
    %c8 = arith.constant 8 : index
    %27 = vector.load %arg2[%c0_3, %c8] : memref<1024x24xf32, #tpu.memory_space<vmem>>, vector<1024x16xf32>
    tpu.vector_store %arg2[%c0_3, %c8], %26 {strides = array<i32>} : memref<1024x24xf32, #tpu.memory_space<vmem>>, vector<1024x16xf32>,
    return
  }
  func.func @transform_0(%arg0: i32) -> (i32, i32) {
    %c0_i32 = arith.constant 0 : i32
    %c0_i32_0 = arith.constant 0 : i32
    return %arg0, %c0_i32 : i32, i32
  }
  func.func @transform_1(%arg0: i32) -> (i32, i32) {
    %c0_i32 = arith.constant 0 : i32
    %c0_i32_0 = arith.constant 0 : i32
    return %arg0, %c0_i32 : i32, i32
  }
}

</mosaic_0001>

<llo_original>
// kernel: tpu_custom_call.1
$region0: #{tpu_custom_call.1}
  #allocation0 [shape = 'u32[]', space=smem, size = 0x4, offset = 0x4, fixed_abs, tag = 'smem constant byte address 0x4 - core index']
  #allocation1 [shape = 'u32[144,128]{1,0:T(1,128)}', space=vmem, size = 0x12000, scoped, tag = 'internal scratch']
  %s0 = inlined_call_operand.vmem [shape: f32[1024,28], index: 0, kind: input, shape index: {}]
  %s1 = inlined_call_operand.vmem [shape: f32[1024,24], index: 1, kind: output, shape index: {}]
  %s2 = sld [smem:[#allocation0]]
  $region14: #{tpu_custom_call.1} parent=0
    _
  %s4 = ssub.s32 1, %s2
  %s5 = scalar_select 0, %s4, %s2
  // Predicated region
  $region2: #{tpu_custom_call.1} parent=0 // pred_check
    _
  $region3: #{tpu_custom_call.1} parent=0 // pred_check_branch
    %7 = sbr.rel (0) target = $region5
  $region4: #{tpu_custom_call.1} parent=0 // pred_region
    _
  $region5: #{tpu_custom_call.1} parent=0 // pred_fallthru
    _
  %v8 = vld [vmem:[%s0] sm:$0xff]
  %v9 = vld [vmem:[%s0 + $0x8] sm:$0xff]
  %v10 = vld [vmem:[%s0 + $0x10] sm:$0xff]
  %v11 = vld [vmem:[%s0 + $0x18] sm:$0xff]
  %v12 = vld [vmem:[%s0 + $0x20] sm:$0xff]
  %v13 = vld [vmem:[%s0 + $0x28] sm:$0xff]
  %v14 = vld [vmem:[%s0 + $0x30] sm:$0xff]
  %v15 = vld [vmem:[%s0 + $0x38] sm:$0xff]
  %v16 = vld [vmem:[%s0 + $0x40] sm:$0xff]
  %v17 = vld [vmem:[%s0 + $0x48] sm:$0xff]
  %v18 = vld [vmem:[%s0 + $0x50] sm:$0xff]
  %v19 = vld [vmem:[%s0 + $0x58] sm:$0xff]
  %v20 = vld [vmem:[%s0 + $0x60] sm:$0xff]
  %v21 = vld [vmem:[%s0 + $0x68] sm:$0xff]
  %v22 = vld [vmem:[%s0 + $0x70] sm:$0xff]
  %v23 = vld [vmem:[%s0 + $0x78] sm:$0xff]
  %v24 = vld [vmem:[%s0 + $0x80] sm:$0xff]
  %v25 = vld [vmem:[%s0 + $0x88] sm:$0xff]
  %v26 = vld [vmem:[%s0 + $0x90] sm:$0xff]
  %v27 = vld [vmem:[%s0 + $0x98] sm:$0xff]
  %v28 = vld [vmem:[%s0 + $0xa0] sm:$0xff]
  %v29 = vld [vmem:[%s0 + $0xa8] sm:$0xff]
  %v30 = vld [vmem:[%s0 + $0xb0] sm:$0xff]
  %v31 = vld [vmem:[%s0 + $0xb8] sm:$0xff]
  %v32 = vld [vmem:[%s0 + $0xc0] sm:$0xff]
  %v33 = vld [vmem:[%s0 + $0xc8] sm:$0xff]
  %v34 = vld [vmem:[%s0 + $0xd0] sm:$0xff]
  %v35 = vld [vmem:[%s0 + $0xd8] sm:$0xff]
  %v36 = vld [vmem:[%s0 + $0xe0] sm:$0xff]
  %v37 = vld [vmem:[%s0 + $0xe8] sm:$0xff]
  %v38 = vld [vmem:[%s0 + $0xf0] sm:$0xff]
  %v39 = vld [vmem:[%s0 + $0xf8] sm:$0xff]
  %v40 = vld [vmem:[%s0 + $0x100] sm:$0xff]
  %v41 = vld [vmem:[%s0 + $0x108] sm:$0xff]
  %v42 = vld [vmem:[%s0 + $0x110] sm:$0xff]
  %v43 = vld [vmem:[%s0 + $0x118] sm:$0xff]
  %v44 = vld [vmem:[%s0 + $0x120] sm:$0xff]
  %v45 = vld [vmem:[%s0 + $0x128] sm:$0xff]
  %v46 = vld [vmem:[%s0 + $0x130] sm:$0xff]
  %v47 = vld [vmem:[%s0 + $0x138] sm:$0xff]
  %v48 = vld [vmem:[%s0 + $0x140] sm:$0xff]
  %v49 = vld [vmem:[%s0 + $0x148] sm:$0xff]
  %v50 = vld [vmem:[%s0 + $0x150] sm:$0xff]
  %v51 = vld [vmem:[%s0 + $0x158] sm:$0xff]
  %v52 = vld [vmem:[%s0 + $0x160] sm:$0xff]
  %v53 = vld [vmem:[%s0 + $0x168] sm:$0xff]
  %v54 = vld [vmem:[%s0 + $0x170] sm:$0xff]
  %v55 = vld [vmem:[%s0 + $0x178] sm:$0xff]
  %v56 = vld [vmem:[%s0 + $0x180] sm:$0xff]
  %v57 = vld [vmem:[%s0 + $0x188] sm:$0xff]
  %v58 = vld [vmem:[%s0 + $0x190] sm:$0xff]
  %v59 = vld [vmem:[%s0 + $0x198] sm:$0xff]
  %v60 = vld [vmem:[%s0 + $0x1a0] sm:$0xff]
  %v61 = vld [vmem:[%s0 + $0x1a8] sm:$0xff]
  %v62 = vld [vmem:[%s0 + $0x1b0] sm:$0xff]
  %v63 = vld [vmem:[%s0 + $0x1b8] sm:$0xff]
  %v64 = vld [vmem:[%s0 + $0x1c0] sm:$0xff]
  %v65 = vld [vmem:[%s0 + $0x1c8] sm:$0xff]
  %v66 = vld [vmem:[%s0 + $0x1d0] sm:$0xff]
  %v67 = vld [vmem:[%s0 + $0x1d8] sm:$0xff]
  %v68 = vld [vmem:[%s0 + $0x1e0] sm:$0xff]
  %v69 = vld [vmem:[%s0 + $0x1e8] sm:$0xff]
  %v70 = vld [vmem:[%s0 + $0x1f0] sm:$0xff]
  %v71 = vld [vmem:[%s0 + $0x1f8] sm:$0xff]
  %v72 = vld [vmem:[%s0 + $0x200] sm:$0xff]
  %v73 = vld [vmem:[%s0 + $0x208] sm:$0xff]
  %v74 = vld [vmem:[%s0 + $0x210] sm:$0xff]
  %v75 = vld [vmem:[%s0 + $0x218] sm:$0xff]
  %v76 = vld [vmem:[%s0 + $0x220] sm:$0xff]
  %v77 = vld [vmem:[%s0 + $0x228] sm:$0xff]
  %v78 = vld [vmem:[%s0 + $0x230] sm:$0xff]
  %v79 = vld [vmem:[%s0 + $0x238] sm:$0xff]
  %v80 = vld [vmem:[%s0 + $0x240] sm:$0xff]
  %v81 = vld [vmem:[%s0 + $0x248] sm:$0xff]
  %v82 = vld [vmem:[%s0 + $0x250] sm:$0xff]
  %v83 = vld [vmem:[%s0 + $0x258] sm:$0xff]
  %v84 = vld [vmem:[%s0 + $0x260] sm:$0xff]
  %v85 = vld [vmem:[%s0 + $0x268] sm:$0xff]
  %v86 = vld [vmem:[%s0 + $0x270] sm:$0xff]
  %v87 = vld [vmem:[%s0 + $0x278] sm:$0xff]
  %v88 = vld [vmem:[%s0 + $0x280] sm:$0xff]
  %v89 = vld [vmem:[%s0 + $0x288] sm:$0xff]
  %v90 = vld [vmem:[%s0 + $0x290] sm:$0xff]
  %v91 = vld [vmem:[%s0 + $0x298] sm:$0xff]
  %v92 = vld [vmem:[%s0 + $0x2a0] sm:$0xff]
  %v93 = vld [vmem:[%s0 + $0x2a8] sm:$0xff]
  %v94 = vld [vmem:[%s0 + $0x2b0] sm:$0xff]
  %v95 = vld [vmem:[%s0 + $0x2b8] sm:$0xff]
  %v96 = vld [vmem:[%s0 + $0x2c0] sm:$0xff]
  %v97 = vld [vmem:[%s0 + $0x2c8] sm:$0xff]
  %v98 = vld [vmem:[%s0 + $0x2d0] sm:$0xff]
  %v99 = vld [vmem:[%s0 + $0x2d8] sm:$0xff]
  %v100 = vld [vmem:[%s0 + $0x2e0] sm:$0xff]
  %v101 = vld [vmem:[%s0 + $0x2e8] sm:$0xff]
  %v102 = vld [vmem:[%s0 + $0x2f0] sm:$0xff]
  %v103 = vld [vmem:[%s0 + $0x2f8] sm:$0xff]
  %v104 = vld [vmem:[%s0 + $0x300] sm:$0xff]
  %v105 = vld [vmem:[%s0 + $0x308] sm:$0xff]
  %v106 = vld [vmem:[%s0 + $0x310] sm:$0xff]
  %v107 = vld [vmem:[%s0 + $0x318] sm:$0xff]
  %v108 = vld [vmem:[%s0 + $0x320] sm:$0xff]
  %v109 = vld [vmem:[%s0 + $0x328] sm:$0xff]
  %v110 = vld [vmem:[%s0 + $0x330] sm:$0xff]
  %v111 = vld [vmem:[%s0 + $0x338] sm:$0xff]
  %v112 = vld [vmem:[%s0 + $0x340] sm:$0xff]
  %v113 = vld [vmem:[%s0 + $0x348] sm:$0xff]
  %v114 = vld [vmem:[%s0 + $0x350] sm:$0xff]
  %v115 = vld [vmem:[%s0 + $0x358] sm:$0xff]
  %v116 = vld [vmem:[%s0 + $0x360] sm:$0xff]
  %v117 = vld [vmem:[%s0 + $0x368] sm:$0xff]
  %v118 = vld [vmem:[%s0 + $0x370] sm:$0xff]
  %v119 = vld [vmem:[%s0 + $0x378] sm:$0xff]
  %v120 = vld [vmem:[%s0 + $0x380] sm:$0xff]
  %v121 = vld [vmem:[%s0 + $0x388] sm:$0xff]
  %v122 = vld [vmem:[%s0 + $0x390] sm:$0xff]
  %v123 = vld [vmem:[%s0 + $0x398] sm:$0xff]
  %v124 = vld [vmem:[%s0 + $0x3a0] sm:$0xff]
  %v125 = vld [vmem:[%s0 + $0x3a8] sm:$0xff]
  %v126 = vld [vmem:[%s0 + $0x3b0] sm:$0xff]
  %v127 = vld [vmem:[%s0 + $0x3b8] sm:$0xff]
  %v128 = vld [vmem:[%s0 + $0x3c0] sm:$0xff]
  %v129 = vld [vmem:[%s0 + $0x3c8] sm:$0xff]
  %v130 = vld [vmem:[%s0 + $0x3d0] sm:$0xff]
  %v131 = vld [vmem:[%s0 + $0x3d8] sm:$0xff]
  %v132 = vld [vmem:[%s0 + $0x3e0] sm:$0xff]
  %v133 = vld [vmem:[%s0 + $0x3e8] sm:$0xff]
  %v134 = vld [vmem:[%s0 + $0x3f0] sm:$0xff]
  %v135 = vld [vmem:[%s0 + $0x3f8] sm:$0xff]
  %v136 = vxor.u32 %v8, 2147483648
  %v137 = vxor.u32 %v9, 2147483648
  %v138 = vxor.u32 %v10, 2147483648
  %v139 = vxor.u32 %v11, 2147483648
  %v140 = vxor.u32 %v12, 2147483648
  %v141 = vxor.u32 %v13, 2147483648
  %v142 = vxor.u32 %v14, 2147483648
  %v143 = vxor.u32 %v15, 2147483648
  %v144 = vxor.u32 %v16, 2147483648
  %v145 = vxor.u32 %v17, 2147483648
  %v146 = vxor.u32 %v18, 2147483648
  %v147 = vxor.u32 %v19, 2147483648
  %v148 = vxor.u32 %v20, 2147483648
  %v149 = vxor.u32 %v21, 2147483648
  %v150 = vxor.u32 %v22, 2147483648
  %v151 = vxor.u32 %v23, 2147483648
  %v152 = vxor.u32 %v24, 2147483648
  %v153 = vxor.u32 %v25, 2147483648
  %v154 = vxor.u32 %v26, 2147483648
  %v155 = vxor.u32 %v27, 2147483648
  %v156 = vxor.u32 %v28, 2147483648
  %v157 = vxor.u32 %v29, 2147483648
  %v158 = vxor.u32 %v30, 2147483648
  %v159 = vxor.u32 %v31, 2147483648
  %v160 = vxor.u32 %v32, 2147483648
  %v161 = vxor.u32 %v33, 2147483648
  %v162 = vxor.u32 %v34, 2147483648
  %v163 = vxor.u32 %v35, 2147483648
  %v164 = vxor.u32 %v36, 2147483648
  %v165 = vxor.u32 %v37, 2147483648
  %v166 = vxor.u32 %v38, 2147483648
  %v167 = vxor.u32 %v39, 2147483648
  %v168 = vxor.u32 %v40, 2147483648
  %v169 = vxor.u32 %v41, 2147483648
  %v170 = vxor.u32 %v42, 2147483648
  %v171 = vxor.u32 %v43, 2147483648
  %v172 = vxor.u32 %v44, 2147483648
  %v173 = vxor.u32 %v45, 2147483648
  %v174 = vxor.u32 %v46, 2147483648
  %v175 = vxor.u32 %v47, 2147483648
  %v176 = vxor.u32 %v48, 2147483648
  %v177 = vxor.u32 %v49, 2147483648
  %v178 = vxor.u32 %v50, 2147483648
  %v179 = vxor.u32 %v51, 2147483648
  %v180 = vxor.u32 %v52, 2147483648
  %v181 = vxor.u32 %v53, 2147483648
  %v182 = vxor.u32 %v54, 2147483648
  %v183 = vxor.u32 %v55, 2147483648
  %v184 = vxor.u32 %v56, 2147483648
  %v185 = vxor.u32 %v57, 2147483648
  %v186 = vxor.u32 %v58, 2147483648
  %v187 = vxor.u32 %v59, 2147483648
  %v188 = vxor.u32 %v60, 2147483648
  %v189 = vxor.u32 %v61, 2147483648
  %v190 = vxor.u32 %v62, 2147483648
  %v191 = vxor.u32 %v63, 2147483648
  %v192 = vxor.u32 %v64, 2147483648
  %v193 = vxor.u32 %v65, 2147483648
  %v194 = vxor.u32 %v66, 2147483648
  %v195 = vxor.u32 %v67, 2147483648
  %v196 = vxor.u32 %v68, 2147483648
  %v197 = vxor.u32 %v69, 2147483648
  %v198 = vxor.u32 %v70, 2147483648
  %v199 = vxor.u32 %v71, 2147483648
  %v200 = vxor.u32 %v72, 2147483648
  %v201 = vxor.u32 %v73, 2147483648
  %v202 = vxor.u32 %v74, 2147483648
  %v203 = vxor.u32 %v75, 2147483648
  %v204 = vxor.u32 %v76, 2147483648
  %v205 = vxor.u32 %v77, 2147483648
  %v206 = vxor.u32 %v78, 2147483648
  %v207 = vxor.u32 %v79, 2147483648
  %v208 = vxor.u32 %v80, 2147483648
  %v209 = vxor.u32 %v81, 2147483648
  %v210 = vxor.u32 %v82, 2147483648
  %v211 = vxor.u32 %v83, 2147483648
  %v212 = vxor.u32 %v84, 2147483648
  %v213 = vxor.u32 %v85, 2147483648
  %v214 = vxor.u32 %v86, 2147483648
  %v215 = vxor.u32 %v87, 2147483648
  %v216 = vxor.u32 %v88, 2147483648
  %v217 = vxor.u32 %v89, 2147483648
  %v218 = vxor.u32 %v90, 2147483648
  %v219 = vxor.u32 %v91, 2147483648
  %v220 = vxor.u32 %v92, 2147483648
  %v221 = vxor.u32 %v93, 2147483648
  %v222 = vxor.u32 %v94, 2147483648
  %v223 = vxor.u32 %v95, 2147483648
  %v224 = vxor.u32 %v96, 2147483648
  %v225 = vxor.u32 %v97, 2147483648
  %v226 = vxor.u32 %v98, 2147483648
  %v227 = vxor.u32 %v99, 2147483648
  %v228 = vxor.u32 %v100, 2147483648
  %v229 = vxor.u32 %v101, 2147483648
  %v230 = vxor.u32 %v102, 2147483648
  %v231 = vxor.u32 %v103, 2147483648
  %v232 = vxor.u32 %v104, 2147483648
  %v233 = vxor.u32 %v105, 2147483648
  %v234 = vxor.u32 %v106, 2147483648
  %v235 = vxor.u32 %v107, 2147483648
  %v236 = vxor.u32 %v108, 2147483648
  %v237 = vxor.u32 %v109, 2147483648
  %v238 = vxor.u32 %v110, 2147483648
  %v239 = vxor.u32 %v111, 2147483648
  %v240 = vxor.u32 %v112, 2147483648
  %v241 = vxor.u32 %v113, 2147483648
  %v242 = vxor.u32 %v114, 2147483648
  %v243 = vxor.u32 %v115, 2147483648
  %v244 = vxor.u32 %v116, 2147483648
  %v245 = vxor.u32 %v117, 2147483648
  %v246 = vxor.u32 %v118, 2147483648
  %v247 = vxor.u32 %v119, 2147483648
  %v248 = vxor.u32 %v120, 2147483648
  %v249 = vxor.u32 %v121, 2147483648
  %v250 = vxor.u32 %v122, 2147483648
  %v251 = vxor.u32 %v123, 2147483648
  %v252 = vxor.u32 %v124, 2147483648
  %v253 = vxor.u32 %v125, 2147483648
  %v254 = vxor.u32 %v126, 2147483648
  %v255 = vxor.u32 %v127, 2147483648
  %v256 = vxor.u32 %v128, 2147483648
  %v257 = vxor.u32 %v129, 2147483648
  %v258 = vxor.u32 %v130, 2147483648
  %v259 = vxor.u32 %v131, 2147483648
  %v260 = vxor.u32 %v132, 2147483648
  %v261 = vxor.u32 %v133, 2147483648
  %v262 = vxor.u32 %v134, 2147483648
  %v263 = vxor.u32 %v135, 2147483648
  %v264 = vmul.f32 %v136, 1.442695
  %v265 = vpow.pop %v264
  %v266 = vmul.f32 %v137, 1.442695
  %v267 = vpow.pop %v266
  %v268 = vmul.f32 %v138, 1.442695
  %v269 = vpow.pop %v268
  %v270 = vmul.f32 %v139, 1.442695
  %v271 = vpow.pop %v270
  %v272 = vmul.f32 %v140, 1.442695
  %v273 = vpow.pop %v272
  %v274 = vmul.f32 %v141, 1.442695
  %v275 = vpow.pop %v274
  %v276 = vmul.f32 %v142, 1.442695
  %v277 = vpow.pop %v276
  %v278 = vmul.f32 %v143, 1.442695
  %v279 = vpow.pop %v278
  %v280 = vmul.f32 %v144, 1.442695
  %v281 = vpow.pop %v280
  %v282 = vmul.f32 %v145, 1.442695
  %v283 = vpow.pop %v282
  %v284 = vmul.f32 %v146, 1.442695
  %v285 = vpow.pop %v284
  %v286 = vmul.f32 %v147, 1.442695
  %v287 = vpow.pop %v286
  %v288 = vmul.f32 %v148, 1.442695
  %v289 = vpow.pop %v288
  %v290 = vmul.f32 %v149, 1.442695
  %v291 = vpow.pop %v290
  %v292 = vmul.f32 %v150, 1.442695
  %v293 = vpow.pop %v292
  %v294 = vmul.f32 %v151, 1.442695
  %v295 = vpow.pop %v294
  %v296 = vmul.f32 %v152, 1.442695
  %v297 = vpow.pop %v296
  %v298 = vmul.f32 %v153, 1.442695
  %v299 = vpow.pop %v298
  %v300 = vmul.f32 %v154, 1.442695
  %v301 = vpow.pop %v300
  %v302 = vmul.f32 %v155, 1.442695
  %v303 = vpow.pop %v302
  %v304 = vmul.f32 %v156, 1.442695
  %v305 = vpow.pop %v304
  %v306 = vmul.f32 %v157, 1.442695
  %v307 = vpow.pop %v306
  %v308 = vmul.f32 %v158, 1.442695
  %v309 = vpow.pop %v308
  %v310 = vmul.f32 %v159, 1.442695
  %v311 = vpow.pop %v310
  %v312 = vmul.f32 %v160, 1.442695
  %v313 = vpow.pop %v312
  %v314 = vmul.f32 %v161, 1.442695
  %v315 = vpow.pop %v314
  %v316 = vmul.f32 %v162, 1.442695
  %v317 = vpow.pop %v316
  %v318 = vmul.f32 %v163, 1.442695
  %v319 = vpow.pop %v318
  %v320 = vmul.f32 %v164, 1.442695
  %v321 = vpow.pop %v320
  %v322 = vmul.f32 %v165, 1.442695
  %v323 = vpow.pop %v322
  %v324 = vmul.f32 %v166, 1.442695
  %v325 = vpow.pop %v324
  %v326 = vmul.f32 %v167, 1.442695
  %v327 = vpow.pop %v326
  %v328 = vmul.f32 %v168, 1.442695
  %v329 = vpow.pop %v328
  %v330 = vmul.f32 %v169, 1.442695
  %v331 = vpow.pop %v330
  %v332 = vmul.f32 %v170, 1.442695
  %v333 = vpow.pop %v332
  %v334 = vmul.f32 %v171, 1.442695
  %v335 = vpow.pop %v334
  %v336 = vmul.f32 %v172, 1.442695
  %v337 = vpow.pop %v336
  %v338 = vmul.f32 %v173, 1.442695
  %v339 = vpow.pop %v338
  %v340 = vmul.f32 %v174, 1.442695
  %v341 = vpow.pop %v340
  %v342 = vmul.f32 %v175, 1.442695
  %v343 = vpow.pop %v342
  %v344 = vmul.f32 %v176, 1.442695
  %v345 = vpow.pop %v344
  %v346 = vmul.f32 %v177, 1.442695
  %v347 = vpow.pop %v346
  %v348 = vmul.f32 %v178, 1.442695
  %v349 = vpow.pop %v348
  %v350 = vmul.f32 %v179, 1.442695
  %v351 = vpow.pop %v350
  %v352 = vmul.f32 %v180, 1.442695
  %v353 = vpow.pop %v352
  %v354 = vmul.f32 %v181, 1.442695
  %v355 = vpow.pop %v354
  %v356 = vmul.f32 %v182, 1.442695
  %v357 = vpow.pop %v356
  %v358 = vmul.f32 %v183, 1.442695
  %v359 = vpow.pop %v358
  %v360 = vmul.f32 %v184, 1.442695
  %v361 = vpow.pop %v360
  %v362 = vmul.f32 %v185, 1.442695
  %v363 = vpow.pop %v362
  %v364 = vmul.f32 %v186, 1.442695
  %v365 = vpow.pop %v364
  %v366 = vmul.f32 %v187, 1.442695
  %v367 = vpow.pop %v366
  %v368 = vmul.f32 %v188, 1.442695
  %v369 = vpow.pop %v368
  %v370 = vmul.f32 %v189, 1.442695
  %v371 = vpow.pop %v370
  %v372 = vmul.f32 %v190, 1.442695
  %v373 = vpow.pop %v372
  %v374 = vmul.f32 %v191, 1.442695
  %v375 = vpow.pop %v374
  %v376 = vmul.f32 %v192, 1.442695
  %v377 = vpow.pop %v376
  %v378 = vmul.f32 %v193, 1.442695
  %v379 = vpow.pop %v378
  %v380 = vmul.f32 %v194, 1.442695
  %v381 = vpow.pop %v380
  %v382 = vmul.f32 %v195, 1.442695
  %v383 = vpow.pop %v382
  %v384 = vmul.f32 %v196, 1.442695
  %v385 = vpow.pop %v384
  %v386 = vmul.f32 %v197, 1.442695
  %v387 = vpow.pop %v386
  %v388 = vmul.f32 %v198, 1.442695
  %v389 = vpow.pop %v388
  %v390 = vmul.f32 %v199, 1.442695
  %v391 = vpow.pop %v390
  %v392 = vmul.f32 %v200, 1.442695
  %v393 = vpow.pop %v392
  %v394 = vmul.f32 %v201, 1.442695
  %v395 = vpow.pop %v394
  %v396 = vmul.f32 %v202, 1.442695
  %v397 = vpow.pop %v396
  %v398 = vmul.f32 %v203, 1.442695
  %v399 = vpow.pop %v398
  %v400 = vmul.f32 %v204, 1.442695
  %v401 = vpow.pop %v400
  %v402 = vmul.f32 %v205, 1.442695
  %v403 = vpow.pop %v402
  %v404 = vmul.f32 %v206, 1.442695
  %v405 = vpow.pop %v404
  %v406 = vmul.f32 %v207, 1.442695
  %v407 = vpow.pop %v406
  %v408 = vmul.f32 %v208, 1.442695
  %v409 = vpow.pop %v408
  %v410 = vmul.f32 %v209, 1.442695
  %v411 = vpow.pop %v410
  %v412 = vmul.f32 %v210, 1.442695
  %v413 = vpow.pop %v412
  %v414 = vmul.f32 %v211, 1.442695
  %v415 = vpow.pop %v414
  %v416 = vmul.f32 %v212, 1.442695
  %v417 = vpow.pop %v416
  %v418 = vmul.f32 %v213, 1.442695
  %v419 = vpow.pop %v418
  %v420 = vmul.f32 %v214, 1.442695
  %v421 = vpow.pop %v420
  %v422 = vmul.f32 %v215, 1.442695
  %v423 = vpow.pop %v422
  %v424 = vmul.f32 %v216, 1.442695
  %v425 = vpow.pop %v424
  %v426 = vmul.f32 %v217, 1.442695
  %v427 = vpow.pop %v426
  %v428 = vmul.f32 %v218, 1.442695
  %v429 = vpow.pop %v428
  %v430 = vmul.f32 %v219, 1.442695
  %v431 = vpow.pop %v430
  %v432 = vmul.f32 %v220, 1.442695
  %v433 = vpow.pop %v432
  %v434 = vmul.f32 %v221, 1.442695
  %v435 = vpow.pop %v434
  %v436 = vmul.f32 %v222, 1.442695
  %v437 = vpow.pop %v436
  %v438 = vmul.f32 %v223, 1.442695
  %v439 = vpow.pop %v438
  %v440 = vmul.f32 %v224, 1.442695
  %v441 = vpow.pop %v440
  %v442 = vmul.f32 %v225, 1.442695
  %v443 = vpow.pop %v442
  %v444 = vmul.f32 %v226, 1.442695
  %v445 = vpow.pop %v444
  %v446 = vmul.f32 %v227, 1.442695
  %v447 = vpow.pop %v446
  %v448 = vmul.f32 %v228, 1.442695
  %v449 = vpow.pop %v448
  %v450 = vmul.f32 %v229, 1.442695
  %v451 = vpow.pop %v450
  %v452 = vmul.f32 %v230, 1.442695
  %v453 = vpow.pop %v452
  %v454 = vmul.f32 %v231, 1.442695
  %v455 = vpow.pop %v454
  %v456 = vmul.f32 %v232, 1.442695
  %v457 = vpow.pop %v456
  %v458 = vmul.f32 %v233, 1.442695
  %v459 = vpow.pop %v458
  %v460 = vmul.f32 %v234, 1.442695
  %v461 = vpow.pop %v460
  %v462 = vmul.f32 %v235, 1.442695
  %v463 = vpow.pop %v462
  %v464 = vmul.f32 %v236, 1.442695
  %v465 = vpow.pop %v464
  %v466 = vmul.f32 %v237, 1.442695
  %v467 = vpow.pop %v466
  %v468 = vmul.f32 %v238, 1.442695
  %v469 = vpow.pop %v468
  %v470 = vmul.f32 %v239, 1.442695
  %v471 = vpow.pop %v470
  %v472 = vmul.f32 %v240, 1.442695
  %v473 = vpow.pop %v472
  %v474 = vmul.f32 %v241, 1.442695
  %v475 = vpow.pop %v474
  %v476 = vmul.f32 %v242, 1.442695
  %v477 = vpow.pop %v476
  %v478 = vmul.f32 %v243, 1.442695
  %v479 = vpow.pop %v478
  %v480 = vmul.f32 %v244, 1.442695
  %v481 = vpow.pop %v480
  %v482 = vmul.f32 %v245, 1.442695
  %v483 = vpow.pop %v482
  %v484 = vmul.f32 %v246, 1.442695
  %v485 = vpow.pop %v484
  %v486 = vmul.f32 %v247, 1.442695
  %v487 = vpow.pop %v486
  %v488 = vmul.f32 %v248, 1.442695
  %v489 = vpow.pop %v488
  %v490 = vmul.f32 %v249, 1.442695
  %v491 = vpow.pop %v490
  %v492 = vmul.f32 %v250, 1.442695
  %v493 = vpow.pop %v492
  %v494 = vmul.f32 %v251, 1.442695
  %v495 = vpow.pop %v494
  %v496 = vmul.f32 %v252, 1.442695
  %v497 = vpow.pop %v496
  %v498 = vmul.f32 %v253, 1.442695
  %v499 = vpow.pop %v498
  %v500 = vmul.f32 %v254, 1.442695
  %v501 = vpow.pop %v500
  %v502 = vmul.f32 %v255, 1.442695
  %v503 = vpow.pop %v502
  %v504 = vmul.f32 %v256, 1.442695
  %v505 = vpow.pop %v504
  %v506 = vmul.f32 %v257, 1.442695
  %v507 = vpow.pop %v506
  %v508 = vmul.f32 %v258, 1.442695
  %v509 = vpow.pop %v508
  %v510 = vmul.f32 %v259, 1.442695
  %v511 = vpow.pop %v510
  %v512 = vmul.f32 %v260, 1.442695
  %v513 = vpow.pop %v512
  %v514 = vmul.f32 %v261, 1.442695
  %v515 = vpow.pop %v514
  %v516 = vmul.f32 %v262, 1.442695
  %v517 = vpow.pop %v516
  %v518 = vmul.f32 %v263, 1.442695
  %v519 = vpow.pop %v518
  %v520 = vadd.f32 %v265, 1.0
  %v521 = vadd.f32 %v267, 1.0
  %v522 = vadd.f32 %v269, 1.0
  %v523 = vadd.f32 %v271, 1.0
  %v524 = vadd.f32 %v273, 1.0
  %v525 = vadd.f32 %v275, 1.0
  %v526 = vadd.f32 %v277, 1.0
  %v527 = vadd.f32 %v279, 1.0
  %v528 = vadd.f32 %v281, 1.0
  %v529 = vadd.f32 %v283, 1.0
  %v530 = vadd.f32 %v285, 1.0
  %v531 = vadd.f32 %v287, 1.0
  %v532 = vadd.f32 %v289, 1.0
  %v533 = vadd.f32 %v291, 1.0
  %v534 = vadd.f32 %v293, 1.0
  %v535 = vadd.f32 %v295, 1.0
  %v536 = vadd.f32 %v297, 1.0
  %v537 = vadd.f32 %v299, 1.0
  %v538 = vadd.f32 %v301, 1.0
  %v539 = vadd.f32 %v303, 1.0
  %v540 = vadd.f32 %v305, 1.0
  %v541 = vadd.f32 %v307, 1.0
  %v542 = vadd.f32 %v309, 1.0
  %v543 = vadd.f32 %v311, 1.0
  %v544 = vadd.f32 %v313, 1.0
  %v545 = vadd.f32 %v315, 1.0
  %v546 = vadd.f32 %v317, 1.0
  %v547 = vadd.f32 %v319, 1.0
  %v548 = vadd.f32 %v321, 1.0
  %v549 = vadd.f32 %v323, 1.0
  %v550 = vadd.f32 %v325, 1.0
  %v551 = vadd.f32 %v327, 1.0
  %v552 = vadd.f32 %v329, 1.0
  %v553 = vadd.f32 %v331, 1.0
  %v554 = vadd.f32 %v333, 1.0
  %v555 = vadd.f32 %v335, 1.0
  %v556 = vadd.f32 %v337, 1.0
  %v557 = vadd.f32 %v339, 1.0
  %v558 = vadd.f32 %v341, 1.0
  %v559 = vadd.f32 %v343, 1.0
  %v560 = vadd.f32 %v345, 1.0
  %v561 = vadd.f32 %v347, 1.0
  %v562 = vadd.f32 %v349, 1.0
  %v563 = vadd.f32 %v351, 1.0
  %v564 = vadd.f32 %v353, 1.0
  %v565 = vadd.f32 %v355, 1.0
  %v566 = vadd.f32 %v357, 1.0
  %v567 = vadd.f32 %v359, 1.0
  %v568 = vadd.f32 %v361, 1.0
  %v569 = vadd.f32 %v363, 1.0
  %v570 = vadd.f32 %v365, 1.0
  %v571 = vadd.f32 %v367, 1.0
  %v572 = vadd.f32 %v369, 1.0
  %v573 = vadd.f32 %v371, 1.0
  %v574 = vadd.f32 %v373, 1.0
  %v575 = vadd.f32 %v375, 1.0
  %v576 = vadd.f32 %v377, 1.0
  %v577 = vadd.f32 %v379, 1.0
  %v578 = vadd.f32 %v381, 1.0
  %v579 = vadd.f32 %v383, 1.0
  %v580 = vadd.f32 %v385, 1.0
  %v581 = vadd.f32 %v387, 1.0
  %v582 = vadd.f32 %v389, 1.0
  %v583 = vadd.f32 %v391, 1.0
  %v584 = vadd.f32 %v393, 1.0
  %v585 = vadd.f32 %v395, 1.0
  %v586 = vadd.f32 %v397, 1.0
  %v587 = vadd.f32 %v399, 1.0
  %v588 = vadd.f32 %v401, 1.0
  %v589 = vadd.f32 %v403, 1.0
  %v590 = vadd.f32 %v405, 1.0
  %v591 = vadd.f32 %v407, 1.0
  %v592 = vadd.f32 %v409, 1.0
  %v593 = vadd.f32 %v411, 1.0
  %v594 = vadd.f32 %v413, 1.0
  %v595 = vadd.f32 %v415, 1.0
  %v596 = vadd.f32 %v417, 1.0
  %v597 = vadd.f32 %v419, 1.0
  %v598 = vadd.f32 %v421, 1.0
  %v599 = vadd.f32 %v423, 1.0
  %v600 = vadd.f32 %v425, 1.0
  %v601 = vadd.f32 %v427, 1.0
  %v602 = vadd.f32 %v429, 1.0
  %v603 = vadd.f32 %v431, 1.0
  %v604 = vadd.f32 %v433, 1.0
  %v605 = vadd.f32 %v435, 1.0
  %v606 = vadd.f32 %v437, 1.0
  %v607 = vadd.f32 %v439, 1.0
  %v608 = vadd.f32 %v441, 1.0
  %v609 = vadd.f32 %v443, 1.0
  %v610 = vadd.f32 %v445, 1.0
  %v611 = vadd.f32 %v447, 1.0
  %v612 = vadd.f32 %v449, 1.0
  %v613 = vadd.f32 %v451, 1.0
  %v614 = vadd.f32 %v453, 1.0
  %v615 = vadd.f32 %v455, 1.0
  %v616 = vadd.f32 %v457, 1.0
  %v617 = vadd.f32 %v459, 1.0
  %v618 = vadd.f32 %v461, 1.0
  %v619 = vadd.f32 %v463, 1.0
  %v620 = vadd.f32 %v465, 1.0
  %v621 = vadd.f32 %v467, 1.0
  %v622 = vadd.f32 %v469, 1.0
  %v623 = vadd.f32 %v471, 1.0
  %v624 = vadd.f32 %v473, 1.0
  %v625 = vadd.f32 %v475, 1.0
  %v626 = vadd.f32 %v477, 1.0
  %v627 = vadd.f32 %v479, 1.0
  %v628 = vadd.f32 %v481, 1.0
  %v629 = vadd.f32 %v483, 1.0
  %v630 = vadd.f32 %v485, 1.0
  %v631 = vadd.f32 %v487, 1.0
  %v632 = vadd.f32 %v489, 1.0
  %v633 = vadd.f32 %v491, 1.0
  %v634 = vadd.f32 %v493, 1.0
  %v635 = vadd.f32 %v495, 1.0
  %v636 = vadd.f32 %v497, 1.0
  %v637 = vadd.f32 %v499, 1.0
  %v638 = vadd.f32 %v501, 1.0
  %v639 = vadd.f32 %v503, 1.0
  %v640 = vadd.f32 %v505, 1.0
  %v641 = vadd.f32 %v507, 1.0
  %v642 = vadd.f32 %v509, 1.0
  %v643 = vadd.f32 %v511, 1.0
  %v644 = vadd.f32 %v513, 1.0
  %v645 = vadd.f32 %v515, 1.0
  %v646 = vadd.f32 %v517, 1.0
  %v647 = vadd.f32 %v519, 1.0
  %v648 = vrcp.pop %v520
  %v649 = vmul.f32 1.0, %v648
  %v650 = vrcp.pop %v521
  %v651 = vmul.f32 1.0, %v650
  %v652 = vrcp.pop %v522
  %v653 = vmul.f32 1.0, %v652
  %v654 = vrcp.pop %v523
  %v655 = vmul.f32 1.0, %v654
  %v656 = vrcp.pop %v524
  %v657 = vmul.f32 1.0, %v656
  %v658 = vrcp.pop %v525
  %v659 = vmul.f32 1.0, %v658
  %v660 = vrcp.pop %v526
  %v661 = vmul.f32 1.0, %v660
  %v662 = vrcp.pop %v527
  %v663 = vmul.f32 1.0, %v662
  %v664 = vrcp.pop %v528
  %v665 = vmul.f32 1.0, %v664
  %v666 = vrcp.pop %v529
  %v667 = vmul.f32 1.0, %v666
  %v668 = vrcp.pop %v530
  %v669 = vmul.f32 1.0, %v668
  %v670 = vrcp.pop %v531
  %v671 = vmul.f32 1.0, %v670
  %v672 = vrcp.pop %v532
  %v673 = vmul.f32 1.0, %v672
  %v674 = vrcp.pop %v533
  %v675 = vmul.f32 1.0, %v674
  %v676 = vrcp.pop %v534
  %v677 = vmul.f32 1.0, %v676
  %v678 = vrcp.pop %v535
  %v679 = vmul.f32 1.0, %v678
  %v680 = vrcp.pop %v536
  %v681 = vmul.f32 1.0, %v680
  %v682 = vrcp.pop %v537
  %v683 = vmul.f32 1.0, %v682
  %v684 = vrcp.pop %v538
  %v685 = vmul.f32 1.0, %v684
  %v686 = vrcp.pop %v539
  %v687 = vmul.f32 1.0, %v686
  %v688 = vrcp.pop %v540
  %v689 = vmul.f32 1.0, %v688
  %v690 = vrcp.pop %v541
  %v691 = vmul.f32 1.0, %v690
  %v692 = vrcp.pop %v542
  %v693 = vmul.f32 1.0, %v692
  %v694 = vrcp.pop %v543
  %v695 = vmul.f32 1.0, %v694
  %v696 = vrcp.pop %v544
  %v697 = vmul.f32 1.0, %v696
  %v698 = vrcp.pop %v545
  %v699 = vmul.f32 1.0, %v698
  %v700 = vrcp.pop %v546
  %v701 = vmul.f32 1.0, %v700
  %v702 = vrcp.pop %v547
  %v703 = vmul.f32 1.0, %v702
  %v704 = vrcp.pop %v548
  %v705 = vmul.f32 1.0, %v704
  %v706 = vrcp.pop %v549
  %v707 = vmul.f32 1.0, %v706
  %v708 = vrcp.pop %v550
  %v709 = vmul.f32 1.0, %v708
  %v710 = vrcp.pop %v551
  %v711 = vmul.f32 1.0, %v710
  %v712 = vrcp.pop %v552
  %v713 = vmul.f32 1.0, %v712
  %v714 = vrcp.pop %v553
  %v715 = vmul.f32 1.0, %v714
  %v716 = vrcp.pop %v554
  %v717 = vmul.f32 1.0, %v716
  %v718 = vrcp.pop %v555
  %v719 = vmul.f32 1.0, %v718
  %v720 = vrcp.pop %v556
  %v721 = vmul.f32 1.0, %v720
  %v722 = vrcp.pop %v557
  %v723 = vmul.f32 1.0, %v722
  %v724 = vrcp.pop %v558
  %v725 = vmul.f32 1.0, %v724
  %v726 = vrcp.pop %v559
  %v727 = vmul.f32 1.0, %v726
  %v728 = vrcp.pop %v560
  %v729 = vmul.f32 1.0, %v728
  %v730 = vrcp.pop %v561
  %v731 = vmul.f32 1.0, %v730
  %v732 = vrcp.pop %v562
  %v733 = vmul.f32 1.0, %v732
  %v734 = vrcp.pop %v563
  %v735 = vmul.f32 1.0, %v734
  %v736 = vrcp.pop %v564
  %v737 = vmul.f32 1.0, %v736
  %v738 = vrcp.pop %v565
  %v739 = vmul.f32 1.0, %v738
  %v740 = vrcp.pop %v566
  %v741 = vmul.f32 1.0, %v740
  %v742 = vrcp.pop %v567
  %v743 = vmul.f32 1.0, %v742
  %v744 = vrcp.pop %v568
  %v745 = vmul.f32 1.0, %v744
  %v746 = vrcp.pop %v569
  %v747 = vmul.f32 1.0, %v746
  %v748 = vrcp.pop %v570
  %v749 = vmul.f32 1.0, %v748
  %v750 = vrcp.pop %v571
  %v751 = vmul.f32 1.0, %v750
  %v752 = vrcp.pop %v572
  %v753 = vmul.f32 1.0, %v752
  %v754 = vrcp.pop %v573
  %v755 = vmul.f32 1.0, %v754
  %v756 = vrcp.pop %v574
  %v757 = vmul.f32 1.0, %v756
  %v758 = vrcp.pop %v575
  %v759 = vmul.f32 1.0, %v758
  %v760 = vrcp.pop %v576
  %v761 = vmul.f32 1.0, %v760
  %v762 = vrcp.pop %v577
  %v763 = vmul.f32 1.0, %v762
  %v764 = vrcp.pop %v578
  %v765 = vmul.f32 1.0, %v764
  %v766 = vrcp.pop %v579
  %v767 = vmul.f32 1.0, %v766
  %v768 = vrcp.pop %v580
  %v769 = vmul.f32 1.0, %v768
  %v770 = vrcp.pop %v581
  %v771 = vmul.f32 1.0, %v770
  %v772 = vrcp.pop %v582
  %v773 = vmul.f32 1.0, %v772
  %v774 = vrcp.pop %v583
  %v775 = vmul.f32 1.0, %v774
  %v776 = vrcp.pop %v584
  %v777 = vmul.f32 1.0, %v776
  %v778 = vrcp.pop %v585
  %v779 = vmul.f32 1.0, %v778
  %v780 = vrcp.pop %v586
  %v781 = vmul.f32 1.0, %v780
  %v782 = vrcp.pop %v587
  %v783 = vmul.f32 1.0, %v782
  %v784 = vrcp.pop %v588
  %v785 = vmul.f32 1.0, %v784
  %v786 = vrcp.pop %v589
  %v787 = vmul.f32 1.0, %v786
  %v788 = vrcp.pop %v590
  %v789 = vmul.f32 1.0, %v788
  %v790 = vrcp.pop %v591
  %v791 = vmul.f32 1.0, %v790
  %v792 = vrcp.pop %v592
  %v793 = vmul.f32 1.0, %v792
  %v794 = vrcp.pop %v593
  %v795 = vmul.f32 1.0, %v794
  %v796 = vrcp.pop %v594
  %v797 = vmul.f32 1.0, %v796
  %v798 = vrcp.pop %v595
  %v799 = vmul.f32 1.0, %v798
  %v800 = vrcp.pop %v596
  %v801 = vmul.f32 1.0, %v800
  %v802 = vrcp.pop %v597
  %v803 = vmul.f32 1.0, %v802
  %v804 = vrcp.pop %v598
  %v805 = vmul.f32 1.0, %v804
  %v806 = vrcp.pop %v599
  %v807 = vmul.f32 1.0, %v806
  %v808 = vrcp.pop %v600
  %v809 = vmul.f32 1.0, %v808
  %v810 = vrcp.pop %v601
  %v811 = vmul.f32 1.0, %v810
  %v812 = vrcp.pop %v602
  %v813 = vmul.f32 1.0, %v812
  %v814 = vrcp.pop %v603
  %v815 = vmul.f32 1.0, %v814
  %v816 = vrcp.pop %v604
  %v817 = vmul.f32 1.0, %v816
  %v818 = vrcp.pop %v605
  %v819 = vmul.f32 1.0, %v818
  %v820 = vrcp.pop %v606
  %v821 = vmul.f32 1.0, %v820
  %v822 = vrcp.pop %v607
  %v823 = vmul.f32 1.0, %v822
  %v824 = vrcp.pop %v608
  %v825 = vmul.f32 1.0, %v824
  %v826 = vrcp.pop %v609
  %v827 = vmul.f32 1.0, %v826
  %v828 = vrcp.pop %v610
  %v829 = vmul.f32 1.0, %v828
  %v830 = vrcp.pop %v611
  %v831 = vmul.f32 1.0, %v830
  %v832 = vrcp.pop %v612
  %v833 = vmul.f32 1.0, %v832
  %v834 = vrcp.pop %v613
  %v835 = vmul.f32 1.0, %v834
  %v836 = vrcp.pop %v614
  %v837 = vmul.f32 1.0, %v836
  %v838 = vrcp.pop %v615
  %v839 = vmul.f32 1.0, %v838
  %v840 = vrcp.pop %v616
  %v841 = vmul.f32 1.0, %v840
  %v842 = vrcp.pop %v617
  %v843 = vmul.f32 1.0, %v842
  %v844 = vrcp.pop %v618
  %v845 = vmul.f32 1.0, %v844
  %v846 = vrcp.pop %v619
  %v847 = vmul.f32 1.0, %v846
  %v848 = vrcp.pop %v620
  %v849 = vmul.f32 1.0, %v848
  %v850 = vrcp.pop %v621
  %v851 = vmul.f32 1.0, %v850
  %v852 = vrcp.pop %v622
  %v853 = vmul.f32 1.0, %v852
  %v854 = vrcp.pop %v623
  %v855 = vmul.f32 1.0, %v854
  %v856 = vrcp.pop %v624
  %v857 = vmul.f32 1.0, %v856
  %v858 = vrcp.pop %v625
  %v859 = vmul.f32 1.0, %v858
  %v860 = vrcp.pop %v626
  %v861 = vmul.f32 1.0, %v860
  %v862 = vrcp.pop %v627
  %v863 = vmul.f32 1.0, %v862
  %v864 = vrcp.pop %v628
  %v865 = vmul.f32 1.0, %v864
  %v866 = vrcp.pop %v629
  %v867 = vmul.f32 1.0, %v866
  %v868 = vrcp.pop %v630
  %v869 = vmul.f32 1.0, %v868
  %v870 = vrcp.pop %v631
  %v871 = vmul.f32 1.0, %v870
  %v872 = vrcp.pop %v632
  %v873 = vmul.f32 1.0, %v872
  %v874 = vrcp.pop %v633
  %v875 = vmul.f32 1.0, %v874
  %v876 = vrcp.pop %v634
  %v877 = vmul.f32 1.0, %v876
  %v878 = vrcp.pop %v635
  %v879 = vmul.f32 1.0, %v878
  %v880 = vrcp.pop %v636
  %v881 = vmul.f32 1.0, %v880
  %v882 = vrcp.pop %v637
  %v883 = vmul.f32 1.0, %v882
  %v884 = vrcp.pop %v638
  %v885 = vmul.f32 1.0, %v884
  %v886 = vrcp.pop %v639
  %v887 = vmul.f32 1.0, %v886
  %v888 = vrcp.pop %v640
  %v889 = vmul.f32 1.0, %v888
  %v890 = vrcp.pop %v641
  %v891 = vmul.f32 1.0, %v890
  %v892 = vrcp.pop %v642
  %v893 = vmul.f32 1.0, %v892
  %v894 = vrcp.pop %v643
  %v895 = vmul.f32 1.0, %v894
  %v896 = vrcp.pop %v644
  %v897 = vmul.f32 1.0, %v896
  %v898 = vrcp.pop %v645
  %v899 = vmul.f32 1.0, %v898
  %v900 = vrcp.pop %v646
  %v901 = vmul.f32 1.0, %v900
  %v902 = vrcp.pop %v647
  %v903 = vmul.f32 1.0, %v902
  %v904 = vmul.f32 %v8, %v649
  %v905 = vmul.f32 %v9, %v651
  %v906 = vmul.f32 %v10, %v653
  %v907 = vmul.f32 %v11, %v655
  %v908 = vmul.f32 %v12, %v657
  %v909 = vmul.f32 %v13, %v659
  %v910 = vmul.f32 %v14, %v661
  %v911 = vmul.f32 %v15, %v663
  %v912 = vmul.f32 %v16, %v665
  %v913 = vmul.f32 %v17, %v667
  %v914 = vmul.f32 %v18, %v669
  %v915 = vmul.f32 %v19, %v671
  %v916 = vmul.f32 %v20, %v673
  %v917 = vmul.f32 %v21, %v675
  %v918 = vmul.f32 %v22, %v677
  %v919 = vmul.f32 %v23, %v679
  %v920 = vmul.f32 %v24, %v681
  %v921 = vmul.f32 %v25, %v683
  %v922 = vmul.f32 %v26, %v685
  %v923 = vmul.f32 %v27, %v687
  %v924 = vmul.f32 %v28, %v689
  %v925 = vmul.f32 %v29, %v691
  %v926 = vmul.f32 %v30, %v693
  %v927 = vmul.f32 %v31, %v695
  %v928 = vmul.f32 %v32, %v697
  %v929 = vmul.f32 %v33, %v699
  %v930 = vmul.f32 %v34, %v701
  %v931 = vmul.f32 %v35, %v703
  %v932 = vmul.f32 %v36, %v705
  %v933 = vmul.f32 %v37, %v707
  %v934 = vmul.f32 %v38, %v709
  %v935 = vmul.f32 %v39, %v711
  %v936 = vmul.f32 %v40, %v713
  %v937 = vmul.f32 %v41, %v715
  %v938 = vmul.f32 %v42, %v717
  %v939 = vmul.f32 %v43, %v719
  %v940 = vmul.f32 %v44, %v721
  %v941 = vmul.f32 %v45, %v723
  %v942 = vmul.f32 %v46, %v725
  %v943 = vmul.f32 %v47, %v727
  %v944 = vmul.f32 %v48, %v729
  %v945 = vmul.f32 %v49, %v731
  %v946 = vmul.f32 %v50, %v733
  %v947 = vmul.f32 %v51, %v735
  %v948 = vmul.f32 %v52, %v737
  %v949 = vmul.f32 %v53, %v739
  %v950 = vmul.f32 %v54, %v741
  %v951 = vmul.f32 %v55, %v743
  %v952 = vmul.f32 %v56, %v745
  %v953 = vmul.f32 %v57, %v747
  %v954 = vmul.f32 %v58, %v749
  %v955 = vmul.f32 %v59, %v751
  %v956 = vmul.f32 %v60, %v753
  %v957 = vmul.f32 %v61, %v755
  %v958 = vmul.f32 %v62, %v757
  %v959 = vmul.f32 %v63, %v759
  %v960 = vmul.f32 %v64, %v761
  %v961 = vmul.f32 %v65, %v763
  %v962 = vmul.f32 %v66, %v765
  %v963 = vmul.f32 %v67, %v767
  %v964 = vmul.f32 %v68, %v769
  %v965 = vmul.f32 %v69, %v771
  %v966 = vmul.f32 %v70, %v773
  %v967 = vmul.f32 %v71, %v775
  %v968 = vmul.f32 %v72, %v777
  %v969 = vmul.f32 %v73, %v779
  %v970 = vmul.f32 %v74, %v781
  %v971 = vmul.f32 %v75, %v783
  %v972 = vmul.f32 %v76, %v785
  %v973 = vmul.f32 %v77, %v787
  %v974 = vmul.f32 %v78, %v789
  %v975 = vmul.f32 %v79, %v791
  %v976 = vmul.f32 %v80, %v793
  %v977 = vmul.f32 %v81, %v795
  %v978 = vmul.f32 %v82, %v797
  %v979 = vmul.f32 %v83, %v799
  %v980 = vmul.f32 %v84, %v801
  %v981 = vmul.f32 %v85, %v803
  %v982 = vmul.f32 %v86, %v805
  %v983 = vmul.f32 %v87, %v807
  %v984 = vmul.f32 %v88, %v809
  %v985 = vmul.f32 %v89, %v811
  %v986 = vmul.f32 %v90, %v813
  %v987 = vmul.f32 %v91, %v815
  %v988 = vmul.f32 %v92, %v817
  %v989 = vmul.f32 %v93, %v819
  %v990 = vmul.f32 %v94, %v821
  %v991 = vmul.f32 %v95, %v823
  %v992 = vmul.f32 %v96, %v825
  %v993 = vmul.f32 %v97, %v827
  %v994 = vmul.f32 %v98, %v829
  %v995 = vmul.f32 %v99, %v831
  %v996 = vmul.f32 %v100, %v833
  %v997 = vmul.f32 %v101, %v835
  %v998 = vmul.f32 %v102, %v837
  %v999 = vmul.f32 %v103, %v839
  %v1000 = vmul.f32 %v104, %v841
  %v1001 = vmul.f32 %v105, %v843
  %v1002 = vmul.f32 %v106, %v845
  %v1003 = vmul.f32 %v107, %v847
  %v1004 = vmul.f32 %v108, %v849
  %v1005 = vmul.f32 %v109, %v851
  %v1006 = vmul.f32 %v110, %v853
  %v1007 = vmul.f32 %v111, %v855
  %v1008 = vmul.f32 %v112, %v857
  %v1009 = vmul.f32 %v113, %v859
  %v1010 = vmul.f32 %v114, %v861
  %v1011 = vmul.f32 %v115, %v863
  %v1012 = vmul.f32 %v116, %v865
  %v1013 = vmul.f32 %v117, %v867
  %v1014 = vmul.f32 %v118, %v869
  %v1015 = vmul.f32 %v119, %v871
  %v1016 = vmul.f32 %v120, %v873
  %v1017 = vmul.f32 %v121, %v875
  %v1018 = vmul.f32 %v122, %v877
  %v1019 = vmul.f32 %v123, %v879
  %v1020 = vmul.f32 %v124, %v881
  %v1021 = vmul.f32 %v125, %v883
  %v1022 = vmul.f32 %v126, %v885
  %v1023 = vmul.f32 %v127, %v887
  %v1024 = vmul.f32 %v128, %v889
  %v1025 = vmul.f32 %v129, %v891
  %v1026 = vmul.f32 %v130, %v893
  %v1027 = vmul.f32 %v131, %v895
  %v1028 = vmul.f32 %v132, %v897
  %v1029 = vmul.f32 %v133, %v899
  %v1030 = vmul.f32 %v134, %v901
  %v1031 = vmul.f32 %v135, %v903
  %1033 = vset.pattern.permute.xlu0 8
  %1034 = vperm.xlu0 %1033, %v649
  %v1035 = vpop.permute.xlu0 %1034
  %1038 = vset.pattern.permute.xlu0 8
  %1039 = vperm.xlu0 %1038, %v651
  %v1040 = vpop.permute.xlu0 %1039
  %1043 = vset.pattern.permute.xlu0 8
  %1044 = vperm.xlu0 %1043, %v653
  %v1045 = vpop.permute.xlu0 %1044
  %1048 = vset.pattern.permute.xlu0 8
  %1049 = vperm.xlu0 %1048, %v655
  %v1050 = vpop.permute.xlu0 %1049
  %1053 = vset.pattern.permute.xlu0 8
  %1054 = vperm.xlu0 %1053, %v657
  %v1055 = vpop.permute.xlu0 %1054
  %1058 = vset.pattern.permute.xlu0 8
  %1059 = vperm.xlu0 %1058, %v659
  %v1060 = vpop.permute.xlu0 %1059
  %1063 = vset.pattern.permute.xlu0 8
  %1064 = vperm.xlu0 %1063, %v661
  %v1065 = vpop.permute.xlu0 %1064
  %1068 = vset.pattern.permute.xlu0 8
  %1069 = vperm.xlu0 %1068, %v663
  %v1070 = vpop.permute.xlu0 %1069
  %1073 = vset.pattern.permute.xlu0 8
  %1074 = vperm.xlu0 %1073, %v665
  %v1075 = vpop.permute.xlu0 %1074
  %1078 = vset.pattern.permute.xlu0 8
  %1079 = vperm.xlu0 %1078, %v667
  %v1080 = vpop.permute.xlu0 %1079
  %1083 = vset.pattern.permute.xlu0 8
  %1084 = vperm.xlu0 %1083, %v669
  %v1085 = vpop.permute.xlu0 %1084
  %1088 = vset.pattern.permute.xlu0 8
  %1089 = vperm.xlu0 %1088, %v671
  %v1090 = vpop.permute.xlu0 %1089
  %1093 = vset.pattern.permute.xlu0 8
  %1094 = vperm.xlu0 %1093, %v673
  %v1095 = vpop.permute.xlu0 %1094
  %1098 = vset.pattern.permute.xlu0 8
  %1099 = vperm.xlu0 %1098, %v675
  %v1100 = vpop.permute.xlu0 %1099
  %1103 = vset.pattern.permute.xlu0 8
  %1104 = vperm.xlu0 %1103, %v677
  %v1105 = vpop.permute.xlu0 %1104
  %1108 = vset.pattern.permute.xlu0 8
  %1109 = vperm.xlu0 %1108, %v679
  %v1110 = vpop.permute.xlu0 %1109
  %1113 = vset.pattern.permute.xlu0 8
  %1114 = vperm.xlu0 %1113, %v681
  %v1115 = vpop.permute.xlu0 %1114
  %1118 = vset.pattern.permute.xlu0 8
  %1119 = vperm.xlu0 %1118, %v683
  %v1120 = vpop.permute.xlu0 %1119
  %1123 = vset.pattern.permute.xlu0 8
  %1124 = vperm.xlu0 %1123, %v685
  %v1125 = vpop.permute.xlu0 %1124
  %1128 = vset.pattern.permute.xlu0 8
  %1129 = vperm.xlu0 %1128, %v687
  %v1130 = vpop.permute.xlu0 %1129
  %1133 = vset.pattern.permute.xlu0 8
  %1134 = vperm.xlu0 %1133, %v689
  %v1135 = vpop.permute.xlu0 %1134
  %1138 = vset.pattern.permute.xlu0 8
  %1139 = vperm.xlu0 %1138, %v691
  %v1140 = vpop.permute.xlu0 %1139
  %1143 = vset.pattern.permute.xlu0 8
  %1144 = vperm.xlu0 %1143, %v693
  %v1145 = vpop.permute.xlu0 %1144
  %1148 = vset.pattern.permute.xlu0 8
  %1149 = vperm.xlu0 %1148, %v695
  %v1150 = vpop.permute.xlu0 %1149
  %1153 = vset.pattern.permute.xlu0 8
  %1154 = vperm.xlu0 %1153, %v697
  %v1155 = vpop.permute.xlu0 %1154
  %1158 = vset.pattern.permute.xlu0 8
  %1159 = vperm.xlu0 %1158, %v699
  %v1160 = vpop.permute.xlu0 %1159
  %1163 = vset.pattern.permute.xlu0 8
  %1164 = vperm.xlu0 %1163, %v701
  %v1165 = vpop.permute.xlu0 %1164
  %1168 = vset.pattern.permute.xlu0 8
  %1169 = vperm.xlu0 %1168, %v703
  %v1170 = vpop.permute.xlu0 %1169
  %1173 = vset.pattern.permute.xlu0 8
  %1174 = vperm.xlu0 %1173, %v705
  %v1175 = vpop.permute.xlu0 %1174
  %1178 = vset.pattern.permute.xlu0 8
  %1179 = vperm.xlu0 %1178, %v707
  %v1180 = vpop.permute.xlu0 %1179
  %1183 = vset.pattern.permute.xlu0 8
  %1184 = vperm.xlu0 %1183, %v709
  %v1185 = vpop.permute.xlu0 %1184
  %1188 = vset.pattern.permute.xlu0 8
  %1189 = vperm.xlu0 %1188, %v711
  %v1190 = vpop.permute.xlu0 %1189
  %1193 = vset.pattern.permute.xlu0 8
  %1194 = vperm.xlu0 %1193, %v713
  %v1195 = vpop.permute.xlu0 %1194
  %1198 = vset.pattern.permute.xlu0 8
  %1199 = vperm.xlu0 %1198, %v715
  %v1200 = vpop.permute.xlu0 %1199
  %1203 = vset.pattern.permute.xlu0 8
  %1204 = vperm.xlu0 %1203, %v717
  %v1205 = vpop.permute.xlu0 %1204
  %1208 = vset.pattern.permute.xlu0 8
  %1209 = vperm.xlu0 %1208, %v719
  %v1210 = vpop.permute.xlu0 %1209
  %1213 = vset.pattern.permute.xlu0 8
  %1214 = vperm.xlu0 %1213, %v721
  %v1215 = vpop.permute.xlu0 %1214
  %1218 = vset.pattern.permute.xlu0 8
  %1219 = vperm.xlu0 %1218, %v723
  %v1220 = vpop.permute.xlu0 %1219
  %1223 = vset.pattern.permute.xlu0 8
  %1224 = vperm.xlu0 %1223, %v725
  %v1225 = vpop.permute.xlu0 %1224
  %1228 = vset.pattern.permute.xlu0 8
  %1229 = vperm.xlu0 %1228, %v727
  %v1230 = vpop.permute.xlu0 %1229
  %1233 = vset.pattern.permute.xlu0 8
  %1234 = vperm.xlu0 %1233, %v729
  %v1235 = vpop.permute.xlu0 %1234
  %1238 = vset.pattern.permute.xlu0 8
  %1239 = vperm.xlu0 %1238, %v731
  %v1240 = vpop.permute.xlu0 %1239
  %1243 = vset.pattern.permute.xlu0 8
  %1244 = vperm.xlu0 %1243, %v733
  %v1245 = vpop.permute.xlu0 %1244
  %1248 = vset.pattern.permute.xlu0 8
  %1249 = vperm.xlu0 %1248, %v735
  %v1250 = vpop.permute.xlu0 %1249
  %1253 = vset.pattern.permute.xlu0 8
  %1254 = vperm.xlu0 %1253, %v737
  %v1255 = vpop.permute.xlu0 %1254
  %1258 = vset.pattern.permute.xlu0 8
  %1259 = vperm.xlu0 %1258, %v739
  %v1260 = vpop.permute.xlu0 %1259
  %1263 = vset.pattern.permute.xlu0 8
  %1264 = vperm.xlu0 %1263, %v741
  %v1265 = vpop.permute.xlu0 %1264
  %1268 = vset.pattern.permute.xlu0 8
  %1269 = vperm.xlu0 %1268, %v743
  %v1270 = vpop.permute.xlu0 %1269
  %1273 = vset.pattern.permute.xlu0 8
  %1274 = vperm.xlu0 %1273, %v745
  %v1275 = vpop.permute.xlu0 %1274
  %1278 = vset.pattern.permute.xlu0 8
  %1279 = vperm.xlu0 %1278, %v747
  %v1280 = vpop.permute.xlu0 %1279
  %1283 = vset.pattern.permute.xlu0 8
  %1284 = vperm.xlu0 %1283, %v749
  %v1285 = vpop.permute.xlu0 %1284
  %1288 = vset.pattern.permute.xlu0 8
  %1289 = vperm.xlu0 %1288, %v751
  %v1290 = vpop.permute.xlu0 %1289
  %1293 = vset.pattern.permute.xlu0 8
  %1294 = vperm.xlu0 %1293, %v753
  %v1295 = vpop.permute.xlu0 %1294
  %1298 = vset.pattern.permute.xlu0 8
  %1299 = vperm.xlu0 %1298, %v755
  %v1300 = vpop.permute.xlu0 %1299
  %1303 = vset.pattern.permute.xlu0 8
  %1304 = vperm.xlu0 %1303, %v757
  %v1305 = vpop.permute.xlu0 %1304
  %1308 = vset.pattern.permute.xlu0 8
  %1309 = vperm.xlu0 %1308, %v759
  %v1310 = vpop.permute.xlu0 %1309
  %1313 = vset.pattern.permute.xlu0 8
  %1314 = vperm.xlu0 %1313, %v761
  %v1315 = vpop.permute.xlu0 %1314
  %1318 = vset.pattern.permute.xlu0 8
  %1319 = vperm.xlu0 %1318, %v763
  %v1320 = vpop.permute.xlu0 %1319
  %1323 = vset.pattern.permute.xlu0 8
  %1324 = vperm.xlu0 %1323, %v765
  %v1325 = vpop.permute.xlu0 %1324
  %1328 = vset.pattern.permute.xlu0 8
  %1329 = vperm.xlu0 %1328, %v767
  %v1330 = vpop.permute.xlu0 %1329
  %1333 = vset.pattern.permute.xlu0 8
  %1334 = vperm.xlu0 %1333, %v769
  %v1335 = vpop.permute.xlu0 %1334
  %1338 = vset.pattern.permute.xlu0 8
  %1339 = vperm.xlu0 %1338, %v771
  %v1340 = vpop.permute.xlu0 %1339
  %1343 = vset.pattern.permute.xlu0 8
  %1344 = vperm.xlu0 %1343, %v773
  %v1345 = vpop.permute.xlu0 %1344
  %1348 = vset.pattern.permute.xlu0 8
  %1349 = vperm.xlu0 %1348, %v775
  %v1350 = vpop.permute.xlu0 %1349
  %1353 = vset.pattern.permute.xlu0 8
  %1354 = vperm.xlu0 %1353, %v777
  %v1355 = vpop.permute.xlu0 %1354
  %1358 = vset.pattern.permute.xlu0 8
  %1359 = vperm.xlu0 %1358, %v779
  %v1360 = vpop.permute.xlu0 %1359
  %1363 = vset.pattern.permute.xlu0 8
  %1364 = vperm.xlu0 %1363, %v781
  %v1365 = vpop.permute.xlu0 %1364
  %1368 = vset.pattern.permute.xlu0 8
  %1369 = vperm.xlu0 %1368, %v783
  %v1370 = vpop.permute.xlu0 %1369
  %1373 = vset.pattern.permute.xlu0 8
  %1374 = vperm.xlu0 %1373, %v785
  %v1375 = vpop.permute.xlu0 %1374
  %1378 = vset.pattern.permute.xlu0 8
  %1379 = vperm.xlu0 %1378, %v787
  %v1380 = vpop.permute.xlu0 %1379
  %1383 = vset.pattern.permute.xlu0 8
  %1384 = vperm.xlu0 %1383, %v789
  %v1385 = vpop.permute.xlu0 %1384
  %1388 = vset.pattern.permute.xlu0 8
  %1389 = vperm.xlu0 %1388, %v791
  %v1390 = vpop.permute.xlu0 %1389
  %1393 = vset.pattern.permute.xlu0 8
  %1394 = vperm.xlu0 %1393, %v793
  %v1395 = vpop.permute.xlu0 %1394
  %1398 = vset.pattern.permute.xlu0 8
  %1399 = vperm.xlu0 %1398, %v795
  %v1400 = vpop.permute.xlu0 %1399
  %1403 = vset.pattern.permute.xlu0 8
  %1404 = vperm.xlu0 %1403, %v797
  %v1405 = vpop.permute.xlu0 %1404
  %1408 = vset.pattern.permute.xlu0 8
  %1409 = vperm.xlu0 %1408, %v799
  %v1410 = vpop.permute.xlu0 %1409
  %1413 = vset.pattern.permute.xlu0 8
  %1414 = vperm.xlu0 %1413, %v801
  %v1415 = vpop.permute.xlu0 %1414
  %1418 = vset.pattern.permute.xlu0 8
  %1419 = vperm.xlu0 %1418, %v803
  %v1420 = vpop.permute.xlu0 %1419
  %1423 = vset.pattern.permute.xlu0 8
  %1424 = vperm.xlu0 %1423, %v805
  %v1425 = vpop.permute.xlu0 %1424
  %1428 = vset.pattern.permute.xlu0 8
  %1429 = vperm.xlu0 %1428, %v807
  %v1430 = vpop.permute.xlu0 %1429
  %1433 = vset.pattern.permute.xlu0 8
  %1434 = vperm.xlu0 %1433, %v809
  %v1435 = vpop.permute.xlu0 %1434
  %1438 = vset.pattern.permute.xlu0 8
  %1439 = vperm.xlu0 %1438, %v811
  %v1440 = vpop.permute.xlu0 %1439
  %1443 = vset.pattern.permute.xlu0 8
  %1444 = vperm.xlu0 %1443, %v813
  %v1445 = vpop.permute.xlu0 %1444
  %1448 = vset.pattern.permute.xlu0 8
  %1449 = vperm.xlu0 %1448, %v815
  %v1450 = vpop.permute.xlu0 %1449
  %1453 = vset.pattern.permute.xlu0 8
  %1454 = vperm.xlu0 %1453, %v817
  %v1455 = vpop.permute.xlu0 %1454
  %1458 = vset.pattern.permute.xlu0 8
  %1459 = vperm.xlu0 %1458, %v819
  %v1460 = vpop.permute.xlu0 %1459
  %1463 = vset.pattern.permute.xlu0 8
  %1464 = vperm.xlu0 %1463, %v821
  %v1465 = vpop.permute.xlu0 %1464
  %1468 = vset.pattern.permute.xlu0 8
  %1469 = vperm.xlu0 %1468, %v823
  %v1470 = vpop.permute.xlu0 %1469
  %1473 = vset.pattern.permute.xlu0 8
  %1474 = vperm.xlu0 %1473, %v825
  %v1475 = vpop.permute.xlu0 %1474
  %1478 = vset.pattern.permute.xlu0 8
  %1479 = vperm.xlu0 %1478, %v827
  %v1480 = vpop.permute.xlu0 %1479
  %1483 = vset.pattern.permute.xlu0 8
  %1484 = vperm.xlu0 %1483, %v829
  %v1485 = vpop.permute.xlu0 %1484
  %1488 = vset.pattern.permute.xlu0 8
  %1489 = vperm.xlu0 %1488, %v831
  %v1490 = vpop.permute.xlu0 %1489
  %1493 = vset.pattern.permute.xlu0 8
  %1494 = vperm.xlu0 %1493, %v833
  %v1495 = vpop.permute.xlu0 %1494
  %1498 = vset.pattern.permute.xlu0 8
  %1499 = vperm.xlu0 %1498, %v835
  %v1500 = vpop.permute.xlu0 %1499
  %1503 = vset.pattern.permute.xlu0 8
  %1504 = vperm.xlu0 %1503, %v837
  %v1505 = vpop.permute.xlu0 %1504
  %1508 = vset.pattern.permute.xlu0 8
  %1509 = vperm.xlu0 %1508, %v839
  %v1510 = vpop.permute.xlu0 %1509
  %1513 = vset.pattern.permute.xlu0 8
  %1514 = vperm.xlu0 %1513, %v841
  %v1515 = vpop.permute.xlu0 %1514
  %1518 = vset.pattern.permute.xlu0 8
  %1519 = vperm.xlu0 %1518, %v843
  %v1520 = vpop.permute.xlu0 %1519
  %1523 = vset.pattern.permute.xlu0 8
  %1524 = vperm.xlu0 %1523, %v845
  %v1525 = vpop.permute.xlu0 %1524
  %1528 = vset.pattern.permute.xlu0 8
  %1529 = vperm.xlu0 %1528, %v847
  %v1530 = vpop.permute.xlu0 %1529
  %1533 = vset.pattern.permute.xlu0 8
  %1534 = vperm.xlu0 %1533, %v849
  %v1535 = vpop.permute.xlu0 %1534
  %1538 = vset.pattern.permute.xlu0 8
  %1539 = vperm.xlu0 %1538, %v851
  %v1540 = vpop.permute.xlu0 %1539
  %1543 = vset.pattern.permute.xlu0 8
  %1544 = vperm.xlu0 %1543, %v853
  %v1545 = vpop.permute.xlu0 %1544
  %1548 = vset.pattern.permute.xlu0 8
  %1549 = vperm.xlu0 %1548, %v855
  %v1550 = vpop.permute.xlu0 %1549
  %1553 = vset.pattern.permute.xlu0 8
  %1554 = vperm.xlu0 %1553, %v857
  %v1555 = vpop.permute.xlu0 %1554
  %1558 = vset.pattern.permute.xlu0 8
  %1559 = vperm.xlu0 %1558, %v859
  %v1560 = vpop.permute.xlu0 %1559
  %1563 = vset.pattern.permute.xlu0 8
  %1564 = vperm.xlu0 %1563, %v861
  %v1565 = vpop.permute.xlu0 %1564
  %1568 = vset.pattern.permute.xlu0 8
  %1569 = vperm.xlu0 %1568, %v863
  %v1570 = vpop.permute.xlu0 %1569
  %1573 = vset.pattern.permute.xlu0 8
  %1574 = vperm.xlu0 %1573, %v865
  %v1575 = vpop.permute.xlu0 %1574
  %1578 = vset.pattern.permute.xlu0 8
  %1579 = vperm.xlu0 %1578, %v867
  %v1580 = vpop.permute.xlu0 %1579
  %1583 = vset.pattern.permute.xlu0 8
  %1584 = vperm.xlu0 %1583, %v869
  %v1585 = vpop.permute.xlu0 %1584
  %1588 = vset.pattern.permute.xlu0 8
  %1589 = vperm.xlu0 %1588, %v871
  %v1590 = vpop.permute.xlu0 %1589
  %1593 = vset.pattern.permute.xlu0 8
  %1594 = vperm.xlu0 %1593, %v873
  %v1595 = vpop.permute.xlu0 %1594
  %1598 = vset.pattern.permute.xlu0 8
  %1599 = vperm.xlu0 %1598, %v875
  %v1600 = vpop.permute.xlu0 %1599
  %1603 = vset.pattern.permute.xlu0 8
  %1604 = vperm.xlu0 %1603, %v877
  %v1605 = vpop.permute.xlu0 %1604
  %1608 = vset.pattern.permute.xlu0 8
  %1609 = vperm.xlu0 %1608, %v879
  %v1610 = vpop.permute.xlu0 %1609
  %1613 = vset.pattern.permute.xlu0 8
  %1614 = vperm.xlu0 %1613, %v881
  %v1615 = vpop.permute.xlu0 %1614
  %1618 = vset.pattern.permute.xlu0 8
  %1619 = vperm.xlu0 %1618, %v883
  %v1620 = vpop.permute.xlu0 %1619
  %1623 = vset.pattern.permute.xlu0 8
  %1624 = vperm.xlu0 %1623, %v885
  %v1625 = vpop.permute.xlu0 %1624
  %1628 = vset.pattern.permute.xlu0 8
  %1629 = vperm.xlu0 %1628, %v887
  %v1630 = vpop.permute.xlu0 %1629
  %1633 = vset.pattern.permute.xlu0 8
  %1634 = vperm.xlu0 %1633, %v889
  %v1635 = vpop.permute.xlu0 %1634
  %1638 = vset.pattern.permute.xlu0 8
  %1639 = vperm.xlu0 %1638, %v891
  %v1640 = vpop.permute.xlu0 %1639
  %1643 = vset.pattern.permute.xlu0 8
  %1644 = vperm.xlu0 %1643, %v893
  %v1645 = vpop.permute.xlu0 %1644
  %1648 = vset.pattern.permute.xlu0 8
  %1649 = vperm.xlu0 %1648, %v895
  %v1650 = vpop.permute.xlu0 %1649
  %1653 = vset.pattern.permute.xlu0 8
  %1654 = vperm.xlu0 %1653, %v897
  %v1655 = vpop.permute.xlu0 %1654
  %1658 = vset.pattern.permute.xlu0 8
  %1659 = vperm.xlu0 %1658, %v899
  %v1660 = vpop.permute.xlu0 %1659
  %1663 = vset.pattern.permute.xlu0 8
  %1664 = vperm.xlu0 %1663, %v901
  %v1665 = vpop.permute.xlu0 %1664
  %1668 = vset.pattern.permute.xlu0 8
  %1669 = vperm.xlu0 %1668, %v903
  %v1670 = vpop.permute.xlu0 %1669
  %1672 = vset.pattern.permute.xlu0 9
  %1673 = vperm.xlu0 %1672, %v649
  %v1674 = vpop.permute.xlu0 %1673
  %1676 = vset.pattern.permute.xlu0 9
  %1677 = vperm.xlu0 %1676, %v651
  %v1678 = vpop.permute.xlu0 %1677
  %1680 = vset.pattern.permute.xlu0 9
  %1681 = vperm.xlu0 %1680, %v653
  %v1682 = vpop.permute.xlu0 %1681
  %1684 = vset.pattern.permute.xlu0 9
  %1685 = vperm.xlu0 %1684, %v655
  %v1686 = vpop.permute.xlu0 %1685
  %1688 = vset.pattern.permute.xlu0 9
  %1689 = vperm.xlu0 %1688, %v657
  %v1690 = vpop.permute.xlu0 %1689
  %1692 = vset.pattern.permute.xlu0 9
  %1693 = vperm.xlu0 %1692, %v659
  %v1694 = vpop.permute.xlu0 %1693
  %1696 = vset.pattern.permute.xlu0 9
  %1697 = vperm.xlu0 %1696, %v661
  %v1698 = vpop.permute.xlu0 %1697
  %1700 = vset.pattern.permute.xlu0 9
  %1701 = vperm.xlu0 %1700, %v663
  %v1702 = vpop.permute.xlu0 %1701
  %1704 = vset.pattern.permute.xlu0 9
  %1705 = vperm.xlu0 %1704, %v665
  %v1706 = vpop.permute.xlu0 %1705
  %1708 = vset.pattern.permute.xlu0 9
  %1709 = vperm.xlu0 %1708, %v667
  %v1710 = vpop.permute.xlu0 %1709
  %1712 = vset.pattern.permute.xlu0 9
  %1713 = vperm.xlu0 %1712, %v669
  %v1714 = vpop.permute.xlu0 %1713
  %1716 = vset.pattern.permute.xlu0 9
  %1717 = vperm.xlu0 %1716, %v671
  %v1718 = vpop.permute.xlu0 %1717
  %1720 = vset.pattern.permute.xlu0 9
  %1721 = vperm.xlu0 %1720, %v673
  %v1722 = vpop.permute.xlu0 %1721
  %1724 = vset.pattern.permute.xlu0 9
  %1725 = vperm.xlu0 %1724, %v675
  %v1726 = vpop.permute.xlu0 %1725
  %1728 = vset.pattern.permute.xlu0 9
  %1729 = vperm.xlu0 %1728, %v677
  %v1730 = vpop.permute.xlu0 %1729
  %1732 = vset.pattern.permute.xlu0 9
  %1733 = vperm.xlu0 %1732, %v679
  %v1734 = vpop.permute.xlu0 %1733
  %1736 = vset.pattern.permute.xlu0 9
  %1737 = vperm.xlu0 %1736, %v681
  %v1738 = vpop.permute.xlu0 %1737
  %1740 = vset.pattern.permute.xlu0 9
  %1741 = vperm.xlu0 %1740, %v683
  %v1742 = vpop.permute.xlu0 %1741
  %1744 = vset.pattern.permute.xlu0 9
  %1745 = vperm.xlu0 %1744, %v685
  %v1746 = vpop.permute.xlu0 %1745
  %1748 = vset.pattern.permute.xlu0 9
  %1749 = vperm.xlu0 %1748, %v687
  %v1750 = vpop.permute.xlu0 %1749
  %1752 = vset.pattern.permute.xlu0 9
  %1753 = vperm.xlu0 %1752, %v689
  %v1754 = vpop.permute.xlu0 %1753
  %1756 = vset.pattern.permute.xlu0 9
  %1757 = vperm.xlu0 %1756, %v691
  %v1758 = vpop.permute.xlu0 %1757
  %1760 = vset.pattern.permute.xlu0 9
  %1761 = vperm.xlu0 %1760, %v693
  %v1762 = vpop.permute.xlu0 %1761
  %1764 = vset.pattern.permute.xlu0 9
  %1765 = vperm.xlu0 %1764, %v695
  %v1766 = vpop.permute.xlu0 %1765
  %1768 = vset.pattern.permute.xlu0 9
  %1769 = vperm.xlu0 %1768, %v697
  %v1770 = vpop.permute.xlu0 %1769
  %1772 = vset.pattern.permute.xlu0 9
  %1773 = vperm.xlu0 %1772, %v699
  %v1774 = vpop.permute.xlu0 %1773
  %1776 = vset.pattern.permute.xlu0 9
  %1777 = vperm.xlu0 %1776, %v701
  %v1778 = vpop.permute.xlu0 %1777
  %1780 = vset.pattern.permute.xlu0 9
  %1781 = vperm.xlu0 %1780, %v703
  %v1782 = vpop.permute.xlu0 %1781
  %1784 = vset.pattern.permute.xlu0 9
  %1785 = vperm.xlu0 %1784, %v705
  %v1786 = vpop.permute.xlu0 %1785
  %1788 = vset.pattern.permute.xlu0 9
  %1789 = vperm.xlu0 %1788, %v707
  %v1790 = vpop.permute.xlu0 %1789
  %1792 = vset.pattern.permute.xlu0 9
  %1793 = vperm.xlu0 %1792, %v709
  %v1794 = vpop.permute.xlu0 %1793
  %1796 = vset.pattern.permute.xlu0 9
  %1797 = vperm.xlu0 %1796, %v711
  %v1798 = vpop.permute.xlu0 %1797
  %1800 = vset.pattern.permute.xlu0 9
  %1801 = vperm.xlu0 %1800, %v713
  %v1802 = vpop.permute.xlu0 %1801
  %1804 = vset.pattern.permute.xlu0 9
  %1805 = vperm.xlu0 %1804, %v715
  %v1806 = vpop.permute.xlu0 %1805
  %1808 = vset.pattern.permute.xlu0 9
  %1809 = vperm.xlu0 %1808, %v717
  %v1810 = vpop.permute.xlu0 %1809
  %1812 = vset.pattern.permute.xlu0 9
  %1813 = vperm.xlu0 %1812, %v719
  %v1814 = vpop.permute.xlu0 %1813
  %1816 = vset.pattern.permute.xlu0 9
  %1817 = vperm.xlu0 %1816, %v721
  %v1818 = vpop.permute.xlu0 %1817
  %1820 = vset.pattern.permute.xlu0 9
  %1821 = vperm.xlu0 %1820, %v723
  %v1822 = vpop.permute.xlu0 %1821
  %1824 = vset.pattern.permute.xlu0 9
  %1825 = vperm.xlu0 %1824, %v725
  %v1826 = vpop.permute.xlu0 %1825
  %1828 = vset.pattern.permute.xlu0 9
  %1829 = vperm.xlu0 %1828, %v727
  %v1830 = vpop.permute.xlu0 %1829
  %1832 = vset.pattern.permute.xlu0 9
  %1833 = vperm.xlu0 %1832, %v729
  %v1834 = vpop.permute.xlu0 %1833
  %1836 = vset.pattern.permute.xlu0 9
  %1837 = vperm.xlu0 %1836, %v731
  %v1838 = vpop.permute.xlu0 %1837
  %1840 = vset.pattern.permute.xlu0 9
  %1841 = vperm.xlu0 %1840, %v733
  %v1842 = vpop.permute.xlu0 %1841
  %1844 = vset.pattern.permute.xlu0 9
  %1845 = vperm.xlu0 %1844, %v735
  %v1846 = vpop.permute.xlu0 %1845
  %1848 = vset.pattern.permute.xlu0 9
  %1849 = vperm.xlu0 %1848, %v737
  %v1850 = vpop.permute.xlu0 %1849
  %1852 = vset.pattern.permute.xlu0 9
  %1853 = vperm.xlu0 %1852, %v739
  %v1854 = vpop.permute.xlu0 %1853
  %1856 = vset.pattern.permute.xlu0 9
  %1857 = vperm.xlu0 %1856, %v741
  %v1858 = vpop.permute.xlu0 %1857
  %1860 = vset.pattern.permute.xlu0 9
  %1861 = vperm.xlu0 %1860, %v743
  %v1862 = vpop.permute.xlu0 %1861
  %1864 = vset.pattern.permute.xlu0 9
  %1865 = vperm.xlu0 %1864, %v745
  %v1866 = vpop.permute.xlu0 %1865
  %1868 = vset.pattern.permute.xlu0 9
  %1869 = vperm.xlu0 %1868, %v747
  %v1870 = vpop.permute.xlu0 %1869
  %1872 = vset.pattern.permute.xlu0 9
  %1873 = vperm.xlu0 %1872, %v749
  %v1874 = vpop.permute.xlu0 %1873
  %1876 = vset.pattern.permute.xlu0 9
  %1877 = vperm.xlu0 %1876, %v751
  %v1878 = vpop.permute.xlu0 %1877
  %1880 = vset.pattern.permute.xlu0 9
  %1881 = vperm.xlu0 %1880, %v753
  %v1882 = vpop.permute.xlu0 %1881
  %1884 = vset.pattern.permute.xlu0 9
  %1885 = vperm.xlu0 %1884, %v755
  %v1886 = vpop.permute.xlu0 %1885
  %1888 = vset.pattern.permute.xlu0 9
  %1889 = vperm.xlu0 %1888, %v757
  %v1890 = vpop.permute.xlu0 %1889
  %1892 = vset.pattern.permute.xlu0 9
  %1893 = vperm.xlu0 %1892, %v759
  %v1894 = vpop.permute.xlu0 %1893
  %1896 = vset.pattern.permute.xlu0 9
  %1897 = vperm.xlu0 %1896, %v761
  %v1898 = vpop.permute.xlu0 %1897
  %1900 = vset.pattern.permute.xlu0 9
  %1901 = vperm.xlu0 %1900, %v763
  %v1902 = vpop.permute.xlu0 %1901
  %1904 = vset.pattern.permute.xlu0 9
  %1905 = vperm.xlu0 %1904, %v765
  %v1906 = vpop.permute.xlu0 %1905
  %1908 = vset.pattern.permute.xlu0 9
  %1909 = vperm.xlu0 %1908, %v767
  %v1910 = vpop.permute.xlu0 %1909
  %1912 = vset.pattern.permute.xlu0 9
  %1913 = vperm.xlu0 %1912, %v769
  %v1914 = vpop.permute.xlu0 %1913
  %1916 = vset.pattern.permute.xlu0 9
  %1917 = vperm.xlu0 %1916, %v771
  %v1918 = vpop.permute.xlu0 %1917
  %1920 = vset.pattern.permute.xlu0 9
  %1921 = vperm.xlu0 %1920, %v773
  %v1922 = vpop.permute.xlu0 %1921
  %1924 = vset.pattern.permute.xlu0 9
  %1925 = vperm.xlu0 %1924, %v775
  %v1926 = vpop.permute.xlu0 %1925
  %1928 = vset.pattern.permute.xlu0 9
  %1929 = vperm.xlu0 %1928, %v777
  %v1930 = vpop.permute.xlu0 %1929
  %1932 = vset.pattern.permute.xlu0 9
  %1933 = vperm.xlu0 %1932, %v779
  %v1934 = vpop.permute.xlu0 %1933
  %1936 = vset.pattern.permute.xlu0 9
  %1937 = vperm.xlu0 %1936, %v781
  %v1938 = vpop.permute.xlu0 %1937
  %1940 = vset.pattern.permute.xlu0 9
  %1941 = vperm.xlu0 %1940, %v783
  %v1942 = vpop.permute.xlu0 %1941
  %1944 = vset.pattern.permute.xlu0 9
  %1945 = vperm.xlu0 %1944, %v785
  %v1946 = vpop.permute.xlu0 %1945
  %1948 = vset.pattern.permute.xlu0 9
  %1949 = vperm.xlu0 %1948, %v787
  %v1950 = vpop.permute.xlu0 %1949
  %1952 = vset.pattern.permute.xlu0 9
  %1953 = vperm.xlu0 %1952, %v789
  %v1954 = vpop.permute.xlu0 %1953
  %1956 = vset.pattern.permute.xlu0 9
  %1957 = vperm.xlu0 %1956, %v791
  %v1958 = vpop.permute.xlu0 %1957
  %1960 = vset.pattern.permute.xlu0 9
  %1961 = vperm.xlu0 %1960, %v793
  %v1962 = vpop.permute.xlu0 %1961
  %1964 = vset.pattern.permute.xlu0 9
  %1965 = vperm.xlu0 %1964, %v795
  %v1966 = vpop.permute.xlu0 %1965
  %1968 = vset.pattern.permute.xlu0 9
  %1969 = vperm.xlu0 %1968, %v797
  %v1970 = vpop.permute.xlu0 %1969
  %1972 = vset.pattern.permute.xlu0 9
  %1973 = vperm.xlu0 %1972, %v799
  %v1974 = vpop.permute.xlu0 %1973
  %1976 = vset.pattern.permute.xlu0 9
  %1977 = vperm.xlu0 %1976, %v801
  %v1978 = vpop.permute.xlu0 %1977
  %1980 = vset.pattern.permute.xlu0 9
  %1981 = vperm.xlu0 %1980, %v803
  %v1982 = vpop.permute.xlu0 %1981
  %1984 = vset.pattern.permute.xlu0 9
  %1985 = vperm.xlu0 %1984, %v805
  %v1986 = vpop.permute.xlu0 %1985
  %1988 = vset.pattern.permute.xlu0 9
  %1989 = vperm.xlu0 %1988, %v807
  %v1990 = vpop.permute.xlu0 %1989
  %1992 = vset.pattern.permute.xlu0 9
  %1993 = vperm.xlu0 %1992, %v809
  %v1994 = vpop.permute.xlu0 %1993
  %1996 = vset.pattern.permute.xlu0 9
  %1997 = vperm.xlu0 %1996, %v811
  %v1998 = vpop.permute.xlu0 %1997
  %2000 = vset.pattern.permute.xlu0 9
  %2001 = vperm.xlu0 %2000, %v813
  %v2002 = vpop.permute.xlu0 %2001
  %2004 = vset.pattern.permute.xlu0 9
  %2005 = vperm.xlu0 %2004, %v815
  %v2006 = vpop.permute.xlu0 %2005
  %2008 = vset.pattern.permute.xlu0 9
  %2009 = vperm.xlu0 %2008, %v817
  %v2010 = vpop.permute.xlu0 %2009
  %2012 = vset.pattern.permute.xlu0 9
  %2013 = vperm.xlu0 %2012, %v819
  %v2014 = vpop.permute.xlu0 %2013
  %2016 = vset.pattern.permute.xlu0 9
  %2017 = vperm.xlu0 %2016, %v821
  %v2018 = vpop.permute.xlu0 %2017
  %2020 = vset.pattern.permute.xlu0 9
  %2021 = vperm.xlu0 %2020, %v823
  %v2022 = vpop.permute.xlu0 %2021
  %2024 = vset.pattern.permute.xlu0 9
  %2025 = vperm.xlu0 %2024, %v825
  %v2026 = vpop.permute.xlu0 %2025
  %2028 = vset.pattern.permute.xlu0 9
  %2029 = vperm.xlu0 %2028, %v827
  %v2030 = vpop.permute.xlu0 %2029
  %2032 = vset.pattern.permute.xlu0 9
  %2033 = vperm.xlu0 %2032, %v829
  %v2034 = vpop.permute.xlu0 %2033
  %2036 = vset.pattern.permute.xlu0 9
  %2037 = vperm.xlu0 %2036, %v831
  %v2038 = vpop.permute.xlu0 %2037
  %2040 = vset.pattern.permute.xlu0 9
  %2041 = vperm.xlu0 %2040, %v833
  %v2042 = vpop.permute.xlu0 %2041
  %2044 = vset.pattern.permute.xlu0 9
  %2045 = vperm.xlu0 %2044, %v835
  %v2046 = vpop.permute.xlu0 %2045
  %2048 = vset.pattern.permute.xlu0 9
  %2049 = vperm.xlu0 %2048, %v837
  %v2050 = vpop.permute.xlu0 %2049
  %2052 = vset.pattern.permute.xlu0 9
  %2053 = vperm.xlu0 %2052, %v839
  %v2054 = vpop.permute.xlu0 %2053
  %2056 = vset.pattern.permute.xlu0 9
  %2057 = vperm.xlu0 %2056, %v841
  %v2058 = vpop.permute.xlu0 %2057
  %2060 = vset.pattern.permute.xlu0 9
  %2061 = vperm.xlu0 %2060, %v843
  %v2062 = vpop.permute.xlu0 %2061
  %2064 = vset.pattern.permute.xlu0 9
  %2065 = vperm.xlu0 %2064, %v845
  %v2066 = vpop.permute.xlu0 %2065
  %2068 = vset.pattern.permute.xlu0 9
  %2069 = vperm.xlu0 %2068, %v847
  %v2070 = vpop.permute.xlu0 %2069
  %2072 = vset.pattern.permute.xlu0 9
  %2073 = vperm.xlu0 %2072, %v849
  %v2074 = vpop.permute.xlu0 %2073
  %2076 = vset.pattern.permute.xlu0 9
  %2077 = vperm.xlu0 %2076, %v851
  %v2078 = vpop.permute.xlu0 %2077
  %2080 = vset.pattern.permute.xlu0 9
  %2081 = vperm.xlu0 %2080, %v853
  %v2082 = vpop.permute.xlu0 %2081
  %2084 = vset.pattern.permute.xlu0 9
  %2085 = vperm.xlu0 %2084, %v855
  %v2086 = vpop.permute.xlu0 %2085
  %2088 = vset.pattern.permute.xlu0 9
  %2089 = vperm.xlu0 %2088, %v857
  %v2090 = vpop.permute.xlu0 %2089
  %2092 = vset.pattern.permute.xlu0 9
  %2093 = vperm.xlu0 %2092, %v859
  %v2094 = vpop.permute.xlu0 %2093
  %2096 = vset.pattern.permute.xlu0 9
  %2097 = vperm.xlu0 %2096, %v861
  %v2098 = vpop.permute.xlu0 %2097
  %2100 = vset.pattern.permute.xlu0 9
  %2101 = vperm.xlu0 %2100, %v863
  %v2102 = vpop.permute.xlu0 %2101
  %2104 = vset.pattern.permute.xlu0 9
  %2105 = vperm.xlu0 %2104, %v865
  %v2106 = vpop.permute.xlu0 %2105
  %2108 = vset.pattern.permute.xlu0 9
  %2109 = vperm.xlu0 %2108, %v867
  %v2110 = vpop.permute.xlu0 %2109
  %2112 = vset.pattern.permute.xlu0 9
  %2113 = vperm.xlu0 %2112, %v869
  %v2114 = vpop.permute.xlu0 %2113
  %2116 = vset.pattern.permute.xlu0 9
  %2117 = vperm.xlu0 %2116, %v871
  %v2118 = vpop.permute.xlu0 %2117
  %2120 = vset.pattern.permute.xlu0 9
  %2121 = vperm.xlu0 %2120, %v873
  %v2122 = vpop.permute.xlu0 %2121
  %2124 = vset.pattern.permute.xlu0 9
  %2125 = vperm.xlu0 %2124, %v875
  %v2126 = vpop.permute.xlu0 %2125
  %2128 = vset.pattern.permute.xlu0 9
  %2129 = vperm.xlu0 %2128, %v877
  %v2130 = vpop.permute.xlu0 %2129
  %2132 = vset.pattern.permute.xlu0 9
  %2133 = vperm.xlu0 %2132, %v879
  %v2134 = vpop.permute.xlu0 %2133
  %2136 = vset.pattern.permute.xlu0 9
  %2137 = vperm.xlu0 %2136, %v881
  %v2138 = vpop.permute.xlu0 %2137
  %2140 = vset.pattern.permute.xlu0 9
  %2141 = vperm.xlu0 %2140, %v883
  %v2142 = vpop.permute.xlu0 %2141
  %2144 = vset.pattern.permute.xlu0 9
  %2145 = vperm.xlu0 %2144, %v885
  %v2146 = vpop.permute.xlu0 %2145
  %2148 = vset.pattern.permute.xlu0 9
  %2149 = vperm.xlu0 %2148, %v887
  %v2150 = vpop.permute.xlu0 %2149
  %2152 = vset.pattern.permute.xlu0 9
  %2153 = vperm.xlu0 %2152, %v889
  %v2154 = vpop.permute.xlu0 %2153
  %2156 = vset.pattern.permute.xlu0 9
  %2157 = vperm.xlu0 %2156, %v891
  %v2158 = vpop.permute.xlu0 %2157
  %2160 = vset.pattern.permute.xlu0 9
  %2161 = vperm.xlu0 %2160, %v893
  %v2162 = vpop.permute.xlu0 %2161
  %2164 = vset.pattern.permute.xlu0 9
  %2165 = vperm.xlu0 %2164, %v895
  %v2166 = vpop.permute.xlu0 %2165
  %2168 = vset.pattern.permute.xlu0 9
  %2169 = vperm.xlu0 %2168, %v897
  %v2170 = vpop.permute.xlu0 %2169
  %2172 = vset.pattern.permute.xlu0 9
  %2173 = vperm.xlu0 %2172, %v899
  %v2174 = vpop.permute.xlu0 %2173
  %2176 = vset.pattern.permute.xlu0 9
  %2177 = vperm.xlu0 %2176, %v901
  %v2178 = vpop.permute.xlu0 %2177
  %2180 = vset.pattern.permute.xlu0 9
  %2181 = vperm.xlu0 %2180, %v903
  %v2182 = vpop.permute.xlu0 %2181
  %2184 = vset.pattern.permute.xlu0 10
  %2185 = vperm.xlu0 %2184, %v649
  %v2186 = vpop.permute.xlu0 %2185
  %2188 = vset.pattern.permute.xlu0 10
  %2189 = vperm.xlu0 %2188, %v651
  %v2190 = vpop.permute.xlu0 %2189
  %2192 = vset.pattern.permute.xlu0 10
  %2193 = vperm.xlu0 %2192, %v653
  %v2194 = vpop.permute.xlu0 %2193
  %2196 = vset.pattern.permute.xlu0 10
  %2197 = vperm.xlu0 %2196, %v655
  %v2198 = vpop.permute.xlu0 %2197
  %2200 = vset.pattern.permute.xlu0 10
  %2201 = vperm.xlu0 %2200, %v657
  %v2202 = vpop.permute.xlu0 %2201
  %2204 = vset.pattern.permute.xlu0 10
  %2205 = vperm.xlu0 %2204, %v659
  %v2206 = vpop.permute.xlu0 %2205
  %2208 = vset.pattern.permute.xlu0 10
  %2209 = vperm.xlu0 %2208, %v661
  %v2210 = vpop.permute.xlu0 %2209
  %2212 = vset.pattern.permute.xlu0 10
  %2213 = vperm.xlu0 %2212, %v663
  %v2214 = vpop.permute.xlu0 %2213
  %2216 = vset.pattern.permute.xlu0 10
  %2217 = vperm.xlu0 %2216, %v665
  %v2218 = vpop.permute.xlu0 %2217
  %2220 = vset.pattern.permute.xlu0 10
  %2221 = vperm.xlu0 %2220, %v667
  %v2222 = vpop.permute.xlu0 %2221
  %2224 = vset.pattern.permute.xlu0 10
  %2225 = vperm.xlu0 %2224, %v669
  %v2226 = vpop.permute.xlu0 %2225
  %2228 = vset.pattern.permute.xlu0 10
  %2229 = vperm.xlu0 %2228, %v671
  %v2230 = vpop.permute.xlu0 %2229
  %2232 = vset.pattern.permute.xlu0 10
  %2233 = vperm.xlu0 %2232, %v673
  %v2234 = vpop.permute.xlu0 %2233
  %2236 = vset.pattern.permute.xlu0 10
  %2237 = vperm.xlu0 %2236, %v675
  %v2238 = vpop.permute.xlu0 %2237
  %2240 = vset.pattern.permute.xlu0 10
  %2241 = vperm.xlu0 %2240, %v677
  %v2242 = vpop.permute.xlu0 %2241
  %2244 = vset.pattern.permute.xlu0 10
  %2245 = vperm.xlu0 %2244, %v679
  %v2246 = vpop.permute.xlu0 %2245
  %2248 = vset.pattern.permute.xlu0 10
  %2249 = vperm.xlu0 %2248, %v681
  %v2250 = vpop.permute.xlu0 %2249
  %2252 = vset.pattern.permute.xlu0 10
  %2253 = vperm.xlu0 %2252, %v683
  %v2254 = vpop.permute.xlu0 %2253
  %2256 = vset.pattern.permute.xlu0 10
  %2257 = vperm.xlu0 %2256, %v685
  %v2258 = vpop.permute.xlu0 %2257
  %2260 = vset.pattern.permute.xlu0 10
  %2261 = vperm.xlu0 %2260, %v687
  %v2262 = vpop.permute.xlu0 %2261
  %2264 = vset.pattern.permute.xlu0 10
  %2265 = vperm.xlu0 %2264, %v689
  %v2266 = vpop.permute.xlu0 %2265
  %2268 = vset.pattern.permute.xlu0 10
  %2269 = vperm.xlu0 %2268, %v691
  %v2270 = vpop.permute.xlu0 %2269
  %2272 = vset.pattern.permute.xlu0 10
  %2273 = vperm.xlu0 %2272, %v693
  %v2274 = vpop.permute.xlu0 %2273
  %2276 = vset.pattern.permute.xlu0 10
  %2277 = vperm.xlu0 %2276, %v695
  %v2278 = vpop.permute.xlu0 %2277
  %2280 = vset.pattern.permute.xlu0 10
  %2281 = vperm.xlu0 %2280, %v697
  %v2282 = vpop.permute.xlu0 %2281
  %2284 = vset.pattern.permute.xlu0 10
  %2285 = vperm.xlu0 %2284, %v699
  %v2286 = vpop.permute.xlu0 %2285
  %2288 = vset.pattern.permute.xlu0 10
  %2289 = vperm.xlu0 %2288, %v701
  %v2290 = vpop.permute.xlu0 %2289
  %2292 = vset.pattern.permute.xlu0 10
  %2293 = vperm.xlu0 %2292, %v703
  %v2294 = vpop.permute.xlu0 %2293
  %2296 = vset.pattern.permute.xlu0 10
  %2297 = vperm.xlu0 %2296, %v705
  %v2298 = vpop.permute.xlu0 %2297
  %2300 = vset.pattern.permute.xlu0 10
  %2301 = vperm.xlu0 %2300, %v707
  %v2302 = vpop.permute.xlu0 %2301
  %2304 = vset.pattern.permute.xlu0 10
  %2305 = vperm.xlu0 %2304, %v709
  %v2306 = vpop.permute.xlu0 %2305
  %2308 = vset.pattern.permute.xlu0 10
  %2309 = vperm.xlu0 %2308, %v711
  %v2310 = vpop.permute.xlu0 %2309
  %2312 = vset.pattern.permute.xlu0 10
  %2313 = vperm.xlu0 %2312, %v713
  %v2314 = vpop.permute.xlu0 %2313
  %2316 = vset.pattern.permute.xlu0 10
  %2317 = vperm.xlu0 %2316, %v715
  %v2318 = vpop.permute.xlu0 %2317
  %2320 = vset.pattern.permute.xlu0 10
  %2321 = vperm.xlu0 %2320, %v717
  %v2322 = vpop.permute.xlu0 %2321
  %2324 = vset.pattern.permute.xlu0 10
  %2325 = vperm.xlu0 %2324, %v719
  %v2326 = vpop.permute.xlu0 %2325
  %2328 = vset.pattern.permute.xlu0 10
  %2329 = vperm.xlu0 %2328, %v721
  %v2330 = vpop.permute.xlu0 %2329
  %2332 = vset.pattern.permute.xlu0 10
  %2333 = vperm.xlu0 %2332, %v723
  %v2334 = vpop.permute.xlu0 %2333
  %2336 = vset.pattern.permute.xlu0 10
  %2337 = vperm.xlu0 %2336, %v725
  %v2338 = vpop.permute.xlu0 %2337
  %2340 = vset.pattern.permute.xlu0 10
  %2341 = vperm.xlu0 %2340, %v727
  %v2342 = vpop.permute.xlu0 %2341
  %2344 = vset.pattern.permute.xlu0 10
  %2345 = vperm.xlu0 %2344, %v729
  %v2346 = vpop.permute.xlu0 %2345
  %2348 = vset.pattern.permute.xlu0 10
  %2349 = vperm.xlu0 %2348, %v731
  %v2350 = vpop.permute.xlu0 %2349
  %2352 = vset.pattern.permute.xlu0 10
  %2353 = vperm.xlu0 %2352, %v733
  %v2354 = vpop.permute.xlu0 %2353
  %2356 = vset.pattern.permute.xlu0 10
  %2357 = vperm.xlu0 %2356, %v735
  %v2358 = vpop.permute.xlu0 %2357
  %2360 = vset.pattern.permute.xlu0 10
  %2361 = vperm.xlu0 %2360, %v737
  %v2362 = vpop.permute.xlu0 %2361
  %2364 = vset.pattern.permute.xlu0 10
  %2365 = vperm.xlu0 %2364, %v739
  %v2366 = vpop.permute.xlu0 %2365
  %2368 = vset.pattern.permute.xlu0 10
  %2369 = vperm.xlu0 %2368, %v741
  %v2370 = vpop.permute.xlu0 %2369
  %2372 = vset.pattern.permute.xlu0 10
  %2373 = vperm.xlu0 %2372, %v743
  %v2374 = vpop.permute.xlu0 %2373
  %2376 = vset.pattern.permute.xlu0 10
  %2377 = vperm.xlu0 %2376, %v745
  %v2378 = vpop.permute.xlu0 %2377
  %2380 = vset.pattern.permute.xlu0 10
  %2381 = vperm.xlu0 %2380, %v747
  %v2382 = vpop.permute.xlu0 %2381
  %2384 = vset.pattern.permute.xlu0 10
  %2385 = vperm.xlu0 %2384, %v749
  %v2386 = vpop.permute.xlu0 %2385
  %2388 = vset.pattern.permute.xlu0 10
  %2389 = vperm.xlu0 %2388, %v751
  %v2390 = vpop.permute.xlu0 %2389
  %2392 = vset.pattern.permute.xlu0 10
  %2393 = vperm.xlu0 %2392, %v753
  %v2394 = vpop.permute.xlu0 %2393
  %2396 = vset.pattern.permute.xlu0 10
  %2397 = vperm.xlu0 %2396, %v755
  %v2398 = vpop.permute.xlu0 %2397
  %2400 = vset.pattern.permute.xlu0 10
  %2401 = vperm.xlu0 %2400, %v757
  %v2402 = vpop.permute.xlu0 %2401
  %2404 = vset.pattern.permute.xlu0 10
  %2405 = vperm.xlu0 %2404, %v759
  %v2406 = vpop.permute.xlu0 %2405
  %2408 = vset.pattern.permute.xlu0 10
  %2409 = vperm.xlu0 %2408, %v761
  %v2410 = vpop.permute.xlu0 %2409
  %2412 = vset.pattern.permute.xlu0 10
  %2413 = vperm.xlu0 %2412, %v763
  %v2414 = vpop.permute.xlu0 %2413
  %2416 = vset.pattern.permute.xlu0 10
  %2417 = vperm.xlu0 %2416, %v765
  %v2418 = vpop.permute.xlu0 %2417
  %2420 = vset.pattern.permute.xlu0 10
  %2421 = vperm.xlu0 %2420, %v767
  %v2422 = vpop.permute.xlu0 %2421
  %2424 = vset.pattern.permute.xlu0 10
  %2425 = vperm.xlu0 %2424, %v769
  %v2426 = vpop.permute.xlu0 %2425
  %2428 = vset.pattern.permute.xlu0 10
  %2429 = vperm.xlu0 %2428, %v771
  %v2430 = vpop.permute.xlu0 %2429
  %2432 = vset.pattern.permute.xlu0 10
  %2433 = vperm.xlu0 %2432, %v773
  %v2434 = vpop.permute.xlu0 %2433
  %2436 = vset.pattern.permute.xlu0 10
  %2437 = vperm.xlu0 %2436, %v775
  %v2438 = vpop.permute.xlu0 %2437
  %2440 = vset.pattern.permute.xlu0 10
  %2441 = vperm.xlu0 %2440, %v777
  %v2442 = vpop.permute.xlu0 %2441
  %2444 = vset.pattern.permute.xlu0 10
  %2445 = vperm.xlu0 %2444, %v779
  %v2446 = vpop.permute.xlu0 %2445
  %2448 = vset.pattern.permute.xlu0 10
  %2449 = vperm.xlu0 %2448, %v781
  %v2450 = vpop.permute.xlu0 %2449
  %2452 = vset.pattern.permute.xlu0 10
  %2453 = vperm.xlu0 %2452, %v783
  %v2454 = vpop.permute.xlu0 %2453
  %2456 = vset.pattern.permute.xlu0 10
  %2457 = vperm.xlu0 %2456, %v785
  %v2458 = vpop.permute.xlu0 %2457
  %2460 = vset.pattern.permute.xlu0 10
  %2461 = vperm.xlu0 %2460, %v787
  %v2462 = vpop.permute.xlu0 %2461
  %2464 = vset.pattern.permute.xlu0 10
  %2465 = vperm.xlu0 %2464, %v789
  %v2466 = vpop.permute.xlu0 %2465
  %2468 = vset.pattern.permute.xlu0 10
  %2469 = vperm.xlu0 %2468, %v791
  %v2470 = vpop.permute.xlu0 %2469
  %2472 = vset.pattern.permute.xlu0 10
  %2473 = vperm.xlu0 %2472, %v793
  %v2474 = vpop.permute.xlu0 %2473
  %2476 = vset.pattern.permute.xlu0 10
  %2477 = vperm.xlu0 %2476, %v795
  %v2478 = vpop.permute.xlu0 %2477
  %2480 = vset.pattern.permute.xlu0 10
  %2481 = vperm.xlu0 %2480, %v797
  %v2482 = vpop.permute.xlu0 %2481
  %2484 = vset.pattern.permute.xlu0 10
  %2485 = vperm.xlu0 %2484, %v799
  %v2486 = vpop.permute.xlu0 %2485
  %2488 = vset.pattern.permute.xlu0 10
  %2489 = vperm.xlu0 %2488, %v801
  %v2490 = vpop.permute.xlu0 %2489
  %2492 = vset.pattern.permute.xlu0 10
  %2493 = vperm.xlu0 %2492, %v803
  %v2494 = vpop.permute.xlu0 %2493
  %2496 = vset.pattern.permute.xlu0 10
  %2497 = vperm.xlu0 %2496, %v805
  %v2498 = vpop.permute.xlu0 %2497
  %2500 = vset.pattern.permute.xlu0 10
  %2501 = vperm.xlu0 %2500, %v807
  %v2502 = vpop.permute.xlu0 %2501
  %2504 = vset.pattern.permute.xlu0 10
  %2505 = vperm.xlu0 %2504, %v809
  %v2506 = vpop.permute.xlu0 %2505
  %2508 = vset.pattern.permute.xlu0 10
  %2509 = vperm.xlu0 %2508, %v811
  %v2510 = vpop.permute.xlu0 %2509
  %2512 = vset.pattern.permute.xlu0 10
  %2513 = vperm.xlu0 %2512, %v813
  %v2514 = vpop.permute.xlu0 %2513
  %2516 = vset.pattern.permute.xlu0 10
  %2517 = vperm.xlu0 %2516, %v815
  %v2518 = vpop.permute.xlu0 %2517
  %2520 = vset.pattern.permute.xlu0 10
  %2521 = vperm.xlu0 %2520, %v817
  %v2522 = vpop.permute.xlu0 %2521
  %2524 = vset.pattern.permute.xlu0 10
  %2525 = vperm.xlu0 %2524, %v819
  %v2526 = vpop.permute.xlu0 %2525
  %2528 = vset.pattern.permute.xlu0 10
  %2529 = vperm.xlu0 %2528, %v821
  %v2530 = vpop.permute.xlu0 %2529
  %2532 = vset.pattern.permute.xlu0 10
  %2533 = vperm.xlu0 %2532, %v823
  %v2534 = vpop.permute.xlu0 %2533
  %2536 = vset.pattern.permute.xlu0 10
  %2537 = vperm.xlu0 %2536, %v825
  %v2538 = vpop.permute.xlu0 %2537
  %2540 = vset.pattern.permute.xlu0 10
  %2541 = vperm.xlu0 %2540, %v827
  %v2542 = vpop.permute.xlu0 %2541
  %2544 = vset.pattern.permute.xlu0 10
  %2545 = vperm.xlu0 %2544, %v829
  %v2546 = vpop.permute.xlu0 %2545
  %2548 = vset.pattern.permute.xlu0 10
  %2549 = vperm.xlu0 %2548, %v831
  %v2550 = vpop.permute.xlu0 %2549
  %2552 = vset.pattern.permute.xlu0 10
  %2553 = vperm.xlu0 %2552, %v833
  %v2554 = vpop.permute.xlu0 %2553
  %2556 = vset.pattern.permute.xlu0 10
  %2557 = vperm.xlu0 %2556, %v835
  %v2558 = vpop.permute.xlu0 %2557
  %2560 = vset.pattern.permute.xlu0 10
  %2561 = vperm.xlu0 %2560, %v837
  %v2562 = vpop.permute.xlu0 %2561
  %2564 = vset.pattern.permute.xlu0 10
  %2565 = vperm.xlu0 %2564, %v839
  %v2566 = vpop.permute.xlu0 %2565
  %2568 = vset.pattern.permute.xlu0 10
  %2569 = vperm.xlu0 %2568, %v841
  %v2570 = vpop.permute.xlu0 %2569
  %2572 = vset.pattern.permute.xlu0 10
  %2573 = vperm.xlu0 %2572, %v843
  %v2574 = vpop.permute.xlu0 %2573
  %2576 = vset.pattern.permute.xlu0 10
  %2577 = vperm.xlu0 %2576, %v845
  %v2578 = vpop.permute.xlu0 %2577
  %2580 = vset.pattern.permute.xlu0 10
  %2581 = vperm.xlu0 %2580, %v847
  %v2582 = vpop.permute.xlu0 %2581
  %2584 = vset.pattern.permute.xlu0 10
  %2585 = vperm.xlu0 %2584, %v849
  %v2586 = vpop.permute.xlu0 %2585
  %2588 = vset.pattern.permute.xlu0 10
  %2589 = vperm.xlu0 %2588, %v851
  %v2590 = vpop.permute.xlu0 %2589
  %2592 = vset.pattern.permute.xlu0 10
  %2593 = vperm.xlu0 %2592, %v853
  %v2594 = vpop.permute.xlu0 %2593
  %2596 = vset.pattern.permute.xlu0 10
  %2597 = vperm.xlu0 %2596, %v855
  %v2598 = vpop.permute.xlu0 %2597
  %2600 = vset.pattern.permute.xlu0 10
  %2601 = vperm.xlu0 %2600, %v857
  %v2602 = vpop.permute.xlu0 %2601
  %2604 = vset.pattern.permute.xlu0 10
  %2605 = vperm.xlu0 %2604, %v859
  %v2606 = vpop.permute.xlu0 %2605
  %2608 = vset.pattern.permute.xlu0 10
  %2609 = vperm.xlu0 %2608, %v861
  %v2610 = vpop.permute.xlu0 %2609
  %2612 = vset.pattern.permute.xlu0 10
  %2613 = vperm.xlu0 %2612, %v863
  %v2614 = vpop.permute.xlu0 %2613
  %2616 = vset.pattern.permute.xlu0 10
  %2617 = vperm.xlu0 %2616, %v865
  %v2618 = vpop.permute.xlu0 %2617
  %2620 = vset.pattern.permute.xlu0 10
  %2621 = vperm.xlu0 %2620, %v867
  %v2622 = vpop.permute.xlu0 %2621
  %2624 = vset.pattern.permute.xlu0 10
  %2625 = vperm.xlu0 %2624, %v869
  %v2626 = vpop.permute.xlu0 %2625
  %2628 = vset.pattern.permute.xlu0 10
  %2629 = vperm.xlu0 %2628, %v871
  %v2630 = vpop.permute.xlu0 %2629
  %2632 = vset.pattern.permute.xlu0 10
  %2633 = vperm.xlu0 %2632, %v873
  %v2634 = vpop.permute.xlu0 %2633
  %2636 = vset.pattern.permute.xlu0 10
  %2637 = vperm.xlu0 %2636, %v875
  %v2638 = vpop.permute.xlu0 %2637
  %2640 = vset.pattern.permute.xlu0 10
  %2641 = vperm.xlu0 %2640, %v877
  %v2642 = vpop.permute.xlu0 %2641
  %2644 = vset.pattern.permute.xlu0 10
  %2645 = vperm.xlu0 %2644, %v879
  %v2646 = vpop.permute.xlu0 %2645
  %2648 = vset.pattern.permute.xlu0 10
  %2649 = vperm.xlu0 %2648, %v881
  %v2650 = vpop.permute.xlu0 %2649
  %2652 = vset.pattern.permute.xlu0 10
  %2653 = vperm.xlu0 %2652, %v883
  %v2654 = vpop.permute.xlu0 %2653
  %2656 = vset.pattern.permute.xlu0 10
  %2657 = vperm.xlu0 %2656, %v885
  %v2658 = vpop.permute.xlu0 %2657
  %2660 = vset.pattern.permute.xlu0 10
  %2661 = vperm.xlu0 %2660, %v887
  %v2662 = vpop.permute.xlu0 %2661
  %2664 = vset.pattern.permute.xlu0 10
  %2665 = vperm.xlu0 %2664, %v889
  %v2666 = vpop.permute.xlu0 %2665
  %2668 = vset.pattern.permute.xlu0 10
  %2669 = vperm.xlu0 %2668, %v891
  %v2670 = vpop.permute.xlu0 %2669
  %2672 = vset.pattern.permute.xlu0 10
  %2673 = vperm.xlu0 %2672, %v893
  %v2674 = vpop.permute.xlu0 %2673
  %2676 = vset.pattern.permute.xlu0 10
  %2677 = vperm.xlu0 %2676, %v895
  %v2678 = vpop.permute.xlu0 %2677
  %2680 = vset.pattern.permute.xlu0 10
  %2681 = vperm.xlu0 %2680, %v897
  %v2682 = vpop.permute.xlu0 %2681
  %2684 = vset.pattern.permute.xlu0 10
  %2685 = vperm.xlu0 %2684, %v899
  %v2686 = vpop.permute.xlu0 %2685
  %2688 = vset.pattern.permute.xlu0 10
  %2689 = vperm.xlu0 %2688, %v901
  %v2690 = vpop.permute.xlu0 %2689
  %2692 = vset.pattern.permute.xlu0 10
  %2693 = vperm.xlu0 %2692, %v903
  %v2694 = vpop.permute.xlu0 %2693
  %2696 = vset.pattern.permute.xlu0 11
  %2697 = vperm.xlu0 %2696, %v649
  %v2698 = vpop.permute.xlu0 %2697
  %2700 = vset.pattern.permute.xlu0 11
  %2701 = vperm.xlu0 %2700, %v651
  %v2702 = vpop.permute.xlu0 %2701
  %2704 = vset.pattern.permute.xlu0 11
  %2705 = vperm.xlu0 %2704, %v653
  %v2706 = vpop.permute.xlu0 %2705
  %2708 = vset.pattern.permute.xlu0 11
  %2709 = vperm.xlu0 %2708, %v655
  %v2710 = vpop.permute.xlu0 %2709
  %2712 = vset.pattern.permute.xlu0 11
  %2713 = vperm.xlu0 %2712, %v657
  %v2714 = vpop.permute.xlu0 %2713
  %2716 = vset.pattern.permute.xlu0 11
  %2717 = vperm.xlu0 %2716, %v659
  %v2718 = vpop.permute.xlu0 %2717
  %2720 = vset.pattern.permute.xlu0 11
  %2721 = vperm.xlu0 %2720, %v661
  %v2722 = vpop.permute.xlu0 %2721
  %2724 = vset.pattern.permute.xlu0 11
  %2725 = vperm.xlu0 %2724, %v663
  %v2726 = vpop.permute.xlu0 %2725
  %2728 = vset.pattern.permute.xlu0 11
  %2729 = vperm.xlu0 %2728, %v665
  %v2730 = vpop.permute.xlu0 %2729
  %2732 = vset.pattern.permute.xlu0 11
  %2733 = vperm.xlu0 %2732, %v667
  %v2734 = vpop.permute.xlu0 %2733
  %2736 = vset.pattern.permute.xlu0 11
  %2737 = vperm.xlu0 %2736, %v669
  %v2738 = vpop.permute.xlu0 %2737
  %2740 = vset.pattern.permute.xlu0 11
  %2741 = vperm.xlu0 %2740, %v671
  %v2742 = vpop.permute.xlu0 %2741
  %2744 = vset.pattern.permute.xlu0 11
  %2745 = vperm.xlu0 %2744, %v673
  %v2746 = vpop.permute.xlu0 %2745
  %2748 = vset.pattern.permute.xlu0 11
  %2749 = vperm.xlu0 %2748, %v675
  %v2750 = vpop.permute.xlu0 %2749
  %2752 = vset.pattern.permute.xlu0 11
  %2753 = vperm.xlu0 %2752, %v677
  %v2754 = vpop.permute.xlu0 %2753
  %2756 = vset.pattern.permute.xlu0 11
  %2757 = vperm.xlu0 %2756, %v679
  %v2758 = vpop.permute.xlu0 %2757
  %2760 = vset.pattern.permute.xlu0 11
  %2761 = vperm.xlu0 %2760, %v681
  %v2762 = vpop.permute.xlu0 %2761
  %2764 = vset.pattern.permute.xlu0 11
  %2765 = vperm.xlu0 %2764, %v683
  %v2766 = vpop.permute.xlu0 %2765
  %2768 = vset.pattern.permute.xlu0 11
  %2769 = vperm.xlu0 %2768, %v685
  %v2770 = vpop.permute.xlu0 %2769
  %2772 = vset.pattern.permute.xlu0 11
  %2773 = vperm.xlu0 %2772, %v687
  %v2774 = vpop.permute.xlu0 %2773
  %2776 = vset.pattern.permute.xlu0 11
  %2777 = vperm.xlu0 %2776, %v689
  %v2778 = vpop.permute.xlu0 %2777
  %2780 = vset.pattern.permute.xlu0 11
  %2781 = vperm.xlu0 %2780, %v691
  %v2782 = vpop.permute.xlu0 %2781
  %2784 = vset.pattern.permute.xlu0 11
  %2785 = vperm.xlu0 %2784, %v693
  %v2786 = vpop.permute.xlu0 %2785
  %2788 = vset.pattern.permute.xlu0 11
  %2789 = vperm.xlu0 %2788, %v695
  %v2790 = vpop.permute.xlu0 %2789
  %2792 = vset.pattern.permute.xlu0 11
  %2793 = vperm.xlu0 %2792, %v697
  %v2794 = vpop.permute.xlu0 %2793
  %2796 = vset.pattern.permute.xlu0 11
  %2797 = vperm.xlu0 %2796, %v699
  %v2798 = vpop.permute.xlu0 %2797
  %2800 = vset.pattern.permute.xlu0 11
  %2801 = vperm.xlu0 %2800, %v701
  %v2802 = vpop.permute.xlu0 %2801
  %2804 = vset.pattern.permute.xlu0 11
  %2805 = vperm.xlu0 %2804, %v703
  %v2806 = vpop.permute.xlu0 %2805
  %2808 = vset.pattern.permute.xlu0 11
  %2809 = vperm.xlu0 %2808, %v705
  %v2810 = vpop.permute.xlu0 %2809
  %2812 = vset.pattern.permute.xlu0 11
  %2813 = vperm.xlu0 %2812, %v707
  %v2814 = vpop.permute.xlu0 %2813
  %2816 = vset.pattern.permute.xlu0 11
  %2817 = vperm.xlu0 %2816, %v709
  %v2818 = vpop.permute.xlu0 %2817
  %2820 = vset.pattern.permute.xlu0 11
  %2821 = vperm.xlu0 %2820, %v711
  %v2822 = vpop.permute.xlu0 %2821
  %2824 = vset.pattern.permute.xlu0 11
  %2825 = vperm.xlu0 %2824, %v713
  %v2826 = vpop.permute.xlu0 %2825
  %2828 = vset.pattern.permute.xlu0 11
  %2829 = vperm.xlu0 %2828, %v715
  %v2830 = vpop.permute.xlu0 %2829
  %2832 = vset.pattern.permute.xlu0 11
  %2833 = vperm.xlu0 %2832, %v717
  %v2834 = vpop.permute.xlu0 %2833
  %2836 = vset.pattern.permute.xlu0 11
  %2837 = vperm.xlu0 %2836, %v719
  %v2838 = vpop.permute.xlu0 %2837
  %2840 = vset.pattern.permute.xlu0 11
  %2841 = vperm.xlu0 %2840, %v721
  %v2842 = vpop.permute.xlu0 %2841
  %2844 = vset.pattern.permute.xlu0 11
  %2845 = vperm.xlu0 %2844, %v723
  %v2846 = vpop.permute.xlu0 %2845
  %2848 = vset.pattern.permute.xlu0 11
  %2849 = vperm.xlu0 %2848, %v725
  %v2850 = vpop.permute.xlu0 %2849
  %2852 = vset.pattern.permute.xlu0 11
  %2853 = vperm.xlu0 %2852, %v727
  %v2854 = vpop.permute.xlu0 %2853
  %2856 = vset.pattern.permute.xlu0 11
  %2857 = vperm.xlu0 %2856, %v729
  %v2858 = vpop.permute.xlu0 %2857
  %2860 = vset.pattern.permute.xlu0 11
  %2861 = vperm.xlu0 %2860, %v731
  %v2862 = vpop.permute.xlu0 %2861
  %2864 = vset.pattern.permute.xlu0 11
  %2865 = vperm.xlu0 %2864, %v733
  %v2866 = vpop.permute.xlu0 %2865
  %2868 = vset.pattern.permute.xlu0 11
  %2869 = vperm.xlu0 %2868, %v735
  %v2870 = vpop.permute.xlu0 %2869
  %2872 = vset.pattern.permute.xlu0 11
  %2873 = vperm.xlu0 %2872, %v737
  %v2874 = vpop.permute.xlu0 %2873
  %2876 = vset.pattern.permute.xlu0 11
  %2877 = vperm.xlu0 %2876, %v739
  %v2878 = vpop.permute.xlu0 %2877
  %2880 = vset.pattern.permute.xlu0 11
  %2881 = vperm.xlu0 %2880, %v741
  %v2882 = vpop.permute.xlu0 %2881
  %2884 = vset.pattern.permute.xlu0 11
  %2885 = vperm.xlu0 %2884, %v743
  %v2886 = vpop.permute.xlu0 %2885
  %2888 = vset.pattern.permute.xlu0 11
  %2889 = vperm.xlu0 %2888, %v745
  %v2890 = vpop.permute.xlu0 %2889
  %2892 = vset.pattern.permute.xlu0 11
  %2893 = vperm.xlu0 %2892, %v747
  %v2894 = vpop.permute.xlu0 %2893
  %2896 = vset.pattern.permute.xlu0 11
  %2897 = vperm.xlu0 %2896, %v749
  %v2898 = vpop.permute.xlu0 %2897
  %2900 = vset.pattern.permute.xlu0 11
  %2901 = vperm.xlu0 %2900, %v751
  %v2902 = vpop.permute.xlu0 %2901
  %2904 = vset.pattern.permute.xlu0 11
  %2905 = vperm.xlu0 %2904, %v753
  %v2906 = vpop.permute.xlu0 %2905
  %2908 = vset.pattern.permute.xlu0 11
  %2909 = vperm.xlu0 %2908, %v755
  %v2910 = vpop.permute.xlu0 %2909
  %2912 = vset.pattern.permute.xlu0 11
  %2913 = vperm.xlu0 %2912, %v757
  %v2914 = vpop.permute.xlu0 %2913
  %2916 = vset.pattern.permute.xlu0 11
  %2917 = vperm.xlu0 %2916, %v759
  %v2918 = vpop.permute.xlu0 %2917
  %2920 = vset.pattern.permute.xlu0 11
  %2921 = vperm.xlu0 %2920, %v761
  %v2922 = vpop.permute.xlu0 %2921
  %2924 = vset.pattern.permute.xlu0 11
  %2925 = vperm.xlu0 %2924, %v763
  %v2926 = vpop.permute.xlu0 %2925
  %2928 = vset.pattern.permute.xlu0 11
  %2929 = vperm.xlu0 %2928, %v765
  %v2930 = vpop.permute.xlu0 %2929
  %2932 = vset.pattern.permute.xlu0 11
  %2933 = vperm.xlu0 %2932, %v767
  %v2934 = vpop.permute.xlu0 %2933
  %2936 = vset.pattern.permute.xlu0 11
  %2937 = vperm.xlu0 %2936, %v769
  %v2938 = vpop.permute.xlu0 %2937
  %2940 = vset.pattern.permute.xlu0 11
  %2941 = vperm.xlu0 %2940, %v771
  %v2942 = vpop.permute.xlu0 %2941
  %2944 = vset.pattern.permute.xlu0 11
  %2945 = vperm.xlu0 %2944, %v773
  %v2946 = vpop.permute.xlu0 %2945
  %2948 = vset.pattern.permute.xlu0 11
  %2949 = vperm.xlu0 %2948, %v775
  %v2950 = vpop.permute.xlu0 %2949
  %2952 = vset.pattern.permute.xlu0 11
  %2953 = vperm.xlu0 %2952, %v777
  %v2954 = vpop.permute.xlu0 %2953
  %2956 = vset.pattern.permute.xlu0 11
  %2957 = vperm.xlu0 %2956, %v779
  %v2958 = vpop.permute.xlu0 %2957
  %2960 = vset.pattern.permute.xlu0 11
  %2961 = vperm.xlu0 %2960, %v781
  %v2962 = vpop.permute.xlu0 %2961
  %2964 = vset.pattern.permute.xlu0 11
  %2965 = vperm.xlu0 %2964, %v783
  %v2966 = vpop.permute.xlu0 %2965
  %2968 = vset.pattern.permute.xlu0 11
  %2969 = vperm.xlu0 %2968, %v785
  %v2970 = vpop.permute.xlu0 %2969
  %2972 = vset.pattern.permute.xlu0 11
  %2973 = vperm.xlu0 %2972, %v787
  %v2974 = vpop.permute.xlu0 %2973
  %2976 = vset.pattern.permute.xlu0 11
  %2977 = vperm.xlu0 %2976, %v789
  %v2978 = vpop.permute.xlu0 %2977
  %2980 = vset.pattern.permute.xlu0 11
  %2981 = vperm.xlu0 %2980, %v791
  %v2982 = vpop.permute.xlu0 %2981
  %2984 = vset.pattern.permute.xlu0 11
  %2985 = vperm.xlu0 %2984, %v793
  %v2986 = vpop.permute.xlu0 %2985
  %2988 = vset.pattern.permute.xlu0 11
  %2989 = vperm.xlu0 %2988, %v795
  %v2990 = vpop.permute.xlu0 %2989
  %2992 = vset.pattern.permute.xlu0 11
  %2993 = vperm.xlu0 %2992, %v797
  %v2994 = vpop.permute.xlu0 %2993
  %2996 = vset.pattern.permute.xlu0 11
  %2997 = vperm.xlu0 %2996, %v799
  %v2998 = vpop.permute.xlu0 %2997
  %3000 = vset.pattern.permute.xlu0 11
  %3001 = vperm.xlu0 %3000, %v801
  %v3002 = vpop.permute.xlu0 %3001
  %3004 = vset.pattern.permute.xlu0 11
  %3005 = vperm.xlu0 %3004, %v803
  %v3006 = vpop.permute.xlu0 %3005
  %3008 = vset.pattern.permute.xlu0 11
  %3009 = vperm.xlu0 %3008, %v805
  %v3010 = vpop.permute.xlu0 %3009
  %3012 = vset.pattern.permute.xlu0 11
  %3013 = vperm.xlu0 %3012, %v807
  %v3014 = vpop.permute.xlu0 %3013
  %3016 = vset.pattern.permute.xlu0 11
  %3017 = vperm.xlu0 %3016, %v809
  %v3018 = vpop.permute.xlu0 %3017
  %3020 = vset.pattern.permute.xlu0 11
  %3021 = vperm.xlu0 %3020, %v811
  %v3022 = vpop.permute.xlu0 %3021
  %3024 = vset.pattern.permute.xlu0 11
  %3025 = vperm.xlu0 %3024, %v813
  %v3026 = vpop.permute.xlu0 %3025
  %3028 = vset.pattern.permute.xlu0 11
  %3029 = vperm.xlu0 %3028, %v815
  %v3030 = vpop.permute.xlu0 %3029
  %3032 = vset.pattern.permute.xlu0 11
  %3033 = vperm.xlu0 %3032, %v817
  %v3034 = vpop.permute.xlu0 %3033
  %3036 = vset.pattern.permute.xlu0 11
  %3037 = vperm.xlu0 %3036, %v819
  %v3038 = vpop.permute.xlu0 %3037
  %3040 = vset.pattern.permute.xlu0 11
  %3041 = vperm.xlu0 %3040, %v821
  %v3042 = vpop.permute.xlu0 %3041
  %3044 = vset.pattern.permute.xlu0 11
  %3045 = vperm.xlu0 %3044, %v823
  %v3046 = vpop.permute.xlu0 %3045
  %3048 = vset.pattern.permute.xlu0 11
  %3049 = vperm.xlu0 %3048, %v825
  %v3050 = vpop.permute.xlu0 %3049
  %3052 = vset.pattern.permute.xlu0 11
  %3053 = vperm.xlu0 %3052, %v827
  %v3054 = vpop.permute.xlu0 %3053
  %3056 = vset.pattern.permute.xlu0 11
  %3057 = vperm.xlu0 %3056, %v829
  %v3058 = vpop.permute.xlu0 %3057
  %3060 = vset.pattern.permute.xlu0 11
  %3061 = vperm.xlu0 %3060, %v831
  %v3062 = vpop.permute.xlu0 %3061
  %3064 = vset.pattern.permute.xlu0 11
  %3065 = vperm.xlu0 %3064, %v833
  %v3066 = vpop.permute.xlu0 %3065
  %3068 = vset.pattern.permute.xlu0 11
  %3069 = vperm.xlu0 %3068, %v835
  %v3070 = vpop.permute.xlu0 %3069
  %3072 = vset.pattern.permute.xlu0 11
  %3073 = vperm.xlu0 %3072, %v837
  %v3074 = vpop.permute.xlu0 %3073
  %3076 = vset.pattern.permute.xlu0 11
  %3077 = vperm.xlu0 %3076, %v839
  %v3078 = vpop.permute.xlu0 %3077
  %3080 = vset.pattern.permute.xlu0 11
  %3081 = vperm.xlu0 %3080, %v841
  %v3082 = vpop.permute.xlu0 %3081
  %3084 = vset.pattern.permute.xlu0 11
  %3085 = vperm.xlu0 %3084, %v843
  %v3086 = vpop.permute.xlu0 %3085
  %3088 = vset.pattern.permute.xlu0 11
  %3089 = vperm.xlu0 %3088, %v845
  %v3090 = vpop.permute.xlu0 %3089
  %3092 = vset.pattern.permute.xlu0 11
  %3093 = vperm.xlu0 %3092, %v847
  %v3094 = vpop.permute.xlu0 %3093
  %3096 = vset.pattern.permute.xlu0 11
  %3097 = vperm.xlu0 %3096, %v849
  %v3098 = vpop.permute.xlu0 %3097
  %3100 = vset.pattern.permute.xlu0 11
  %3101 = vperm.xlu0 %3100, %v851
  %v3102 = vpop.permute.xlu0 %3101
  %3104 = vset.pattern.permute.xlu0 11
  %3105 = vperm.xlu0 %3104, %v853
  %v3106 = vpop.permute.xlu0 %3105
  %3108 = vset.pattern.permute.xlu0 11
  %3109 = vperm.xlu0 %3108, %v855
  %v3110 = vpop.permute.xlu0 %3109
  %3112 = vset.pattern.permute.xlu0 11
  %3113 = vperm.xlu0 %3112, %v857
  %v3114 = vpop.permute.xlu0 %3113
  %3116 = vset.pattern.permute.xlu0 11
  %3117 = vperm.xlu0 %3116, %v859
  %v3118 = vpop.permute.xlu0 %3117
  %3120 = vset.pattern.permute.xlu0 11
  %3121 = vperm.xlu0 %3120, %v861
  %v3122 = vpop.permute.xlu0 %3121
  %3124 = vset.pattern.permute.xlu0 11
  %3125 = vperm.xlu0 %3124, %v863
  %v3126 = vpop.permute.xlu0 %3125
  %3128 = vset.pattern.permute.xlu0 11
  %3129 = vperm.xlu0 %3128, %v865
  %v3130 = vpop.permute.xlu0 %3129
  %3132 = vset.pattern.permute.xlu0 11
  %3133 = vperm.xlu0 %3132, %v867
  %v3134 = vpop.permute.xlu0 %3133
  %3136 = vset.pattern.permute.xlu0 11
  %3137 = vperm.xlu0 %3136, %v869
  %v3138 = vpop.permute.xlu0 %3137
  %3140 = vset.pattern.permute.xlu0 11
  %3141 = vperm.xlu0 %3140, %v871
  %v3142 = vpop.permute.xlu0 %3141
  %3144 = vset.pattern.permute.xlu0 11
  %3145 = vperm.xlu0 %3144, %v873
  %v3146 = vpop.permute.xlu0 %3145
  %3148 = vset.pattern.permute.xlu0 11
  %3149 = vperm.xlu0 %3148, %v875
  %v3150 = vpop.permute.xlu0 %3149
  %3152 = vset.pattern.permute.xlu0 11
  %3153 = vperm.xlu0 %3152, %v877
  %v3154 = vpop.permute.xlu0 %3153
  %3156 = vset.pattern.permute.xlu0 11
  %3157 = vperm.xlu0 %3156, %v879
  %v3158 = vpop.permute.xlu0 %3157
  %3160 = vset.pattern.permute.xlu0 11
  %3161 = vperm.xlu0 %3160, %v881
  %v3162 = vpop.permute.xlu0 %3161
  %3164 = vset.pattern.permute.xlu0 11
  %3165 = vperm.xlu0 %3164, %v883
  %v3166 = vpop.permute.xlu0 %3165
  %3168 = vset.pattern.permute.xlu0 11
  %3169 = vperm.xlu0 %3168, %v885
  %v3170 = vpop.permute.xlu0 %3169
  %3172 = vset.pattern.permute.xlu0 11
  %3173 = vperm.xlu0 %3172, %v887
  %v3174 = vpop.permute.xlu0 %3173
  %3176 = vset.pattern.permute.xlu0 11
  %3177 = vperm.xlu0 %3176, %v889
  %v3178 = vpop.permute.xlu0 %3177
  %3180 = vset.pattern.permute.xlu0 11
  %3181 = vperm.xlu0 %3180, %v891
  %v3182 = vpop.permute.xlu0 %3181
  %3184 = vset.pattern.permute.xlu0 11
  %3185 = vperm.xlu0 %3184, %v893
  %v3186 = vpop.permute.xlu0 %3185
  %3188 = vset.pattern.permute.xlu0 11
  %3189 = vperm.xlu0 %3188, %v895
  %v3190 = vpop.permute.xlu0 %3189
  %3192 = vset.pattern.permute.xlu0 11
  %3193 = vperm.xlu0 %3192, %v897
  %v3194 = vpop.permute.xlu0 %3193
  %3196 = vset.pattern.permute.xlu0 11
  %3197 = vperm.xlu0 %3196, %v899
  %v3198 = vpop.permute.xlu0 %3197
  %3200 = vset.pattern.permute.xlu0 11
  %3201 = vperm.xlu0 %3200, %v901
  %v3202 = vpop.permute.xlu0 %3201
  %3204 = vset.pattern.permute.xlu0 11
  %3205 = vperm.xlu0 %3204, %v903
  %v3206 = vpop.permute.xlu0 %3205
  %vm3208 = vcmask 23552
  %v3209 = vsel %vm3208, %v1035, %v1674
  %v3210 = vsel %vm3208, %v1040, %v1678
  %v3211 = vsel %vm3208, %v1045, %v1682
  %v3212 = vsel %vm3208, %v1050, %v1686
  %v3213 = vsel %vm3208, %v1055, %v1690
  %v3214 = vsel %vm3208, %v1060, %v1694
  %v3215 = vsel %vm3208, %v1065, %v1698
  %v3216 = vsel %vm3208, %v1070, %v1702
  %v3217 = vsel %vm3208, %v1075, %v1706
  %v3218 = vsel %vm3208, %v1080, %v1710
  %v3219 = vsel %vm3208, %v1085, %v1714
  %v3220 = vsel %vm3208, %v1090, %v1718
  %v3221 = vsel %vm3208, %v1095, %v1722
  %v3222 = vsel %vm3208, %v1100, %v1726
  %v3223 = vsel %vm3208, %v1105, %v1730
  %v3224 = vsel %vm3208, %v1110, %v1734
  %v3225 = vsel %vm3208, %v1115, %v1738
  %v3226 = vsel %vm3208, %v1120, %v1742
  %v3227 = vsel %vm3208, %v1125, %v1746
  %v3228 = vsel %vm3208, %v1130, %v1750
  %v3229 = vsel %vm3208, %v1135, %v1754
  %v3230 = vsel %vm3208, %v1140, %v1758
  %v3231 = vsel %vm3208, %v1145, %v1762
  %v3232 = vsel %vm3208, %v1150, %v1766
  %v3233 = vsel %vm3208, %v1155, %v1770
  %v3234 = vsel %vm3208, %v1160, %v1774
  %v3235 = vsel %vm3208, %v1165, %v1778
  %v3236 = vsel %vm3208, %v1170, %v1782
  %v3237 = vsel %vm3208, %v1175, %v1786
  %v3238 = vsel %vm3208, %v1180, %v1790
  %v3239 = vsel %vm3208, %v1185, %v1794
  %v3240 = vsel %vm3208, %v1190, %v1798
  %v3241 = vsel %vm3208, %v1195, %v1802
  %v3242 = vsel %vm3208, %v1200, %v1806
  %v3243 = vsel %vm3208, %v1205, %v1810
  %v3244 = vsel %vm3208, %v1210, %v1814
  %v3245 = vsel %vm3208, %v1215, %v1818
  %v3246 = vsel %vm3208, %v1220, %v1822
  %v3247 = vsel %vm3208, %v1225, %v1826
  %v3248 = vsel %vm3208, %v1230, %v1830
  %v3249 = vsel %vm3208, %v1235, %v1834
  %v3250 = vsel %vm3208, %v1240, %v1838
  %v3251 = vsel %vm3208, %v1245, %v1842
  %v3252 = vsel %vm3208, %v1250, %v1846
  %v3253 = vsel %vm3208, %v1255, %v1850
  %v3254 = vsel %vm3208, %v1260, %v1854
  %v3255 = vsel %vm3208, %v1265, %v1858
  %v3256 = vsel %vm3208, %v1270, %v1862
  %v3257 = vsel %vm3208, %v1275, %v1866
  %v3258 = vsel %vm3208, %v1280, %v1870
  %v3259 = vsel %vm3208, %v1285, %v1874
  %v3260 = vsel %vm3208, %v1290, %v1878
  %v3261 = vsel %vm3208, %v1295, %v1882
  %v3262 = vsel %vm3208, %v1300, %v1886
  %v3263 = vsel %vm3208, %v1305, %v1890
  %v3264 = vsel %vm3208, %v1310, %v1894
  %v3265 = vsel %vm3208, %v1315, %v1898
  %v3266 = vsel %vm3208, %v1320, %v1902
  %v3267 = vsel %vm3208, %v1325, %v1906
  %v3268 = vsel %vm3208, %v1330, %v1910
  %v3269 = vsel %vm3208, %v1335, %v1914
  %v3270 = vsel %vm3208, %v1340, %v1918
  %v3271 = vsel %vm3208, %v1345, %v1922
  %v3272 = vsel %vm3208, %v1350, %v1926
  %v3273 = vsel %vm3208, %v1355, %v1930
  %v3274 = vsel %vm3208, %v1360, %v1934
  %v3275 = vsel %vm3208, %v1365, %v1938
  %v3276 = vsel %vm3208, %v1370, %v1942
  %v3277 = vsel %vm3208, %v1375, %v1946
  %v3278 = vsel %vm3208, %v1380, %v1950
  %v3279 = vsel %vm3208, %v1385, %v1954
  %v3280 = vsel %vm3208, %v1390, %v1958
  %v3281 = vsel %vm3208, %v1395, %v1962
  %v3282 = vsel %vm3208, %v1400, %v1966
  %v3283 = vsel %vm3208, %v1405, %v1970
  %v3284 = vsel %vm3208, %v1410, %v1974
  %v3285 = vsel %vm3208, %v1415, %v1978
  %v3286 = vsel %vm3208, %v1420, %v1982
  %v3287 = vsel %vm3208, %v1425, %v1986
  %v3288 = vsel %vm3208, %v1430, %v1990
  %v3289 = vsel %vm3208, %v1435, %v1994
  %v3290 = vsel %vm3208, %v1440, %v1998
  %v3291 = vsel %vm3208, %v1445, %v2002
  %v3292 = vsel %vm3208, %v1450, %v2006
  %v3293 = vsel %vm3208, %v1455, %v2010
  %v3294 = vsel %vm3208, %v1460, %v2014
  %v3295 = vsel %vm3208, %v1465, %v2018
  %v3296 = vsel %vm3208, %v1470, %v2022
  %v3297 = vsel %vm3208, %v1475, %v2026
  %v3298 = vsel %vm3208, %v1480, %v2030
  %v3299 = vsel %vm3208, %v1485, %v2034
  %v3300 = vsel %vm3208, %v1490, %v2038
  %v3301 = vsel %vm3208, %v1495, %v2042
  %v3302 = vsel %vm3208, %v1500, %v2046
  %v3303 = vsel %vm3208, %v1505, %v2050
  %v3304 = vsel %vm3208, %v1510, %v2054
  %v3305 = vsel %vm3208, %v1515, %v2058
  %v3306 = vsel %vm3208, %v1520, %v2062
  %v3307 = vsel %vm3208, %v1525, %v2066
  %v3308 = vsel %vm3208, %v1530, %v2070
  %v3309 = vsel %vm3208, %v1535, %v2074
  %v3310 = vsel %vm3208, %v1540, %v2078
  %v3311 = vsel %vm3208, %v1545, %v2082
  %v3312 = vsel %vm3208, %v1550, %v2086
  %v3313 = vsel %vm3208, %v1555, %v2090
  %v3314 = vsel %vm3208, %v1560, %v2094
  %v3315 = vsel %vm3208, %v1565, %v2098
  %v3316 = vsel %vm3208, %v1570, %v2102
  %v3317 = vsel %vm3208, %v1575, %v2106
  %v3318 = vsel %vm3208, %v1580, %v2110
  %v3319 = vsel %vm3208, %v1585, %v2114
  %v3320 = vsel %vm3208, %v1590, %v2118
  %v3321 = vsel %vm3208, %v1595, %v2122
  %v3322 = vsel %vm3208, %v1600, %v2126
  %v3323 = vsel %vm3208, %v1605, %v2130
  %v3324 = vsel %vm3208, %v1610, %v2134
  %v3325 = vsel %vm3208, %v1615, %v2138
  %v3326 = vsel %vm3208, %v1620, %v2142
  %v3327 = vsel %vm3208, %v1625, %v2146
  %v3328 = vsel %vm3208, %v1630, %v2150
  %v3329 = vsel %vm3208, %v1635, %v2154
  %v3330 = vsel %vm3208, %v1640, %v2158
  %v3331 = vsel %vm3208, %v1645, %v2162
  %v3332 = vsel %vm3208, %v1650, %v2166
  %v3333 = vsel %vm3208, %v1655, %v2170
  %v3334 = vsel %vm3208, %v1660, %v2174
  %v3335 = vsel %vm3208, %v1665, %v2178
  %v3336 = vsel %vm3208, %v1670, %v2182
  %vm3337 = vcmask 48128
  %v3338 = vsel %vm3337, %v3209, %v2186
  %v3339 = vsel %vm3337, %v3210, %v2190
  %v3340 = vsel %vm3337, %v3211, %v2194
  %v3341 = vsel %vm3337, %v3212, %v2198
  %v3342 = vsel %vm3337, %v3213, %v2202
  %v3343 = vsel %vm3337, %v3214, %v2206
  %v3344 = vsel %vm3337, %v3215, %v2210
  %v3345 = vsel %vm3337, %v3216, %v2214
  %v3346 = vsel %vm3337, %v3217, %v2218
  %v3347 = vsel %vm3337, %v3218, %v2222
  %v3348 = vsel %vm3337, %v3219, %v2226
  %v3349 = vsel %vm3337, %v3220, %v2230
  %v3350 = vsel %vm3337, %v3221, %v2234
  %v3351 = vsel %vm3337, %v3222, %v2238
  %v3352 = vsel %vm3337, %v3223, %v2242
  %v3353 = vsel %vm3337, %v3224, %v2246
  %v3354 = vsel %vm3337, %v3225, %v2250
  %v3355 = vsel %vm3337, %v3226, %v2254
  %v3356 = vsel %vm3337, %v3227, %v2258
  %v3357 = vsel %vm3337, %v3228, %v2262
  %v3358 = vsel %vm3337, %v3229, %v2266
  %v3359 = vsel %vm3337, %v3230, %v2270
  %v3360 = vsel %vm3337, %v3231, %v2274
  %v3361 = vsel %vm3337, %v3232, %v2278
  %v3362 = vsel %vm3337, %v3233, %v2282
  %v3363 = vsel %vm3337, %v3234, %v2286
  %v3364 = vsel %vm3337, %v3235, %v2290
  %v3365 = vsel %vm3337, %v3236, %v2294
  %v3366 = vsel %vm3337, %v3237, %v2298
  %v3367 = vsel %vm3337, %v3238, %v2302
  %v3368 = vsel %vm3337, %v3239, %v2306
  %v3369 = vsel %vm3337, %v3240, %v2310
  %v3370 = vsel %vm3337, %v3241, %v2314
  %v3371 = vsel %vm3337, %v3242, %v2318
  %v3372 = vsel %vm3337, %v3243, %v2322
  %v3373 = vsel %vm3337, %v3244, %v2326
  %v3374 = vsel %vm3337, %v3245, %v2330
  %v3375 = vsel %vm3337, %v3246, %v2334
  %v3376 = vsel %vm3337, %v3247, %v2338
  %v3377 = vsel %vm3337, %v3248, %v2342
  %v3378 = vsel %vm3337, %v3249, %v2346
  %v3379 = vsel %vm3337, %v3250, %v2350
  %v3380 = vsel %vm3337, %v3251, %v2354
  %v3381 = vsel %vm3337, %v3252, %v2358
  %v3382 = vsel %vm3337, %v3253, %v2362
  %v3383 = vsel %vm3337, %v3254, %v2366
  %v3384 = vsel %vm3337, %v3255, %v2370
  %v3385 = vsel %vm3337, %v3256, %v2374
  %v3386 = vsel %vm3337, %v3257, %v2378
  %v3387 = vsel %vm3337, %v3258, %v2382
  %v3388 = vsel %vm3337, %v3259, %v2386
  %v3389 = vsel %vm3337, %v3260, %v2390
  %v3390 = vsel %vm3337, %v3261, %v2394
  %v3391 = vsel %vm3337, %v3262, %v2398
  %v3392 = vsel %vm3337, %v3263, %v2402
  %v3393 = vsel %vm3337, %v3264, %v2406
  %v3394 = vsel %vm3337, %v3265, %v2410
  %v3395 = vsel %vm3337, %v3266, %v2414
  %v3396 = vsel %vm3337, %v3267, %v2418
  %v3397 = vsel %vm3337, %v3268, %v2422
  %v3398 = vsel %vm3337, %v3269, %v2426
  %v3399 = vsel %vm3337, %v3270, %v2430
  %v3400 = vsel %vm3337, %v3271, %v2434
  %v3401 = vsel %vm3337, %v3272, %v2438
  %v3402 = vsel %vm3337, %v3273, %v2442
  %v3403 = vsel %vm3337, %v3274, %v2446
  %v3404 = vsel %vm3337, %v3275, %v2450
  %v3405 = vsel %vm3337, %v3276, %v2454
  %v3406 = vsel %vm3337, %v3277, %v2458
  %v3407 = vsel %vm3337, %v3278, %v2462
  %v3408 = vsel %vm3337, %v3279, %v2466
  %v3409 = vsel %vm3337, %v3280, %v2470
  %v3410 = vsel %vm3337, %v3281, %v2474
  %v3411 = vsel %vm3337, %v3282, %v2478
  %v3412 = vsel %vm3337, %v3283, %v2482
  %v3413 = vsel %vm3337, %v3284, %v2486
  %v3414 = vsel %vm3337, %v3285, %v2490
  %v3415 = vsel %vm3337, %v3286, %v2494
  %v3416 = vsel %vm3337, %v3287, %v2498
  %v3417 = vsel %vm3337, %v3288, %v2502
  %v3418 = vsel %vm3337, %v3289, %v2506
  %v3419 = vsel %vm3337, %v3290, %v2510
  %v3420 = vsel %vm3337, %v3291, %v2514
  %v3421 = vsel %vm3337, %v3292, %v2518
  %v3422 = vsel %vm3337, %v3293, %v2522
  %v3423 = vsel %vm3337, %v3294, %v2526
  %v3424 = vsel %vm3337, %v3295, %v2530
  %v3425 = vsel %vm3337, %v3296, %v2534
  %v3426 = vsel %vm3337, %v3297, %v2538
  %v3427 = vsel %vm3337, %v3298, %v2542
  %v3428 = vsel %vm3337, %v3299, %v2546
  %v3429 = vsel %vm3337, %v3300, %v2550
  %v3430 = vsel %vm3337, %v3301, %v2554
  %v3431 = vsel %vm3337, %v3302, %v2558
  %v3432 = vsel %vm3337, %v3303, %v2562
  %v3433 = vsel %vm3337, %v3304, %v2566
  %v3434 = vsel %vm3337, %v3305, %v2570
  %v3435 = vsel %vm3337, %v3306, %v2574
  %v3436 = vsel %vm3337, %v3307, %v2578
  %v3437 = vsel %vm3337, %v3308, %v2582
  %v3438 = vsel %vm3337, %v3309, %v2586
  %v3439 = vsel %vm3337, %v3310, %v2590
  %v3440 = vsel %vm3337, %v3311, %v2594
  %v3441 = vsel %vm3337, %v3312, %v2598
  %v3442 = vsel %vm3337, %v3313, %v2602
  %v3443 = vsel %vm3337, %v3314, %v2606
  %v3444 = vsel %vm3337, %v3315, %v2610
  %v3445 = vsel %vm3337, %v3316, %v2614
  %v3446 = vsel %vm3337, %v3317, %v2618
  %v3447 = vsel %vm3337, %v3318, %v2622
  %v3448 = vsel %vm3337, %v3319, %v2626
  %v3449 = vsel %vm3337, %v3320, %v2630
  %v3450 = vsel %vm3337, %v3321, %v2634
  %v3451 = vsel %vm3337, %v3322, %v2638
  %v3452 = vsel %vm3337, %v3323, %v2642
  %v3453 = vsel %vm3337, %v3324, %v2646
  %v3454 = vsel %vm3337, %v3325, %v2650
  %v3455 = vsel %vm3337, %v3326, %v2654
  %v3456 = vsel %vm3337, %v3327, %v2658
  %v3457 = vsel %vm3337, %v3328, %v2662
  %v3458 = vsel %vm3337, %v3329, %v2666
  %v3459 = vsel %vm3337, %v3330, %v2670
  %v3460 = vsel %vm3337, %v3331, %v2674
  %v3461 = vsel %vm3337, %v3332, %v2678
  %v3462 = vsel %vm3337, %v3333, %v2682
  %v3463 = vsel %vm3337, %v3334, %v2686
  %v3464 = vsel %vm3337, %v3335, %v2690
  %v3465 = vsel %vm3337, %v3336, %v2694
  %vm3466 = vcmask 89088
  %v3467 = vsel %vm3466, %v3338, %v2698
  %v3468 = vsel %vm3466, %v3339, %v2702
  %v3469 = vsel %vm3466, %v3340, %v2706
  %v3470 = vsel %vm3466, %v3341, %v2710
  %v3471 = vsel %vm3466, %v3342, %v2714
  %v3472 = vsel %vm3466, %v3343, %v2718
  %v3473 = vsel %vm3466, %v3344, %v2722
  %v3474 = vsel %vm3466, %v3345, %v2726
  %v3475 = vsel %vm3466, %v3346, %v2730
  %v3476 = vsel %vm3466, %v3347, %v2734
  %v3477 = vsel %vm3466, %v3348, %v2738
  %v3478 = vsel %vm3466, %v3349, %v2742
  %v3479 = vsel %vm3466, %v3350, %v2746
  %v3480 = vsel %vm3466, %v3351, %v2750
  %v3481 = vsel %vm3466, %v3352, %v2754
  %v3482 = vsel %vm3466, %v3353, %v2758
  %v3483 = vsel %vm3466, %v3354, %v2762
  %v3484 = vsel %vm3466, %v3355, %v2766
  %v3485 = vsel %vm3466, %v3356, %v2770
  %v3486 = vsel %vm3466, %v3357, %v2774
  %v3487 = vsel %vm3466, %v3358, %v2778
  %v3488 = vsel %vm3466, %v3359, %v2782
  %v3489 = vsel %vm3466, %v3360, %v2786
  %v3490 = vsel %vm3466, %v3361, %v2790
  %v3491 = vsel %vm3466, %v3362, %v2794
  %v3492 = vsel %vm3466, %v3363, %v2798
  %v3493 = vsel %vm3466, %v3364, %v2802
  %v3494 = vsel %vm3466, %v3365, %v2806
  %v3495 = vsel %vm3466, %v3366, %v2810
  %v3496 = vsel %vm3466, %v3367, %v2814
  %v3497 = vsel %vm3466, %v3368, %v2818
  %v3498 = vsel %vm3466, %v3369, %v2822
  %v3499 = vsel %vm3466, %v3370, %v2826
  %v3500 = vsel %vm3466, %v3371, %v2830
  %v3501 = vsel %vm3466, %v3372, %v2834
  %v3502 = vsel %vm3466, %v3373, %v2838
  %v3503 = vsel %vm3466, %v3374, %v2842
  %v3504 = vsel %vm3466, %v3375, %v2846
  %v3505 = vsel %vm3466, %v3376, %v2850
  %v3506 = vsel %vm3466, %v3377, %v2854
  %v3507 = vsel %vm3466, %v3378, %v2858
  %v3508 = vsel %vm3466, %v3379, %v2862
  %v3509 = vsel %vm3466, %v3380, %v2866
  %v3510 = vsel %vm3466, %v3381, %v2870
  %v3511 = vsel %vm3466, %v3382, %v2874
  %v3512 = vsel %vm3466, %v3383, %v2878
  %v3513 = vsel %vm3466, %v3384, %v2882
  %v3514 = vsel %vm3466, %v3385, %v2886
  %v3515 = vsel %vm3466, %v3386, %v2890
  %v3516 = vsel %vm3466, %v3387, %v2894
  %v3517 = vsel %vm3466, %v3388, %v2898
  %v3518 = vsel %vm3466, %v3389, %v2902
  %v3519 = vsel %vm3466, %v3390, %v2906
  %v3520 = vsel %vm3466, %v3391, %v2910
  %v3521 = vsel %vm3466, %v3392, %v2914
  %v3522 = vsel %vm3466, %v3393, %v2918
  %v3523 = vsel %vm3466, %v3394, %v2922
  %v3524 = vsel %vm3466, %v3395, %v2926
  %v3525 = vsel %vm3466, %v3396, %v2930
  %v3526 = vsel %vm3466, %v3397, %v2934
  %v3527 = vsel %vm3466, %v3398, %v2938
  %v3528 = vsel %vm3466, %v3399, %v2942
  %v3529 = vsel %vm3466, %v3400, %v2946
  %v3530 = vsel %vm3466, %v3401, %v2950
  %v3531 = vsel %vm3466, %v3402, %v2954
  %v3532 = vsel %vm3466, %v3403, %v2958
  %v3533 = vsel %vm3466, %v3404, %v2962
  %v3534 = vsel %vm3466, %v3405, %v2966
  %v3535 = vsel %vm3466, %v3406, %v2970
  %v3536 = vsel %vm3466, %v3407, %v2974
  %v3537 = vsel %vm3466, %v3408, %v2978
  %v3538 = vsel %vm3466, %v3409, %v2982
  %v3539 = vsel %vm3466, %v3410, %v2986
  %v3540 = vsel %vm3466, %v3411, %v2990
  %v3541 = vsel %vm3466, %v3412, %v2994
  %v3542 = vsel %vm3466, %v3413, %v2998
  %v3543 = vsel %vm3466, %v3414, %v3002
  %v3544 = vsel %vm3466, %v3415, %v3006
  %v3545 = vsel %vm3466, %v3416, %v3010
  %v3546 = vsel %vm3466, %v3417, %v3014
  %v3547 = vsel %vm3466, %v3418, %v3018
  %v3548 = vsel %vm3466, %v3419, %v3022
  %v3549 = vsel %vm3466, %v3420, %v3026
  %v3550 = vsel %vm3466, %v3421, %v3030
  %v3551 = vsel %vm3466, %v3422, %v3034
  %v3552 = vsel %vm3466, %v3423, %v3038
  %v3553 = vsel %vm3466, %v3424, %v3042
  %v3554 = vsel %vm3466, %v3425, %v3046
  %v3555 = vsel %vm3466, %v3426, %v3050
  %v3556 = vsel %vm3466, %v3427, %v3054
  %v3557 = vsel %vm3466, %v3428, %v3058
  %v3558 = vsel %vm3466, %v3429, %v3062
  %v3559 = vsel %vm3466, %v3430, %v3066
  %v3560 = vsel %vm3466, %v3431, %v3070
  %v3561 = vsel %vm3466, %v3432, %v3074
  %v3562 = vsel %vm3466, %v3433, %v3078
  %v3563 = vsel %vm3466, %v3434, %v3082
  %v3564 = vsel %vm3466, %v3435, %v3086
  %v3565 = vsel %vm3466, %v3436, %v3090
  %v3566 = vsel %vm3466, %v3437, %v3094
  %v3567 = vsel %vm3466, %v3438, %v3098
  %v3568 = vsel %vm3466, %v3439, %v3102
  %v3569 = vsel %vm3466, %v3440, %v3106
  %v3570 = vsel %vm3466, %v3441, %v3110
  %v3571 = vsel %vm3466, %v3442, %v3114
  %v3572 = vsel %vm3466, %v3443, %v3118
  %v3573 = vsel %vm3466, %v3444, %v3122
  %v3574 = vsel %vm3466, %v3445, %v3126
  %v3575 = vsel %vm3466, %v3446, %v3130
  %v3576 = vsel %vm3466, %v3447, %v3134
  %v3577 = vsel %vm3466, %v3448, %v3138
  %v3578 = vsel %vm3466, %v3449, %v3142
  %v3579 = vsel %vm3466, %v3450, %v3146
  %v3580 = vsel %vm3466, %v3451, %v3150
  %v3581 = vsel %vm3466, %v3452, %v3154
  %v3582 = vsel %vm3466, %v3453, %v3158
  %v3583 = vsel %vm3466, %v3454, %v3162
  %v3584 = vsel %vm3466, %v3455, %v3166
  %v3585 = vsel %vm3466, %v3456, %v3170
  %v3586 = vsel %vm3466, %v3457, %v3174
  %v3587 = vsel %vm3466, %v3458, %v3178
  %v3588 = vsel %vm3466, %v3459, %v3182
  %v3589 = vsel %vm3466, %v3460, %v3186
  %v3590 = vsel %vm3466, %v3461, %v3190
  %v3591 = vsel %vm3466, %v3462, %v3194
  %v3592 = vsel %vm3466, %v3463, %v3198
  %v3593 = vsel %vm3466, %v3464, %v3202
  %v3594 = vsel %vm3466, %v3465, %v3206
  %vm3595 = vcmask 64512
  %3596 = vst.msk [vmem:[%s1] sm:$0xff] %vm3595, %v904
  %3597 = vst.msk [vmem:[%s1 + $0x8] sm:$0xff] %vm3595, %v905
  %3598 = vst.msk [vmem:[%s1 + $0x10] sm:$0xff] %vm3595, %v906
  %3599 = vst.msk [vmem:[%s1 + $0x18] sm:$0xff] %vm3595, %v907
  %3600 = vst.msk [vmem:[%s1 + $0x20] sm:$0xff] %vm3595, %v908
  %3601 = vst.msk [vmem:[%s1 + $0x28] sm:$0xff] %vm3595, %v909
  %3602 = vst.msk [vmem:[%s1 + $0x30] sm:$0xff] %vm3595, %v910
  %3603 = vst.msk [vmem:[%s1 + $0x38] sm:$0xff] %vm3595, %v911
  %3604 = vst.msk [vmem:[%s1 + $0x40] sm:$0xff] %vm3595, %v912
  %3605 = vst.msk [vmem:[%s1 + $0x48] sm:$0xff] %vm3595, %v913
  %3606 = vst.msk [vmem:[%s1 + $0x50] sm:$0xff] %vm3595, %v914
  %3607 = vst.msk [vmem:[%s1 + $0x58] sm:$0xff] %vm3595, %v915
  %3608 = vst.msk [vmem:[%s1 + $0x60] sm:$0xff] %vm3595, %v916
  %3609 = vst.msk [vmem:[%s1 + $0x68] sm:$0xff] %vm3595, %v917
  %3610 = vst.msk [vmem:[%s1 + $0x70] sm:$0xff] %vm3595, %v918
  %3611 = vst.msk [vmem:[%s1 + $0x78] sm:$0xff] %vm3595, %v919
  %3612 = vst.msk [vmem:[%s1 + $0x80] sm:$0xff] %vm3595, %v920
  %3613 = vst.msk [vmem:[%s1 + $0x88] sm:$0xff] %vm3595, %v921
  %3614 = vst.msk [vmem:[%s1 + $0x90] sm:$0xff] %vm3595, %v922
  %3615 = vst.msk [vmem:[%s1 + $0x98] sm:$0xff] %vm3595, %v923
  %3616 = vst.msk [vmem:[%s1 + $0xa0] sm:$0xff] %vm3595, %v924
  %3617 = vst.msk [vmem:[%s1 + $0xa8] sm:$0xff] %vm3595, %v925
  %3618 = vst.msk [vmem:[%s1 + $0xb0] sm:$0xff] %vm3595, %v926
  %3619 = vst.msk [vmem:[%s1 + $0xb8] sm:$0xff] %vm3595, %v927
  %3620 = vst.msk [vmem:[%s1 + $0xc0] sm:$0xff] %vm3595, %v928
  %3621 = vst.msk [vmem:[%s1 + $0xc8] sm:$0xff] %vm3595, %v929
  %3622 = vst.msk [vmem:[%s1 + $0xd0] sm:$0xff] %vm3595, %v930
  %3623 = vst.msk [vmem:[%s1 + $0xd8] sm:$0xff] %vm3595, %v931
  %3624 = vst.msk [vmem:[%s1 + $0xe0] sm:$0xff] %vm3595, %v932
  %3625 = vst.msk [vmem:[%s1 + $0xe8] sm:$0xff] %vm3595, %v933
  %3626 = vst.msk [vmem:[%s1 + $0xf0] sm:$0xff] %vm3595, %v934
  %3627 = vst.msk [vmem:[%s1 + $0xf8] sm:$0xff] %vm3595, %v935
  %3628 = vst.msk [vmem:[%s1 + $0x100] sm:$0xff] %vm3595, %v936
  %3629 = vst.msk [vmem:[%s1 + $0x108] sm:$0xff] %vm3595, %v937
  %3630 = vst.msk [vmem:[%s1 + $0x110] sm:$0xff] %vm3595, %v938
  %3631 = vst.msk [vmem:[%s1 + $0x118] sm:$0xff] %vm3595, %v939
  %3632 = vst.msk [vmem:[%s1 + $0x120] sm:$0xff] %vm3595, %v940
  %3633 = vst.msk [vmem:[%s1 + $0x128] sm:$0xff] %vm3595, %v941
  %3634 = vst.msk [vmem:[%s1 + $0x130] sm:$0xff] %vm3595, %v942
  %3635 = vst.msk [vmem:[%s1 + $0x138] sm:$0xff] %vm3595, %v943
  %3636 = vst.msk [vmem:[%s1 + $0x140] sm:$0xff] %vm3595, %v944
  %3637 = vst.msk [vmem:[%s1 + $0x148] sm:$0xff] %vm3595, %v945
  %3638 = vst.msk [vmem:[%s1 + $0x150] sm:$0xff] %vm3595, %v946
  %3639 = vst.msk [vmem:[%s1 + $0x158] sm:$0xff] %vm3595, %v947
  %3640 = vst.msk [vmem:[%s1 + $0x160] sm:$0xff] %vm3595, %v948
  %3641 = vst.msk [vmem:[%s1 + $0x168] sm:$0xff] %vm3595, %v949
  %3642 = vst.msk [vmem:[%s1 + $0x170] sm:$0xff] %vm3595, %v950
  %3643 = vst.msk [vmem:[%s1 + $0x178] sm:$0xff] %vm3595, %v951
  %3644 = vst.msk [vmem:[%s1 + $0x180] sm:$0xff] %vm3595, %v952
  %3645 = vst.msk [vmem:[%s1 + $0x188] sm:$0xff] %vm3595, %v953
  %3646 = vst.msk [vmem:[%s1 + $0x190] sm:$0xff] %vm3595, %v954
  %3647 = vst.msk [vmem:[%s1 + $0x198] sm:$0xff] %vm3595, %v955
  %3648 = vst.msk [vmem:[%s1 + $0x1a0] sm:$0xff] %vm3595, %v956
  %3649 = vst.msk [vmem:[%s1 + $0x1a8] sm:$0xff] %vm3595, %v957
  %3650 = vst.msk [vmem:[%s1 + $0x1b0] sm:$0xff] %vm3595, %v958
  %3651 = vst.msk [vmem:[%s1 + $0x1b8] sm:$0xff] %vm3595, %v959
  %3652 = vst.msk [vmem:[%s1 + $0x1c0] sm:$0xff] %vm3595, %v960
  %3653 = vst.msk [vmem:[%s1 + $0x1c8] sm:$0xff] %vm3595, %v961
  %3654 = vst.msk [vmem:[%s1 + $0x1d0] sm:$0xff] %vm3595, %v962
  %3655 = vst.msk [vmem:[%s1 + $0x1d8] sm:$0xff] %vm3595, %v963
  %3656 = vst.msk [vmem:[%s1 + $0x1e0] sm:$0xff] %vm3595, %v964
  %3657 = vst.msk [vmem:[%s1 + $0x1e8] sm:$0xff] %vm3595, %v965
  %3658 = vst.msk [vmem:[%s1 + $0x1f0] sm:$0xff] %vm3595, %v966
  %3659 = vst.msk [vmem:[%s1 + $0x1f8] sm:$0xff] %vm3595, %v967
  %3660 = vst.msk [vmem:[%s1 + $0x200] sm:$0xff] %vm3595, %v968
  %3661 = vst.msk [vmem:[%s1 + $0x208] sm:$0xff] %vm3595, %v969
  %3662 = vst.msk [vmem:[%s1 + $0x210] sm:$0xff] %vm3595, %v970
  %3663 = vst.msk [vmem:[%s1 + $0x218] sm:$0xff] %vm3595, %v971
  %3664 = vst.msk [vmem:[%s1 + $0x220] sm:$0xff] %vm3595, %v972
  %3665 = vst.msk [vmem:[%s1 + $0x228] sm:$0xff] %vm3595, %v973
  %3666 = vst.msk [vmem:[%s1 + $0x230] sm:$0xff] %vm3595, %v974
  %3667 = vst.msk [vmem:[%s1 + $0x238] sm:$0xff] %vm3595, %v975
  %3668 = vst.msk [vmem:[%s1 + $0x240] sm:$0xff] %vm3595, %v976
  %3669 = vst.msk [vmem:[%s1 + $0x248] sm:$0xff] %vm3595, %v977
  %3670 = vst.msk [vmem:[%s1 + $0x250] sm:$0xff] %vm3595, %v978
  %3671 = vst.msk [vmem:[%s1 + $0x258] sm:$0xff] %vm3595, %v979
  %3672 = vst.msk [vmem:[%s1 + $0x260] sm:$0xff] %vm3595, %v980
  %3673 = vst.msk [vmem:[%s1 + $0x268] sm:$0xff] %vm3595, %v981
  %3674 = vst.msk [vmem:[%s1 + $0x270] sm:$0xff] %vm3595, %v982
  %3675 = vst.msk [vmem:[%s1 + $0x278] sm:$0xff] %vm3595, %v983
  %3676 = vst.msk [vmem:[%s1 + $0x280] sm:$0xff] %vm3595, %v984
  %3677 = vst.msk [vmem:[%s1 + $0x288] sm:$0xff] %vm3595, %v985
  %3678 = vst.msk [vmem:[%s1 + $0x290] sm:$0xff] %vm3595, %v986
  %3679 = vst.msk [vmem:[%s1 + $0x298] sm:$0xff] %vm3595, %v987
  %3680 = vst.msk [vmem:[%s1 + $0x2a0] sm:$0xff] %vm3595, %v988
  %3681 = vst.msk [vmem:[%s1 + $0x2a8] sm:$0xff] %vm3595, %v989
  %3682 = vst.msk [vmem:[%s1 + $0x2b0] sm:$0xff] %vm3595, %v990
  %3683 = vst.msk [vmem:[%s1 + $0x2b8] sm:$0xff] %vm3595, %v991
  %3684 = vst.msk [vmem:[%s1 + $0x2c0] sm:$0xff] %vm3595, %v992
  %3685 = vst.msk [vmem:[%s1 + $0x2c8] sm:$0xff] %vm3595, %v993
  %3686 = vst.msk [vmem:[%s1 + $0x2d0] sm:$0xff] %vm3595, %v994
  %3687 = vst.msk [vmem:[%s1 + $0x2d8] sm:$0xff] %vm3595, %v995
  %3688 = vst.msk [vmem:[%s1 + $0x2e0] sm:$0xff] %vm3595, %v996
  %3689 = vst.msk [vmem:[%s1 + $0x2e8] sm:$0xff] %vm3595, %v997
  %3690 = vst.msk [vmem:[%s1 + $0x2f0] sm:$0xff] %vm3595, %v998
  %3691 = vst.msk [vmem:[%s1 + $0x2f8] sm:$0xff] %vm3595, %v999
  %3692 = vst.msk [vmem:[%s1 + $0x300] sm:$0xff] %vm3595, %v1000
  %3693 = vst.msk [vmem:[%s1 + $0x308] sm:$0xff] %vm3595, %v1001
  %3694 = vst.msk [vmem:[%s1 + $0x310] sm:$0xff] %vm3595, %v1002
  %3695 = vst.msk [vmem:[%s1 + $0x318] sm:$0xff] %vm3595, %v1003
  %3696 = vst.msk [vmem:[%s1 + $0x320] sm:$0xff] %vm3595, %v1004
  %3697 = vst.msk [vmem:[%s1 + $0x328] sm:$0xff] %vm3595, %v1005
  %3698 = vst.msk [vmem:[%s1 + $0x330] sm:$0xff] %vm3595, %v1006
  %3699 = vst.msk [vmem:[%s1 + $0x338] sm:$0xff] %vm3595, %v1007
  %3700 = vst.msk [vmem:[%s1 + $0x340] sm:$0xff] %vm3595, %v1008
  %3701 = vst.msk [vmem:[%s1 + $0x348] sm:$0xff] %vm3595, %v1009
  %3702 = vst.msk [vmem:[%s1 + $0x350] sm:$0xff] %vm3595, %v1010
  %3703 = vst.msk [vmem:[%s1 + $0x358] sm:$0xff] %vm3595, %v1011
  %3704 = vst.msk [vmem:[%s1 + $0x360] sm:$0xff] %vm3595, %v1012
  %3705 = vst.msk [vmem:[%s1 + $0x368] sm:$0xff] %vm3595, %v1013
  %3706 = vst.msk [vmem:[%s1 + $0x370] sm:$0xff] %vm3595, %v1014
  %3707 = vst.msk [vmem:[%s1 + $0x378] sm:$0xff] %vm3595, %v1015
  %3708 = vst.msk [vmem:[%s1 + $0x380] sm:$0xff] %vm3595, %v1016
  %3709 = vst.msk [vmem:[%s1 + $0x388] sm:$0xff] %vm3595, %v1017
  %3710 = vst.msk [vmem:[%s1 + $0x390] sm:$0xff] %vm3595, %v1018
  %3711 = vst.msk [vmem:[%s1 + $0x398] sm:$0xff] %vm3595, %v1019
  %3712 = vst.msk [vmem:[%s1 + $0x3a0] sm:$0xff] %vm3595, %v1020
  %3713 = vst.msk [vmem:[%s1 + $0x3a8] sm:$0xff] %vm3595, %v1021
  %3714 = vst.msk [vmem:[%s1 + $0x3b0] sm:$0xff] %vm3595, %v1022
  %3715 = vst.msk [vmem:[%s1 + $0x3b8] sm:$0xff] %vm3595, %v1023
  %3716 = vst.msk [vmem:[%s1 + $0x3c0] sm:$0xff] %vm3595, %v1024
  %3717 = vst.msk [vmem:[%s1 + $0x3c8] sm:$0xff] %vm3595, %v1025
  %3718 = vst.msk [vmem:[%s1 + $0x3d0] sm:$0xff] %vm3595, %v1026
  %3719 = vst.msk [vmem:[%s1 + $0x3d8] sm:$0xff] %vm3595, %v1027
  %3720 = vst.msk [vmem:[%s1 + $0x3e0] sm:$0xff] %vm3595, %v1028
  %3721 = vst.msk [vmem:[%s1 + $0x3e8] sm:$0xff] %vm3595, %v1029
  %3722 = vst.msk [vmem:[%s1 + $0x3f0] sm:$0xff] %vm3595, %v1030
  %3723 = vst.msk [vmem:[%s1 + $0x3f8] sm:$0xff] %vm3595, %v1031
  %3852 = vrot.lane.b32.xlu0 %v3467, 12
  %v3853 = vpop.permute.xlu0 %3852
  %3854 = vrot.lane.b32.xlu0 %v3468, 12
  %v3855 = vpop.permute.xlu0 %3854
  %3856 = vrot.lane.b32.xlu0 %v3469, 12
  %v3857 = vpop.permute.xlu0 %3856
  %3858 = vrot.lane.b32.xlu0 %v3470, 12
  %v3859 = vpop.permute.xlu0 %3858
  %3860 = vrot.lane.b32.xlu0 %v3471, 12
  %v3861 = vpop.permute.xlu0 %3860
  %3862 = vrot.lane.b32.xlu0 %v3472, 12
  %v3863 = vpop.permute.xlu0 %3862
  %3864 = vrot.lane.b32.xlu0 %v3473, 12
  %v3865 = vpop.permute.xlu0 %3864
  %3866 = vrot.lane.b32.xlu0 %v3474, 12
  %v3867 = vpop.permute.xlu0 %3866
  %3868 = vrot.lane.b32.xlu0 %v3475, 12
  %v3869 = vpop.permute.xlu0 %3868
  %3870 = vrot.lane.b32.xlu0 %v3476, 12
  %v3871 = vpop.permute.xlu0 %3870
  %3872 = vrot.lane.b32.xlu0 %v3477, 12
  %v3873 = vpop.permute.xlu0 %3872
  %3874 = vrot.lane.b32.xlu0 %v3478, 12
  %v3875 = vpop.permute.xlu0 %3874
  %3876 = vrot.lane.b32.xlu0 %v3479, 12
  %v3877 = vpop.permute.xlu0 %3876
  %3878 = vrot.lane.b32.xlu0 %v3480, 12
  %v3879 = vpop.permute.xlu0 %3878
  %3880 = vrot.lane.b32.xlu0 %v3481, 12
  %v3881 = vpop.permute.xlu0 %3880
  %3882 = vrot.lane.b32.xlu0 %v3482, 12
  %v3883 = vpop.permute.xlu0 %3882
  %3884 = vrot.lane.b32.xlu0 %v3483, 12
  %v3885 = vpop.permute.xlu0 %3884
  %3886 = vrot.lane.b32.xlu0 %v3484, 12
  %v3887 = vpop.permute.xlu0 %3886
  %3888 = vrot.lane.b32.xlu0 %v3485, 12
  %v3889 = vpop.permute.xlu0 %3888
  %3890 = vrot.lane.b32.xlu0 %v3486, 12
  %v3891 = vpop.permute.xlu0 %3890
  %3892 = vrot.lane.b32.xlu0 %v3487, 12
  %v3893 = vpop.permute.xlu0 %3892
  %3894 = vrot.lane.b32.xlu0 %v3488, 12
  %v3895 = vpop.permute.xlu0 %3894
  %3896 = vrot.lane.b32.xlu0 %v3489, 12
  %v3897 = vpop.permute.xlu0 %3896
  %3898 = vrot.lane.b32.xlu0 %v3490, 12
  %v3899 = vpop.permute.xlu0 %3898
  %3900 = vrot.lane.b32.xlu0 %v3491, 12
  %v3901 = vpop.permute.xlu0 %3900
  %3902 = vrot.lane.b32.xlu0 %v3492, 12
  %v3903 = vpop.permute.xlu0 %3902
  %3904 = vrot.lane.b32.xlu0 %v3493, 12
  %v3905 = vpop.permute.xlu0 %3904
  %3906 = vrot.lane.b32.xlu0 %v3494, 12
  %v3907 = vpop.permute.xlu0 %3906
  %3908 = vrot.lane.b32.xlu0 %v3495, 12
  %v3909 = vpop.permute.xlu0 %3908
  %3910 = vrot.lane.b32.xlu0 %v3496, 12
  %v3911 = vpop.permute.xlu0 %3910
  %3912 = vrot.lane.b32.xlu0 %v3497, 12
  %v3913 = vpop.permute.xlu0 %3912
  %3914 = vrot.lane.b32.xlu0 %v3498, 12
  %v3915 = vpop.permute.xlu0 %3914
  %3916 = vrot.lane.b32.xlu0 %v3499, 12
  %v3917 = vpop.permute.xlu0 %3916
  %3918 = vrot.lane.b32.xlu0 %v3500, 12
  %v3919 = vpop.permute.xlu0 %3918
  %3920 = vrot.lane.b32.xlu0 %v3501, 12
  %v3921 = vpop.permute.xlu0 %3920
  %3922 = vrot.lane.b32.xlu0 %v3502, 12
  %v3923 = vpop.permute.xlu0 %3922
  %3924 = vrot.lane.b32.xlu0 %v3503, 12
  %v3925 = vpop.permute.xlu0 %3924
  %3926 = vrot.lane.b32.xlu0 %v3504, 12
  %v3927 = vpop.permute.xlu0 %3926
  %3928 = vrot.lane.b32.xlu0 %v3505, 12
  %v3929 = vpop.permute.xlu0 %3928
  %3930 = vrot.lane.b32.xlu0 %v3506, 12
  %v3931 = vpop.permute.xlu0 %3930
  %3932 = vrot.lane.b32.xlu0 %v3507, 12
  %v3933 = vpop.permute.xlu0 %3932
  %3934 = vrot.lane.b32.xlu0 %v3508, 12
  %v3935 = vpop.permute.xlu0 %3934
  %3936 = vrot.lane.b32.xlu0 %v3509, 12
  %v3937 = vpop.permute.xlu0 %3936
  %3938 = vrot.lane.b32.xlu0 %v3510, 12
  %v3939 = vpop.permute.xlu0 %3938
  %3940 = vrot.lane.b32.xlu0 %v3511, 12
  %v3941 = vpop.permute.xlu0 %3940
  %3942 = vrot.lane.b32.xlu0 %v3512, 12
  %v3943 = vpop.permute.xlu0 %3942
  %3944 = vrot.lane.b32.xlu0 %v3513, 12
  %v3945 = vpop.permute.xlu0 %3944
  %3946 = vrot.lane.b32.xlu0 %v3514, 12
  %v3947 = vpop.permute.xlu0 %3946
  %3948 = vrot.lane.b32.xlu0 %v3515, 12
  %v3949 = vpop.permute.xlu0 %3948
  %3950 = vrot.lane.b32.xlu0 %v3516, 12
  %v3951 = vpop.permute.xlu0 %3950
  %3952 = vrot.lane.b32.xlu0 %v3517, 12
  %v3953 = vpop.permute.xlu0 %3952
  %3954 = vrot.lane.b32.xlu0 %v3518, 12
  %v3955 = vpop.permute.xlu0 %3954
  %3956 = vrot.lane.b32.xlu0 %v3519, 12
  %v3957 = vpop.permute.xlu0 %3956
  %3958 = vrot.lane.b32.xlu0 %v3520, 12
  %v3959 = vpop.permute.xlu0 %3958
  %3960 = vrot.lane.b32.xlu0 %v3521, 12
  %v3961 = vpop.permute.xlu0 %3960
  %3962 = vrot.lane.b32.xlu0 %v3522, 12
  %v3963 = vpop.permute.xlu0 %3962
  %3964 = vrot.lane.b32.xlu0 %v3523, 12
  %v3965 = vpop.permute.xlu0 %3964
  %3966 = vrot.lane.b32.xlu0 %v3524, 12
  %v3967 = vpop.permute.xlu0 %3966
  %3968 = vrot.lane.b32.xlu0 %v3525, 12
  %v3969 = vpop.permute.xlu0 %3968
  %3970 = vrot.lane.b32.xlu0 %v3526, 12
  %v3971 = vpop.permute.xlu0 %3970
  %3972 = vrot.lane.b32.xlu0 %v3527, 12
  %v3973 = vpop.permute.xlu0 %3972
  %3974 = vrot.lane.b32.xlu0 %v3528, 12
  %v3975 = vpop.permute.xlu0 %3974
  %3976 = vrot.lane.b32.xlu0 %v3529, 12
  %v3977 = vpop.permute.xlu0 %3976
  %3978 = vrot.lane.b32.xlu0 %v3530, 12
  %v3979 = vpop.permute.xlu0 %3978
  %3980 = vrot.lane.b32.xlu0 %v3531, 12
  %v3981 = vpop.permute.xlu0 %3980
  %3982 = vrot.lane.b32.xlu0 %v3532, 12
  %v3983 = vpop.permute.xlu0 %3982
  %3984 = vrot.lane.b32.xlu0 %v3533, 12
  %v3985 = vpop.permute.xlu0 %3984
  %3986 = vrot.lane.b32.xlu0 %v3534, 12
  %v3987 = vpop.permute.xlu0 %3986
  %3988 = vrot.lane.b32.xlu0 %v3535, 12
  %v3989 = vpop.permute.xlu0 %3988
  %3990 = vrot.lane.b32.xlu0 %v3536, 12
  %v3991 = vpop.permute.xlu0 %3990
  %3992 = vrot.lane.b32.xlu0 %v3537, 12
  %v3993 = vpop.permute.xlu0 %3992
  %3994 = vrot.lane.b32.xlu0 %v3538, 12
  %v3995 = vpop.permute.xlu0 %3994
  %3996 = vrot.lane.b32.xlu0 %v3539, 12
  %v3997 = vpop.permute.xlu0 %3996
  %3998 = vrot.lane.b32.xlu0 %v3540, 12
  %v3999 = vpop.permute.xlu0 %3998
  %4000 = vrot.lane.b32.xlu0 %v3541, 12
  %v4001 = vpop.permute.xlu0 %4000
  %4002 = vrot.lane.b32.xlu0 %v3542, 12
  %v4003 = vpop.permute.xlu0 %4002
  %4004 = vrot.lane.b32.xlu0 %v3543, 12
  %v4005 = vpop.permute.xlu0 %4004
  %4006 = vrot.lane.b32.xlu0 %v3544, 12
  %v4007 = vpop.permute.xlu0 %4006
  %4008 = vrot.lane.b32.xlu0 %v3545, 12
  %v4009 = vpop.permute.xlu0 %4008
  %4010 = vrot.lane.b32.xlu0 %v3546, 12
  %v4011 = vpop.permute.xlu0 %4010
  %4012 = vrot.lane.b32.xlu0 %v3547, 12
  %v4013 = vpop.permute.xlu0 %4012
  %4014 = vrot.lane.b32.xlu0 %v3548, 12
  %v4015 = vpop.permute.xlu0 %4014
  %4016 = vrot.lane.b32.xlu0 %v3549, 12
  %v4017 = vpop.permute.xlu0 %4016
  %4018 = vrot.lane.b32.xlu0 %v3550, 12
  %v4019 = vpop.permute.xlu0 %4018
  %4020 = vrot.lane.b32.xlu0 %v3551, 12
  %v4021 = vpop.permute.xlu0 %4020
  %4022 = vrot.lane.b32.xlu0 %v3552, 12
  %v4023 = vpop.permute.xlu0 %4022
  %4024 = vrot.lane.b32.xlu0 %v3553, 12
  %v4025 = vpop.permute.xlu0 %4024
  %4026 = vrot.lane.b32.xlu0 %v3554, 12
  %v4027 = vpop.permute.xlu0 %4026
  %4028 = vrot.lane.b32.xlu0 %v3555, 12
  %v4029 = vpop.permute.xlu0 %4028
  %4030 = vrot.lane.b32.xlu0 %v3556, 12
  %v4031 = vpop.permute.xlu0 %4030
  %4032 = vrot.lane.b32.xlu0 %v3557, 12
  %v4033 = vpop.permute.xlu0 %4032
  %4034 = vrot.lane.b32.xlu0 %v3558, 12
  %v4035 = vpop.permute.xlu0 %4034
  %4036 = vrot.lane.b32.xlu0 %v3559, 12
  %v4037 = vpop.permute.xlu0 %4036
  %4038 = vrot.lane.b32.xlu0 %v3560, 12
  %v4039 = vpop.permute.xlu0 %4038
  %4040 = vrot.lane.b32.xlu0 %v3561, 12
  %v4041 = vpop.permute.xlu0 %4040
  %4042 = vrot.lane.b32.xlu0 %v3562, 12
  %v4043 = vpop.permute.xlu0 %4042
  %4044 = vrot.lane.b32.xlu0 %v3563, 12
  %v4045 = vpop.permute.xlu0 %4044
  %4046 = vrot.lane.b32.xlu0 %v3564, 12
  %v4047 = vpop.permute.xlu0 %4046
  %4048 = vrot.lane.b32.xlu0 %v3565, 12
  %v4049 = vpop.permute.xlu0 %4048
  %4050 = vrot.lane.b32.xlu0 %v3566, 12
  %v4051 = vpop.permute.xlu0 %4050
  %4052 = vrot.lane.b32.xlu0 %v3567, 12
  %v4053 = vpop.permute.xlu0 %4052
  %4054 = vrot.lane.b32.xlu0 %v3568, 12
  %v4055 = vpop.permute.xlu0 %4054
  %4056 = vrot.lane.b32.xlu0 %v3569, 12
  %v4057 = vpop.permute.xlu0 %4056
  %4058 = vrot.lane.b32.xlu0 %v3570, 12
  %v4059 = vpop.permute.xlu0 %4058
  %4060 = vrot.lane.b32.xlu0 %v3571, 12
  %v4061 = vpop.permute.xlu0 %4060
  %4062 = vrot.lane.b32.xlu0 %v3572, 12
  %v4063 = vpop.permute.xlu0 %4062
  %4064 = vrot.lane.b32.xlu0 %v3573, 12
  %v4065 = vpop.permute.xlu0 %4064
  %4066 = vrot.lane.b32.xlu0 %v3574, 12
  %v4067 = vpop.permute.xlu0 %4066
  %4068 = vrot.lane.b32.xlu0 %v3575, 12
  %v4069 = vpop.permute.xlu0 %4068
  %4070 = vrot.lane.b32.xlu0 %v3576, 12
  %v4071 = vpop.permute.xlu0 %4070
  %4072 = vrot.lane.b32.xlu0 %v3577, 12
  %v4073 = vpop.permute.xlu0 %4072
  %4074 = vrot.lane.b32.xlu0 %v3578, 12
  %v4075 = vpop.permute.xlu0 %4074
  %4076 = vrot.lane.b32.xlu0 %v3579, 12
  %v4077 = vpop.permute.xlu0 %4076
  %4078 = vrot.lane.b32.xlu0 %v3580, 12
  %v4079 = vpop.permute.xlu0 %4078
  %4080 = vrot.lane.b32.xlu0 %v3581, 12
  %v4081 = vpop.permute.xlu0 %4080
  %4082 = vrot.lane.b32.xlu0 %v3582, 12
  %v4083 = vpop.permute.xlu0 %4082
  %4084 = vrot.lane.b32.xlu0 %v3583, 12
  %v4085 = vpop.permute.xlu0 %4084
  %4086 = vrot.lane.b32.xlu0 %v3584, 12
  %v4087 = vpop.permute.xlu0 %4086
  %4088 = vrot.lane.b32.xlu0 %v3585, 12
  %v4089 = vpop.permute.xlu0 %4088
  %4090 = vrot.lane.b32.xlu0 %v3586, 12
  %v4091 = vpop.permute.xlu0 %4090
  %4092 = vrot.lane.b32.xlu0 %v3587, 12
  %v4093 = vpop.permute.xlu0 %4092
  %4094 = vrot.lane.b32.xlu0 %v3588, 12
  %v4095 = vpop.permute.xlu0 %4094
  %4096 = vrot.lane.b32.xlu0 %v3589, 12
  %v4097 = vpop.permute.xlu0 %4096
  %4098 = vrot.lane.b32.xlu0 %v3590, 12
  %v4099 = vpop.permute.xlu0 %4098
  %4100 = vrot.lane.b32.xlu0 %v3591, 12
  %v4101 = vpop.permute.xlu0 %4100
  %4102 = vrot.lane.b32.xlu0 %v3592, 12
  %v4103 = vpop.permute.xlu0 %4102
  %4104 = vrot.lane.b32.xlu0 %v3593, 12
  %v4105 = vpop.permute.xlu0 %4104
  %4106 = vrot.lane.b32.xlu0 %v3594, 12
  %v4107 = vpop.permute.xlu0 %4106
  %v4236 = vmul.f32 %v8, %v3853
  %v4237 = vmul.f32 %v9, %v3855
  %v4238 = vmul.f32 %v10, %v3857
  %v4239 = vmul.f32 %v11, %v3859
  %v4240 = vmul.f32 %v12, %v3861
  %v4241 = vmul.f32 %v13, %v3863
  %v4242 = vmul.f32 %v14, %v3865
  %v4243 = vmul.f32 %v15, %v3867
  %v4244 = vmul.f32 %v16, %v3869
  %v4245 = vmul.f32 %v17, %v3871
  %v4246 = vmul.f32 %v18, %v3873
  %v4247 = vmul.f32 %v19, %v3875
  %v4248 = vmul.f32 %v20, %v3877
  %v4249 = vmul.f32 %v21, %v3879
  %v4250 = vmul.f32 %v22, %v3881
  %v4251 = vmul.f32 %v23, %v3883
  %v4252 = vmul.f32 %v24, %v3885
  %v4253 = vmul.f32 %v25, %v3887
  %v4254 = vmul.f32 %v26, %v3889
  %v4255 = vmul.f32 %v27, %v3891
  %v4256 = vmul.f32 %v28, %v3893
  %v4257 = vmul.f32 %v29, %v3895
  %v4258 = vmul.f32 %v30, %v3897
  %v4259 = vmul.f32 %v31, %v3899
  %v4260 = vmul.f32 %v32, %v3901
  %v4261 = vmul.f32 %v33, %v3903
  %v4262 = vmul.f32 %v34, %v3905
  %v4263 = vmul.f32 %v35, %v3907
  %v4264 = vmul.f32 %v36, %v3909
  %v4265 = vmul.f32 %v37, %v3911
  %v4266 = vmul.f32 %v38, %v3913
  %v4267 = vmul.f32 %v39, %v3915
  %v4268 = vmul.f32 %v40, %v3917
  %v4269 = vmul.f32 %v41, %v3919
  %v4270 = vmul.f32 %v42, %v3921
  %v4271 = vmul.f32 %v43, %v3923
  %v4272 = vmul.f32 %v44, %v3925
  %v4273 = vmul.f32 %v45, %v3927
  %v4274 = vmul.f32 %v46, %v3929
  %v4275 = vmul.f32 %v47, %v3931
  %v4276 = vmul.f32 %v48, %v3933
  %v4277 = vmul.f32 %v49, %v3935
  %v4278 = vmul.f32 %v50, %v3937
  %v4279 = vmul.f32 %v51, %v3939
  %v4280 = vmul.f32 %v52, %v3941
  %v4281 = vmul.f32 %v53, %v3943
  %v4282 = vmul.f32 %v54, %v3945
  %v4283 = vmul.f32 %v55, %v3947
  %v4284 = vmul.f32 %v56, %v3949
  %v4285 = vmul.f32 %v57, %v3951
  %v4286 = vmul.f32 %v58, %v3953
  %v4287 = vmul.f32 %v59, %v3955
  %v4288 = vmul.f32 %v60, %v3957
  %v4289 = vmul.f32 %v61, %v3959
  %v4290 = vmul.f32 %v62, %v3961
  %v4291 = vmul.f32 %v63, %v3963
  %v4292 = vmul.f32 %v64, %v3965
  %v4293 = vmul.f32 %v65, %v3967
  %v4294 = vmul.f32 %v66, %v3969
  %v4295 = vmul.f32 %v67, %v3971
  %v4296 = vmul.f32 %v68, %v3973
  %v4297 = vmul.f32 %v69, %v3975
  %v4298 = vmul.f32 %v70, %v3977
  %v4299 = vmul.f32 %v71, %v3979
  %v4300 = vmul.f32 %v72, %v3981
  %v4301 = vmul.f32 %v73, %v3983
  %v4302 = vmul.f32 %v74, %v3985
  %v4303 = vmul.f32 %v75, %v3987
  %v4304 = vmul.f32 %v76, %v3989
  %v4305 = vmul.f32 %v77, %v3991
  %v4306 = vmul.f32 %v78, %v3993
  %v4307 = vmul.f32 %v79, %v3995
  %v4308 = vmul.f32 %v80, %v3997
  %v4309 = vmul.f32 %v81, %v3999
  %v4310 = vmul.f32 %v82, %v4001
  %v4311 = vmul.f32 %v83, %v4003
  %v4312 = vmul.f32 %v84, %v4005
  %v4313 = vmul.f32 %v85, %v4007
  %v4314 = vmul.f32 %v86, %v4009
  %v4315 = vmul.f32 %v87, %v4011
  %v4316 = vmul.f32 %v88, %v4013
  %v4317 = vmul.f32 %v89, %v4015
  %v4318 = vmul.f32 %v90, %v4017
  %v4319 = vmul.f32 %v91, %v4019
  %v4320 = vmul.f32 %v92, %v4021
  %v4321 = vmul.f32 %v93, %v4023
  %v4322 = vmul.f32 %v94, %v4025
  %v4323 = vmul.f32 %v95, %v4027
  %v4324 = vmul.f32 %v96, %v4029
  %v4325 = vmul.f32 %v97, %v4031
  %v4326 = vmul.f32 %v98, %v4033
  %v4327 = vmul.f32 %v99, %v4035
  %v4328 = vmul.f32 %v100, %v4037
  %v4329 = vmul.f32 %v101, %v4039
  %v4330 = vmul.f32 %v102, %v4041
  %v4331 = vmul.f32 %v103, %v4043
  %v4332 = vmul.f32 %v104, %v4045
  %v4333 = vmul.f32 %v105, %v4047
  %v4334 = vmul.f32 %v106, %v4049
  %v4335 = vmul.f32 %v107, %v4051
  %v4336 = vmul.f32 %v108, %v4053
  %v4337 = vmul.f32 %v109, %v4055
  %v4338 = vmul.f32 %v110, %v4057
  %v4339 = vmul.f32 %v111, %v4059
  %v4340 = vmul.f32 %v112, %v4061
  %v4341 = vmul.f32 %v113, %v4063
  %v4342 = vmul.f32 %v114, %v4065
  %v4343 = vmul.f32 %v115, %v4067
  %v4344 = vmul.f32 %v116, %v4069
  %v4345 = vmul.f32 %v117, %v4071
  %v4346 = vmul.f32 %v118, %v4073
  %v4347 = vmul.f32 %v119, %v4075
  %v4348 = vmul.f32 %v120, %v4077
  %v4349 = vmul.f32 %v121, %v4079
  %v4350 = vmul.f32 %v122, %v4081
  %v4351 = vmul.f32 %v123, %v4083
  %v4352 = vmul.f32 %v124, %v4085
  %v4353 = vmul.f32 %v125, %v4087
  %v4354 = vmul.f32 %v126, %v4089
  %v4355 = vmul.f32 %v127, %v4091
  %v4356 = vmul.f32 %v128, %v4093
  %v4357 = vmul.f32 %v129, %v4095
  %v4358 = vmul.f32 %v130, %v4097
  %v4359 = vmul.f32 %v131, %v4099
  %v4360 = vmul.f32 %v132, %v4101
  %v4361 = vmul.f32 %v133, %v4103
  %v4362 = vmul.f32 %v134, %v4105
  %v4363 = vmul.f32 %v135, %v4107
  %4492 = vrot.lane.b32.xlu0 %v4236, 124
  %v4493 = vpop.permute.xlu0 %4492
  %4494 = vrot.lane.b32.xlu0 %v4237, 124
  %v4495 = vpop.permute.xlu0 %4494
  %4496 = vrot.lane.b32.xlu0 %v4238, 124
  %v4497 = vpop.permute.xlu0 %4496
  %4498 = vrot.lane.b32.xlu0 %v4239, 124
  %v4499 = vpop.permute.xlu0 %4498
  %4500 = vrot.lane.b32.xlu0 %v4240, 124
  %v4501 = vpop.permute.xlu0 %4500
  %4502 = vrot.lane.b32.xlu0 %v4241, 124
  %v4503 = vpop.permute.xlu0 %4502
  %4504 = vrot.lane.b32.xlu0 %v4242, 124
  %v4505 = vpop.permute.xlu0 %4504
  %4506 = vrot.lane.b32.xlu0 %v4243, 124
  %v4507 = vpop.permute.xlu0 %4506
  %4508 = vrot.lane.b32.xlu0 %v4244, 124
  %v4509 = vpop.permute.xlu0 %4508
  %4510 = vrot.lane.b32.xlu0 %v4245, 124
  %v4511 = vpop.permute.xlu0 %4510
  %4512 = vrot.lane.b32.xlu0 %v4246, 124
  %v4513 = vpop.permute.xlu0 %4512
  %4514 = vrot.lane.b32.xlu0 %v4247, 124
  %v4515 = vpop.permute.xlu0 %4514
  %4516 = vrot.lane.b32.xlu0 %v4248, 124
  %v4517 = vpop.permute.xlu0 %4516
  %4518 = vrot.lane.b32.xlu0 %v4249, 124
  %v4519 = vpop.permute.xlu0 %4518
  %4520 = vrot.lane.b32.xlu0 %v4250, 124
  %v4521 = vpop.permute.xlu0 %4520
  %4522 = vrot.lane.b32.xlu0 %v4251, 124
  %v4523 = vpop.permute.xlu0 %4522
  %4524 = vrot.lane.b32.xlu0 %v4252, 124
  %v4525 = vpop.permute.xlu0 %4524
  %4526 = vrot.lane.b32.xlu0 %v4253, 124
  %v4527 = vpop.permute.xlu0 %4526
  %4528 = vrot.lane.b32.xlu0 %v4254, 124
  %v4529 = vpop.permute.xlu0 %4528
  %4530 = vrot.lane.b32.xlu0 %v4255, 124
  %v4531 = vpop.permute.xlu0 %4530
  %4532 = vrot.lane.b32.xlu0 %v4256, 124
  %v4533 = vpop.permute.xlu0 %4532
  %4534 = vrot.lane.b32.xlu0 %v4257, 124
  %v4535 = vpop.permute.xlu0 %4534
  %4536 = vrot.lane.b32.xlu0 %v4258, 124
  %v4537 = vpop.permute.xlu0 %4536
  %4538 = vrot.lane.b32.xlu0 %v4259, 124
  %v4539 = vpop.permute.xlu0 %4538
  %4540 = vrot.lane.b32.xlu0 %v4260, 124
  %v4541 = vpop.permute.xlu0 %4540
  %4542 = vrot.lane.b32.xlu0 %v4261, 124
  %v4543 = vpop.permute.xlu0 %4542
  %4544 = vrot.lane.b32.xlu0 %v4262, 124
  %v4545 = vpop.permute.xlu0 %4544
  %4546 = vrot.lane.b32.xlu0 %v4263, 124
  %v4547 = vpop.permute.xlu0 %4546
  %4548 = vrot.lane.b32.xlu0 %v4264, 124
  %v4549 = vpop.permute.xlu0 %4548
  %4550 = vrot.lane.b32.xlu0 %v4265, 124
  %v4551 = vpop.permute.xlu0 %4550
  %4552 = vrot.lane.b32.xlu0 %v4266, 124
  %v4553 = vpop.permute.xlu0 %4552
  %4554 = vrot.lane.b32.xlu0 %v4267, 124
  %v4555 = vpop.permute.xlu0 %4554
  %4556 = vrot.lane.b32.xlu0 %v4268, 124
  %v4557 = vpop.permute.xlu0 %4556
  %4558 = vrot.lane.b32.xlu0 %v4269, 124
  %v4559 = vpop.permute.xlu0 %4558
  %4560 = vrot.lane.b32.xlu0 %v4270, 124
  %v4561 = vpop.permute.xlu0 %4560
  %4562 = vrot.lane.b32.xlu0 %v4271, 124
  %v4563 = vpop.permute.xlu0 %4562
  %4564 = vrot.lane.b32.xlu0 %v4272, 124
  %v4565 = vpop.permute.xlu0 %4564
  %4566 = vrot.lane.b32.xlu0 %v4273, 124
  %v4567 = vpop.permute.xlu0 %4566
  %4568 = vrot.lane.b32.xlu0 %v4274, 124
  %v4569 = vpop.permute.xlu0 %4568
  %4570 = vrot.lane.b32.xlu0 %v4275, 124
  %v4571 = vpop.permute.xlu0 %4570
  %4572 = vrot.lane.b32.xlu0 %v4276, 124
  %v4573 = vpop.permute.xlu0 %4572
  %4574 = vrot.lane.b32.xlu0 %v4277, 124
  %v4575 = vpop.permute.xlu0 %4574
  %4576 = vrot.lane.b32.xlu0 %v4278, 124
  %v4577 = vpop.permute.xlu0 %4576
  %4578 = vrot.lane.b32.xlu0 %v4279, 124
  %v4579 = vpop.permute.xlu0 %4578
  %4580 = vrot.lane.b32.xlu0 %v4280, 124
  %v4581 = vpop.permute.xlu0 %4580
  %4582 = vrot.lane.b32.xlu0 %v4281, 124
  %v4583 = vpop.permute.xlu0 %4582
  %4584 = vrot.lane.b32.xlu0 %v4282, 124
  %v4585 = vpop.permute.xlu0 %4584
  %4586 = vrot.lane.b32.xlu0 %v4283, 124
  %v4587 = vpop.permute.xlu0 %4586
  %4588 = vrot.lane.b32.xlu0 %v4284, 124
  %v4589 = vpop.permute.xlu0 %4588
  %4590 = vrot.lane.b32.xlu0 %v4285, 124
  %v4591 = vpop.permute.xlu0 %4590
  %4592 = vrot.lane.b32.xlu0 %v4286, 124
  %v4593 = vpop.permute.xlu0 %4592
  %4594 = vrot.lane.b32.xlu0 %v4287, 124
  %v4595 = vpop.permute.xlu0 %4594
  %4596 = vrot.lane.b32.xlu0 %v4288, 124
  %v4597 = vpop.permute.xlu0 %4596
  %4598 = vrot.lane.b32.xlu0 %v4289, 124
  %v4599 = vpop.permute.xlu0 %4598
  %4600 = vrot.lane.b32.xlu0 %v4290, 124
  %v4601 = vpop.permute.xlu0 %4600
  %4602 = vrot.lane.b32.xlu0 %v4291, 124
  %v4603 = vpop.permute.xlu0 %4602
  %4604 = vrot.lane.b32.xlu0 %v4292, 124
  %v4605 = vpop.permute.xlu0 %4604
  %4606 = vrot.lane.b32.xlu0 %v4293, 124
  %v4607 = vpop.permute.xlu0 %4606
  %4608 = vrot.lane.b32.xlu0 %v4294, 124
  %v4609 = vpop.permute.xlu0 %4608
  %4610 = vrot.lane.b32.xlu0 %v4295, 124
  %v4611 = vpop.permute.xlu0 %4610
  %4612 = vrot.lane.b32.xlu0 %v4296, 124
  %v4613 = vpop.permute.xlu0 %4612
  %4614 = vrot.lane.b32.xlu0 %v4297, 124
  %v4615 = vpop.permute.xlu0 %4614
  %4616 = vrot.lane.b32.xlu0 %v4298, 124
  %v4617 = vpop.permute.xlu0 %4616
  %4618 = vrot.lane.b32.xlu0 %v4299, 124
  %v4619 = vpop.permute.xlu0 %4618
  %4620 = vrot.lane.b32.xlu0 %v4300, 124
  %v4621 = vpop.permute.xlu0 %4620
  %4622 = vrot.lane.b32.xlu0 %v4301, 124
  %v4623 = vpop.permute.xlu0 %4622
  %4624 = vrot.lane.b32.xlu0 %v4302, 124
  %v4625 = vpop.permute.xlu0 %4624
  %4626 = vrot.lane.b32.xlu0 %v4303, 124
  %v4627 = vpop.permute.xlu0 %4626
  %4628 = vrot.lane.b32.xlu0 %v4304, 124
  %v4629 = vpop.permute.xlu0 %4628
  %4630 = vrot.lane.b32.xlu0 %v4305, 124
  %v4631 = vpop.permute.xlu0 %4630
  %4632 = vrot.lane.b32.xlu0 %v4306, 124
  %v4633 = vpop.permute.xlu0 %4632
  %4634 = vrot.lane.b32.xlu0 %v4307, 124
  %v4635 = vpop.permute.xlu0 %4634
  %4636 = vrot.lane.b32.xlu0 %v4308, 124
  %v4637 = vpop.permute.xlu0 %4636
  %4638 = vrot.lane.b32.xlu0 %v4309, 124
  %v4639 = vpop.permute.xlu0 %4638
  %4640 = vrot.lane.b32.xlu0 %v4310, 124
  %v4641 = vpop.permute.xlu0 %4640
  %4642 = vrot.lane.b32.xlu0 %v4311, 124
  %v4643 = vpop.permute.xlu0 %4642
  %4644 = vrot.lane.b32.xlu0 %v4312, 124
  %v4645 = vpop.permute.xlu0 %4644
  %4646 = vrot.lane.b32.xlu0 %v4313, 124
  %v4647 = vpop.permute.xlu0 %4646
  %4648 = vrot.lane.b32.xlu0 %v4314, 124
  %v4649 = vpop.permute.xlu0 %4648
  %4650 = vrot.lane.b32.xlu0 %v4315, 124
  %v4651 = vpop.permute.xlu0 %4650
  %4652 = vrot.lane.b32.xlu0 %v4316, 124
  %v4653 = vpop.permute.xlu0 %4652
  %4654 = vrot.lane.b32.xlu0 %v4317, 124
  %v4655 = vpop.permute.xlu0 %4654
  %4656 = vrot.lane.b32.xlu0 %v4318, 124
  %v4657 = vpop.permute.xlu0 %4656
  %4658 = vrot.lane.b32.xlu0 %v4319, 124
  %v4659 = vpop.permute.xlu0 %4658
  %4660 = vrot.lane.b32.xlu0 %v4320, 124
  %v4661 = vpop.permute.xlu0 %4660
  %4662 = vrot.lane.b32.xlu0 %v4321, 124
  %v4663 = vpop.permute.xlu0 %4662
  %4664 = vrot.lane.b32.xlu0 %v4322, 124
  %v4665 = vpop.permute.xlu0 %4664
  %4666 = vrot.lane.b32.xlu0 %v4323, 124
  %v4667 = vpop.permute.xlu0 %4666
  %4668 = vrot.lane.b32.xlu0 %v4324, 124
  %v4669 = vpop.permute.xlu0 %4668
  %4670 = vrot.lane.b32.xlu0 %v4325, 124
  %v4671 = vpop.permute.xlu0 %4670
  %4672 = vrot.lane.b32.xlu0 %v4326, 124
  %v4673 = vpop.permute.xlu0 %4672
  %4674 = vrot.lane.b32.xlu0 %v4327, 124
  %v4675 = vpop.permute.xlu0 %4674
  %4676 = vrot.lane.b32.xlu0 %v4328, 124
  %v4677 = vpop.permute.xlu0 %4676
  %4678 = vrot.lane.b32.xlu0 %v4329, 124
  %v4679 = vpop.permute.xlu0 %4678
  %4680 = vrot.lane.b32.xlu0 %v4330, 124
  %v4681 = vpop.permute.xlu0 %4680
  %4682 = vrot.lane.b32.xlu0 %v4331, 124
  %v4683 = vpop.permute.xlu0 %4682
  %4684 = vrot.lane.b32.xlu0 %v4332, 124
  %v4685 = vpop.permute.xlu0 %4684
  %4686 = vrot.lane.b32.xlu0 %v4333, 124
  %v4687 = vpop.permute.xlu0 %4686
  %4688 = vrot.lane.b32.xlu0 %v4334, 124
  %v4689 = vpop.permute.xlu0 %4688
  %4690 = vrot.lane.b32.xlu0 %v4335, 124
  %v4691 = vpop.permute.xlu0 %4690
  %4692 = vrot.lane.b32.xlu0 %v4336, 124
  %v4693 = vpop.permute.xlu0 %4692
  %4694 = vrot.lane.b32.xlu0 %v4337, 124
  %v4695 = vpop.permute.xlu0 %4694
  %4696 = vrot.lane.b32.xlu0 %v4338, 124
  %v4697 = vpop.permute.xlu0 %4696
  %4698 = vrot.lane.b32.xlu0 %v4339, 124
  %v4699 = vpop.permute.xlu0 %4698
  %4700 = vrot.lane.b32.xlu0 %v4340, 124
  %v4701 = vpop.permute.xlu0 %4700
  %4702 = vrot.lane.b32.xlu0 %v4341, 124
  %v4703 = vpop.permute.xlu0 %4702
  %4704 = vrot.lane.b32.xlu0 %v4342, 124
  %v4705 = vpop.permute.xlu0 %4704
  %4706 = vrot.lane.b32.xlu0 %v4343, 124
  %v4707 = vpop.permute.xlu0 %4706
  %4708 = vrot.lane.b32.xlu0 %v4344, 124
  %v4709 = vpop.permute.xlu0 %4708
  %4710 = vrot.lane.b32.xlu0 %v4345, 124
  %v4711 = vpop.permute.xlu0 %4710
  %4712 = vrot.lane.b32.xlu0 %v4346, 124
  %v4713 = vpop.permute.xlu0 %4712
  %4714 = vrot.lane.b32.xlu0 %v4347, 124
  %v4715 = vpop.permute.xlu0 %4714
  %4716 = vrot.lane.b32.xlu0 %v4348, 124
  %v4717 = vpop.permute.xlu0 %4716
  %4718 = vrot.lane.b32.xlu0 %v4349, 124
  %v4719 = vpop.permute.xlu0 %4718
  %4720 = vrot.lane.b32.xlu0 %v4350, 124
  %v4721 = vpop.permute.xlu0 %4720
  %4722 = vrot.lane.b32.xlu0 %v4351, 124
  %v4723 = vpop.permute.xlu0 %4722
  %4724 = vrot.lane.b32.xlu0 %v4352, 124
  %v4725 = vpop.permute.xlu0 %4724
  %4726 = vrot.lane.b32.xlu0 %v4353, 124
  %v4727 = vpop.permute.xlu0 %4726
  %4728 = vrot.lane.b32.xlu0 %v4354, 124
  %v4729 = vpop.permute.xlu0 %4728
  %4730 = vrot.lane.b32.xlu0 %v4355, 124
  %v4731 = vpop.permute.xlu0 %4730
  %4732 = vrot.lane.b32.xlu0 %v4356, 124
  %v4733 = vpop.permute.xlu0 %4732
  %4734 = vrot.lane.b32.xlu0 %v4357, 124
  %v4735 = vpop.permute.xlu0 %4734
  %4736 = vrot.lane.b32.xlu0 %v4358, 124
  %v4737 = vpop.permute.xlu0 %4736
  %4738 = vrot.lane.b32.xlu0 %v4359, 124
  %v4739 = vpop.permute.xlu0 %4738
  %4740 = vrot.lane.b32.xlu0 %v4360, 124
  %v4741 = vpop.permute.xlu0 %4740
  %4742 = vrot.lane.b32.xlu0 %v4361, 124
  %v4743 = vpop.permute.xlu0 %4742
  %4744 = vrot.lane.b32.xlu0 %v4362, 124
  %v4745 = vpop.permute.xlu0 %4744
  %4746 = vrot.lane.b32.xlu0 %v4363, 124
  %v4747 = vpop.permute.xlu0 %4746
  %vm4876 = vcmask 195648
  %4877 = vst.msk [vmem:[%s1] sm:$0xff] %vm4876, %v4493
  %4878 = vst.msk [vmem:[%s1 + $0x8] sm:$0xff] %vm4876, %v4495
  %4879 = vst.msk [vmem:[%s1 + $0x10] sm:$0xff] %vm4876, %v4497
  %4880 = vst.msk [vmem:[%s1 + $0x18] sm:$0xff] %vm4876, %v4499
  %4881 = vst.msk [vmem:[%s1 + $0x20] sm:$0xff] %vm4876, %v4501
  %4882 = vst.msk [vmem:[%s1 + $0x28] sm:$0xff] %vm4876, %v4503
  %4883 = vst.msk [vmem:[%s1 + $0x30] sm:$0xff] %vm4876, %v4505
  %4884 = vst.msk [vmem:[%s1 + $0x38] sm:$0xff] %vm4876, %v4507
  %4885 = vst.msk [vmem:[%s1 + $0x40] sm:$0xff] %vm4876, %v4509
  %4886 = vst.msk [vmem:[%s1 + $0x48] sm:$0xff] %vm4876, %v4511
  %4887 = vst.msk [vmem:[%s1 + $0x50] sm:$0xff] %vm4876, %v4513
  %4888 = vst.msk [vmem:[%s1 + $0x58] sm:$0xff] %vm4876, %v4515
  %4889 = vst.msk [vmem:[%s1 + $0x60] sm:$0xff] %vm4876, %v4517
  %4890 = vst.msk [vmem:[%s1 + $0x68] sm:$0xff] %vm4876, %v4519
  %4891 = vst.msk [vmem:[%s1 + $0x70] sm:$0xff] %vm4876, %v4521
  %4892 = vst.msk [vmem:[%s1 + $0x78] sm:$0xff] %vm4876, %v4523
  %4893 = vst.msk [vmem:[%s1 + $0x80] sm:$0xff] %vm4876, %v4525
  %4894 = vst.msk [vmem:[%s1 + $0x88] sm:$0xff] %vm4876, %v4527
  %4895 = vst.msk [vmem:[%s1 + $0x90] sm:$0xff] %vm4876, %v4529
  %4896 = vst.msk [vmem:[%s1 + $0x98] sm:$0xff] %vm4876, %v4531
  %4897 = vst.msk [vmem:[%s1 + $0xa0] sm:$0xff] %vm4876, %v4533
  %4898 = vst.msk [vmem:[%s1 + $0xa8] sm:$0xff] %vm4876, %v4535
  %4899 = vst.msk [vmem:[%s1 + $0xb0] sm:$0xff] %vm4876, %v4537
  %4900 = vst.msk [vmem:[%s1 + $0xb8] sm:$0xff] %vm4876, %v4539
  %4901 = vst.msk [vmem:[%s1 + $0xc0] sm:$0xff] %vm4876, %v4541
  %4902 = vst.msk [vmem:[%s1 + $0xc8] sm:$0xff] %vm4876, %v4543
  %4903 = vst.msk [vmem:[%s1 + $0xd0] sm:$0xff] %vm4876, %v4545
  %4904 = vst.msk [vmem:[%s1 + $0xd8] sm:$0xff] %vm4876, %v4547
  %4905 = vst.msk [vmem:[%s1 + $0xe0] sm:$0xff] %vm4876, %v4549
  %4906 = vst.msk [vmem:[%s1 + $0xe8] sm:$0xff] %vm4876, %v4551
  %4907 = vst.msk [vmem:[%s1 + $0xf0] sm:$0xff] %vm4876, %v4553
  %4908 = vst.msk [vmem:[%s1 + $0xf8] sm:$0xff] %vm4876, %v4555
  %4909 = vst.msk [vmem:[%s1 + $0x100] sm:$0xff] %vm4876, %v4557
  %4910 = vst.msk [vmem:[%s1 + $0x108] sm:$0xff] %vm4876, %v4559
  %4911 = vst.msk [vmem:[%s1 + $0x110] sm:$0xff] %vm4876, %v4561
  %4912 = vst.msk [vmem:[%s1 + $0x118] sm:$0xff] %vm4876, %v4563
  %4913 = vst.msk [vmem:[%s1 + $0x120] sm:$0xff] %vm4876, %v4565
  %4914 = vst.msk [vmem:[%s1 + $0x128] sm:$0xff] %vm4876, %v4567
  %4915 = vst.msk [vmem:[%s1 + $0x130] sm:$0xff] %vm4876, %v4569
  %4916 = vst.msk [vmem:[%s1 + $0x138] sm:$0xff] %vm4876, %v4571
  %4917 = vst.msk [vmem:[%s1 + $0x140] sm:$0xff] %vm4876, %v4573
  %4918 = vst.msk [vmem:[%s1 + $0x148] sm:$0xff] %vm4876, %v4575
  %4919 = vst.msk [vmem:[%s1 + $0x150] sm:$0xff] %vm4876, %v4577
  %4920 = vst.msk [vmem:[%s1 + $0x158] sm:$0xff] %vm4876, %v4579
  %4921 = vst.msk [vmem:[%s1 + $0x160] sm:$0xff] %vm4876, %v4581
  %4922 = vst.msk [vmem:[%s1 + $0x168] sm:$0xff] %vm4876, %v4583
  %4923 = vst.msk [vmem:[%s1 + $0x170] sm:$0xff] %vm4876, %v4585
  %4924 = vst.msk [vmem:[%s1 + $0x178] sm:$0xff] %vm4876, %v4587
  %4925 = vst.msk [vmem:[%s1 + $0x180] sm:$0xff] %vm4876, %v4589
  %4926 = vst.msk [vmem:[%s1 + $0x188] sm:$0xff] %vm4876, %v4591
  %4927 = vst.msk [vmem:[%s1 + $0x190] sm:$0xff] %vm4876, %v4593
  %4928 = vst.msk [vmem:[%s1 + $0x198] sm:$0xff] %vm4876, %v4595
  %4929 = vst.msk [vmem:[%s1 + $0x1a0] sm:$0xff] %vm4876, %v4597
  %4930 = vst.msk [vmem:[%s1 + $0x1a8] sm:$0xff] %vm4876, %v4599
  %4931 = vst.msk [vmem:[%s1 + $0x1b0] sm:$0xff] %vm4876, %v4601
  %4932 = vst.msk [vmem:[%s1 + $0x1b8] sm:$0xff] %vm4876, %v4603
  %4933 = vst.msk [vmem:[%s1 + $0x1c0] sm:$0xff] %vm4876, %v4605
  %4934 = vst.msk [vmem:[%s1 + $0x1c8] sm:$0xff] %vm4876, %v4607
  %4935 = vst.msk [vmem:[%s1 + $0x1d0] sm:$0xff] %vm4876, %v4609
  %4936 = vst.msk [vmem:[%s1 + $0x1d8] sm:$0xff] %vm4876, %v4611
  %4937 = vst.msk [vmem:[%s1 + $0x1e0] sm:$0xff] %vm4876, %v4613
  %4938 = vst.msk [vmem:[%s1 + $0x1e8] sm:$0xff] %vm4876, %v4615
  %4939 = vst.msk [vmem:[%s1 + $0x1f0] sm:$0xff] %vm4876, %v4617
  %4940 = vst.msk [vmem:[%s1 + $0x1f8] sm:$0xff] %vm4876, %v4619
  %4941 = vst.msk [vmem:[%s1 + $0x200] sm:$0xff] %vm4876, %v4621
  %4942 = vst.msk [vmem:[%s1 + $0x208] sm:$0xff] %vm4876, %v4623
  %4943 = vst.msk [vmem:[%s1 + $0x210] sm:$0xff] %vm4876, %v4625
  %4944 = vst.msk [vmem:[%s1 + $0x218] sm:$0xff] %vm4876, %v4627
  %4945 = vst.msk [vmem:[%s1 + $0x220] sm:$0xff] %vm4876, %v4629
  %4946 = vst.msk [vmem:[%s1 + $0x228] sm:$0xff] %vm4876, %v4631
  %4947 = vst.msk [vmem:[%s1 + $0x230] sm:$0xff] %vm4876, %v4633
  %4948 = vst.msk [vmem:[%s1 + $0x238] sm:$0xff] %vm4876, %v4635
  %4949 = vst.msk [vmem:[%s1 + $0x240] sm:$0xff] %vm4876, %v4637
  %4950 = vst.msk [vmem:[%s1 + $0x248] sm:$0xff] %vm4876, %v4639
  %4951 = vst.msk [vmem:[%s1 + $0x250] sm:$0xff] %vm4876, %v4641
  %4952 = vst.msk [vmem:[%s1 + $0x258] sm:$0xff] %vm4876, %v4643
  %4953 = vst.msk [vmem:[%s1 + $0x260] sm:$0xff] %vm4876, %v4645
  %4954 = vst.msk [vmem:[%s1 + $0x268] sm:$0xff] %vm4876, %v4647
  %4955 = vst.msk [vmem:[%s1 + $0x270] sm:$0xff] %vm4876, %v4649
  %4956 = vst.msk [vmem:[%s1 + $0x278] sm:$0xff] %vm4876, %v4651
  %4957 = vst.msk [vmem:[%s1 + $0x280] sm:$0xff] %vm4876, %v4653
  %4958 = vst.msk [vmem:[%s1 + $0x288] sm:$0xff] %vm4876, %v4655
  %4959 = vst.msk [vmem:[%s1 + $0x290] sm:$0xff] %vm4876, %v4657
  %4960 = vst.msk [vmem:[%s1 + $0x298] sm:$0xff] %vm4876, %v4659
  %4961 = vst.msk [vmem:[%s1 + $0x2a0] sm:$0xff] %vm4876, %v4661
  %4962 = vst.msk [vmem:[%s1 + $0x2a8] sm:$0xff] %vm4876, %v4663
  %4963 = vst.msk [vmem:[%s1 + $0x2b0] sm:$0xff] %vm4876, %v4665
  %4964 = vst.msk [vmem:[%s1 + $0x2b8] sm:$0xff] %vm4876, %v4667
  %4965 = vst.msk [vmem:[%s1 + $0x2c0] sm:$0xff] %vm4876, %v4669
  %4966 = vst.msk [vmem:[%s1 + $0x2c8] sm:$0xff] %vm4876, %v4671
  %4967 = vst.msk [vmem:[%s1 + $0x2d0] sm:$0xff] %vm4876, %v4673
  %4968 = vst.msk [vmem:[%s1 + $0x2d8] sm:$0xff] %vm4876, %v4675
  %4969 = vst.msk [vmem:[%s1 + $0x2e0] sm:$0xff] %vm4876, %v4677
  %4970 = vst.msk [vmem:[%s1 + $0x2e8] sm:$0xff] %vm4876, %v4679
  %4971 = vst.msk [vmem:[%s1 + $0x2f0] sm:$0xff] %vm4876, %v4681
  %4972 = vst.msk [vmem:[%s1 + $0x2f8] sm:$0xff] %vm4876, %v4683
  %4973 = vst.msk [vmem:[%s1 + $0x300] sm:$0xff] %vm4876, %v4685
  %4974 = vst.msk [vmem:[%s1 + $0x308] sm:$0xff] %vm4876, %v4687
  %4975 = vst.msk [vmem:[%s1 + $0x310] sm:$0xff] %vm4876, %v4689
  %4976 = vst.msk [vmem:[%s1 + $0x318] sm:$0xff] %vm4876, %v4691
  %4977 = vst.msk [vmem:[%s1 + $0x320] sm:$0xff] %vm4876, %v4693
  %4978 = vst.msk [vmem:[%s1 + $0x328] sm:$0xff] %vm4876, %v4695
  %4979 = vst.msk [vmem:[%s1 + $0x330] sm:$0xff] %vm4876, %v4697
  %4980 = vst.msk [vmem:[%s1 + $0x338] sm:$0xff] %vm4876, %v4699
  %4981 = vst.msk [vmem:[%s1 + $0x340] sm:$0xff] %vm4876, %v4701
  %4982 = vst.msk [vmem:[%s1 + $0x348] sm:$0xff] %vm4876, %v4703
  %4983 = vst.msk [vmem:[%s1 + $0x350] sm:$0xff] %vm4876, %v4705
  %4984 = vst.msk [vmem:[%s1 + $0x358] sm:$0xff] %vm4876, %v4707
  %4985 = vst.msk [vmem:[%s1 + $0x360] sm:$0xff] %vm4876, %v4709
  %4986 = vst.msk [vmem:[%s1 + $0x368] sm:$0xff] %vm4876, %v4711
  %4987 = vst.msk [vmem:[%s1 + $0x370] sm:$0xff] %vm4876, %v4713
  %4988 = vst.msk [vmem:[%s1 + $0x378] sm:$0xff] %vm4876, %v4715
  %4989 = vst.msk [vmem:[%s1 + $0x380] sm:$0xff] %vm4876, %v4717
  %4990 = vst.msk [vmem:[%s1 + $0x388] sm:$0xff] %vm4876, %v4719
  %4991 = vst.msk [vmem:[%s1 + $0x390] sm:$0xff] %vm4876, %v4721
  %4992 = vst.msk [vmem:[%s1 + $0x398] sm:$0xff] %vm4876, %v4723
  %4993 = vst.msk [vmem:[%s1 + $0x3a0] sm:$0xff] %vm4876, %v4725
  %4994 = vst.msk [vmem:[%s1 + $0x3a8] sm:$0xff] %vm4876, %v4727
  %4995 = vst.msk [vmem:[%s1 + $0x3b0] sm:$0xff] %vm4876, %v4729
  %4996 = vst.msk [vmem:[%s1 + $0x3b8] sm:$0xff] %vm4876, %v4731
  %4997 = vst.msk [vmem:[%s1 + $0x3c0] sm:$0xff] %vm4876, %v4733
  %4998 = vst.msk [vmem:[%s1 + $0x3c8] sm:$0xff] %vm4876, %v4735
  %4999 = vst.msk [vmem:[%s1 + $0x3d0] sm:$0xff] %vm4876, %v4737
  %5000 = vst.msk [vmem:[%s1 + $0x3d8] sm:$0xff] %vm4876, %v4739
  %5001 = vst.msk [vmem:[%s1 + $0x3e0] sm:$0xff] %vm4876, %v4741
  %5002 = vst.msk [vmem:[%s1 + $0x3e8] sm:$0xff] %vm4876, %v4743
  %5003 = vst.msk [vmem:[%s1 + $0x3f0] sm:$0xff] %vm4876, %v4745
  %5004 = vst.msk [vmem:[%s1 + $0x3f8] sm:$0xff] %vm4876, %v4747
  // Predicated region
  $region6: #{tpu_custom_call.1} parent=0 // pred_check
    _
  $region7: #{tpu_custom_call.1} parent=0 // pred_check_branch
    %5006 = sbr.rel (0) target = $region9
  $region8: #{tpu_custom_call.1} parent=0 // pred_region
    _
  $region9: #{tpu_custom_call.1} parent=0 // pred_fallthru
    _
  // Predicated region
  $region10: #{tpu_custom_call.1} parent=0 // pred_check
    _
  $region11: #{tpu_custom_call.1} parent=0 // pred_check_branch
    %5008 = sbr.rel (0) target = $region13
  $region12: #{tpu_custom_call.1} parent=0 // pred_region
    _
  $region13: #{tpu_custom_call.1} parent=0 // pred_fallthru
    _

</llo_original>
